<compile_context>
chip_gen: v7x
topology: tpu7x:2x2x1
jax: 0.10.0
libtpu: 0.0.40
codegen_flags: <defaults>
</compile_context>

<pallas_src>
import time

import numpy as np
import jax
import jax.numpy as jnp
from jax.experimental import pallas as pl
from jax.experimental.pallas import tpu as pltpu


# ---------------------------------------------------------------------------
# Constant helper matrices (built once, host-side numpy)
# ---------------------------------------------------------------------------
def _make_shift_matrices(oh, ow, n):
    """S[t] @ act applies the spatial shift of 3x3 tap t (zero padded)."""
    r = n * oh * ow
    s = np.zeros((9, r, r), np.float32)
    for ki in range(3):
        for kj in range(3):
            t = ki * 3 + kj
            for b in range(n):
                for y in range(oh):
                    for x in range(ow):
                        yy, xx = y + ki - 1, x + kj - 1
                        if 0 <= yy < oh and 0 <= xx < ow:
                            s[t, b * oh * ow + y * ow + x,
                              b * oh * ow + yy * ow + xx] = 1.0
    return s


def _make_row_selectors(n, p):
    """E[s] @ act picks, for spatial position s, the row of every sample."""
    e = np.zeros((p, n, n * p), np.float32)
    for s in range(p):
        for b in range(n):
            e[s, b, b * p + s] = 1.0
    return e


# ---------------------------------------------------------------------------
# The single fused Pallas kernel (encoder + SKUnit1 + SKUnit2 + regression)
# ---------------------------------------------------------------------------
def _fused_hpe_kernel(
        enc_p_ref, enc_w_ref, enc_b_ref, s_ref,
        s1w1_ref, s1b1_ref, s1wdw_ref, s1bdw_ref, s1w3_ref, s1b3_ref,
        s2w1_ref, s2b1_ref, s2wsame_ref, s2wswap_ref, s2bg_ref,
        s2wsc_ref, s2bsc_ref, s2w3_ref, s2b3_ref,
        e_ref, w1b_ref, rb1_ref, rw2_ref, rb2_ref,
        out_ref):
    f32 = jnp.float32
    bf16 = jnp.bfloat16
    ntaps = s_ref.shape[0]          # 9
    nrow = enc_p_ref.shape[0]       # N * OH * OW = 28
    c1 = s1w1_ref.shape[1]          # 64
    c2 = s2w1_ref.shape[1]          # 128
    npos = e_ref.shape[0]           # OH * OW = 14

    def mm(a, w):                   # bf16 MXU matmul, f32 accumulation
        return jnp.dot(a.astype(bf16), w.astype(bf16),
                       preferred_element_type=f32)

    def relu(v):
        return jnp.maximum(v, 0.0)

    # ---- encoder: Conv2d(4, 64, 3, stride=2, pad=1) + ReLU ---------------
    # (3x3/s2 conv folded to one matmul over pre-built input patches)
    x0 = relu(mm(enc_p_ref[...], enc_w_ref[...]) + enc_b_ref[...])   # (28, 64)

    # ---- SKUnit 1: in=out=64, mid=64, G=64  -> depthwise 3x3 -------------
    h1 = relu(mm(x0, s1w1_ref[...]) + s1b1_ref[...])                 # (28, 64)
    h1b = h1.astype(bf16)
    acc = jnp.zeros((nrow, c1), f32)
    for t in range(ntaps):
        yt = jnp.dot(s_ref[t], h1b, preferred_element_type=f32)      # shift
        acc = acc + yt * s1wdw_ref[t]                                # VPU MAC
    h2 = relu(acc + s1bdw_ref[...])
    # SK attention with M=1: softmax over a single branch == 1.0 -> identity.
    x1 = relu(mm(h2, s1w3_ref[...]) + s1b3_ref[...] + x0)            # (28, 64)

    # ---- SKUnit 2: in=64, mid=out=128, G=64 -> groups of 2 channels ------
    # mid channels are pre-permuted in the wrapper so each group is {c, c+64};
    # the in-group partner channel is a lane rotation by 64 (XLU), no dense
    # block-diagonal matmul.
    g1 = relu(mm(x1, s2w1_ref[...]) + s2b1_ref[...])                 # (28, 128)
    g1b = g1.astype(bf16)
    acc2 = jnp.zeros((nrow, c2), f32)
    for t in range(ntaps):
        yt = jnp.dot(s_ref[t], g1b, preferred_element_type=f32)      # shift
        yp = pltpu.roll(yt, c2 // 2, axis=1)                         # partner
        acc2 = acc2 + yt * s2wsame_ref[t] + yp * s2wswap_ref[t]
    g2 = relu(acc2 + s2bg_ref[...])
    shortcut = mm(x1, s2wsc_ref[...]) + s2bsc_ref[...]               # 1x1 proj
    x2 = relu(mm(g2, s2w3_ref[...]) + s2b3_ref[...] + shortcut)      # (28, 128)

    # ---- regression: Linear(1792,32)+ReLU+Linear(32,34) ------------------
    # NCHW flatten is folded into the weight layout (w1b[s] = rows c*14+s of
    # reg_w1); per spatial position s gather the batch rows and accumulate.
    x2b = x2.astype(bf16)
    h = jnp.zeros((e_ref.shape[1], rb1_ref.shape[1]), f32)           # (2, 32)
    for s in range(npos):
        rows = jnp.dot(e_ref[s], x2b, preferred_element_type=f32)    # (2, 128)
        h = h + jnp.dot(rows.astype(bf16), w1b_ref[s],
                        preferred_element_type=f32)
    h = relu(h + rb1_ref[...])
    y = jnp.dot(h.astype(bf16), rw2_ref[...],
                preferred_element_type=f32) + rb2_ref[...]           # (2, 128)
    out_ref[...] = y    # lane-dense (128-wide) output slab, sliced outside


def _run_fused_kernel(patches, kp):
    ins = (patches,
           kp["enc_w"], kp["enc_b"], kp["S"],
           kp["s1_w1"], kp["s1_b1"], kp["s1_wdw"], kp["s1_bdw"],
           kp["s1_w3"], kp["s1_b3"],
           kp["s2_w1"], kp["s2_b1"], kp["s2_wsame"], kp["s2_wswap"],
           kp["s2_bg"], kp["s2_wsc"], kp["s2_bsc"], kp["s2_w3"], kp["s2_b3"],
           kp["E"], kp["W1b"], kp["r_b1"], kp["r_w2"], kp["r_b2"])
    nb = kp["E"].shape[1]
    vmem = lambda: pl.BlockSpec(memory_space=pltpu.MemorySpace.VMEM)
    return pl.pallas_call(
        _fused_hpe_kernel,
        out_shape=jax.ShapeDtypeStruct((nb, 128), jnp.float32),
        in_specs=[vmem() for _ in ins],
        out_specs=vmem(),
    )(*ins)


# ---------------------------------------------------------------------------
# Wrapper: im2col of the raw input (only the external input, 4 KB) + launch
# ---------------------------------------------------------------------------
def _im2col(x, kh, kw, sh, sw, ph, pw):
    n, h, w, c = x.shape
    xp = jnp.pad(x, ((0, 0), (ph, ph), (pw, pw), (0, 0)))
    oh = (h + 2 * ph - kh) // sh + 1
    ow = (w + 2 * pw - kw) // sw + 1
    cols = []
    for i in range(kh):
        for j in range(kw):
            cols.append(xp[:, i:i + sh * (oh - 1) + 1:sh,
                           j:j + sw * (ow - 1) + 1:sw, :])
    patches = jnp.stack(cols, axis=3)          # (n, oh, ow, kh*kw, c)
    return patches.reshape(n * oh * ow, kh * kw * c)


@jax.jit
def hpe_forward(x_nchw, kparams):
    """Full forward; returns pose (batch, 17, 2).  Geometry fixed by the
    regression head: encoder output must be 7x2 spatial, batch = 2."""
    n = x_nchw.shape[0]
    x = jnp.transpose(x_nchw, (0, 2, 3, 1))                   # NCHW -> NHWC
    patches = _im2col(x, 3, 3, 2, 2, 1, 1).astype(jnp.bfloat16)
    y = _run_fused_kernel(patches, kparams)                   # (n, 128)
    return y[:, :34].reshape(n, 17, 2)


def four_layer_denoiser_hpe_forward(x_nchw, kparams):
    """Mirrors FourLayerDenoiserHPE.forward -> (pose, time_sum).
    time_sum is host wall-clock around the blocked device call (timing is
    kept OUTSIDE the traced path)."""
    t0 = time.perf_counter()
    pose = jax.block_until_ready(hpe_forward(x_nchw, kparams))
    return pose, time.perf_counter() - t0


# ---------------------------------------------------------------------------
# Parameters (reference layout) and their kernel-layout preparation
# ---------------------------------------------------------------------------
def _nrm(key, shape, fan_in):
    return jax.random.normal(key, shape, jnp.float32) / jnp.sqrt(
        jnp.float32(fan_in))


def init_params(key):
    ks = jax.random.split(key, 22)
    b = lambda k, n: 0.1 * jax.random.normal(k, (n,), jnp.float32)
    p = {}
    p["enc_w"] = _nrm(ks[0], (3, 3, 4, 64), 36);   p["enc_b"] = b(ks[1], 64)
    p["s1_w1"] = _nrm(ks[2], (64, 64), 64);        p["s1_b1"] = b(ks[3], 64)
    p["s1_wdw"] = _nrm(ks[4], (3, 3, 64), 9);      p["s1_bdw"] = b(ks[5], 64)
    p["s1_w3"] = _nrm(ks[6], (64, 64), 64);        p["s1_b3"] = b(ks[7], 64)
    p["s2_w1"] = _nrm(ks[8], (64, 128), 64);       p["s2_b1"] = b(ks[9], 128)
    p["s2_wg"] = _nrm(ks[10], (3, 3, 2, 128), 18); p["s2_bg"] = b(ks[11], 128)
    p["s2_wsc"] = _nrm(ks[12], (64, 128), 64);     p["s2_bsc"] = b(ks[13], 128)
    p["s2_w3"] = _nrm(ks[14], (128, 128), 128);    p["s2_b3"] = b(ks[15], 128)
    p["reg_w1"] = _nrm(ks[16], (1792, 32), 1792);  p["reg_b1"] = b(ks[17], 32)
    p["reg_w2"] = _nrm(ks[18], (32, 34), 32);      p["reg_b2"] = b(ks[19], 34)
    return p


def prepare_kernel_params(p, batch=2, oh=7, ow=2):
    """Exact re-layout of the reference parameters into kernel form
    (bf16 MXU weights, permuted sk2 mid channels, flatten folded into W1b)."""
    bf = jnp.bfloat16
    pos = oh * ow
    # sk2 mid-channel permutation: group {2g, 2g+1} -> {g, 64+g}
    perm = jnp.concatenate([jnp.arange(0, 128, 2), jnp.arange(1, 128, 2)])
    wg9 = p["s2_wg"].reshape(9, 2, 128)            # [tap, d, out_channel]
    wsame = jnp.concatenate([wg9[:, 0, 0::2], wg9[:, 1, 1::2]], axis=1)
    wswap = jnp.concatenate([wg9[:, 1, 0::2], wg9[:, 0, 1::2]], axis=1)
    k = {
        "enc_w": p["enc_w"].reshape(36, 64).astype(bf),
        "enc_b": p["enc_b"].reshape(1, 64),
        "S": jnp.asarray(_make_shift_matrices(oh, ow, batch), bf),
        "s1_w1": p["s1_w1"].astype(bf),
        "s1_b1": p["s1_b1"].reshape(1, 64),
        "s1_wdw": p["s1_wdw"].reshape(9, 1, 64),
        "s1_bdw": p["s1_bdw"].reshape(1, 64),
        "s1_w3": p["s1_w3"].astype(bf),
        "s1_b3": p["s1_b3"].reshape(1, 64),
        "s2_w1": p["s2_w1"][:, perm].astype(bf),
        "s2_b1": p["s2_b1"][perm].reshape(1, 128),
        "s2_wsame": wsame.reshape(9, 1, 128),
        "s2_wswap": wswap.reshape(9, 1, 128),
        "s2_bg": p["s2_bg"][perm].reshape(1, 128),
        "s2_wsc": p["s2_wsc"].astype(bf),
        "s2_bsc": p["s2_bsc"].reshape(1, 128),
        "s2_w3": p["s2_w3"][perm, :].astype(bf),
        "s2_b3": p["s2_b3"].reshape(1, 128),
        "E": jnp.asarray(_make_row_selectors(batch, pos), bf),
        # reg_w1 rows are in NCHW-flatten order (c*14+s); regroup by s.
        "W1b": p["reg_w1"].reshape(128, pos, 32).transpose(1, 0, 2).astype(bf),
        "r_b1": p["reg_b1"].reshape(1, 32),
        "r_w2": jnp.zeros((32, 128), jnp.float32)
                  .at[:, :34].set(p["reg_w2"]).astype(bf),
        "r_b2": jnp.zeros((1, 128), jnp.float32)
                  .at[:, :34].set(p["reg_b2"].reshape(1, 34)),
    }
    return k


# ---------------------------------------------------------------------------
# Pure-JAX reference (same reconstructed architecture), for correctness check
# ---------------------------------------------------------------------------
@jax.jit
def reference_forward(x_nchw, p):
    dn = ("NHWC", "HWIO", "NHWC")
    pad = ((1, 1), (1, 1))
    x = jnp.transpose(x_nchw, (0, 2, 3, 1)).astype(jnp.float32)
    y = jax.lax.conv_general_dilated(x, p["enc_w"], (2, 2), pad,
                                     dimension_numbers=dn)
    y = jax.nn.relu(y + p["enc_b"])
    # SKUnit 1
    h1 = jax.nn.relu(jnp.einsum("nhwc,cd->nhwd", y, p["s1_w1"]) + p["s1_b1"])
    h2 = jax.lax.conv_general_dilated(h1, p["s1_wdw"].reshape(3, 3, 1, 64),
                                      (1, 1), pad, dimension_numbers=dn,
                                      feature_group_count=64)
    h2 = jax.nn.relu(h2 + p["s1_bdw"])
    x1 = jax.nn.relu(jnp.einsum("nhwc,cd->nhwd", h2, p["s1_w3"])
                     + p["s1_b3"] + y)
    # SKUnit 2
    g1 = jax.nn.relu(jnp.einsum("nhwc,cd->nhwd", x1, p["s2_w1"]) + p["s2_b1"])
    g2 = jax.lax.conv_general_dilated(g1, p["s2_wg"], (1, 1), pad,
                                      dimension_numbers=dn,
                                      feature_group_count=64)
    g2 = jax.nn.relu(g2 + p["s2_bg"])
    sc = jnp.einsum("nhwc,cd->nhwd", x1, p["s2_wsc"]) + p["s2_bsc"]
    x2 = jax.nn.relu(jnp.einsum("nhwc,cd->nhwd", g2, p["s2_w3"])
                     + p["s2_b3"] + sc)
    # regression head (PyTorch NCHW flatten order)
    feat = jnp.transpose(x2, (0, 3, 1, 2)).reshape(x2.shape[0], -1)
    h = jax.nn.relu(feat @ p["reg_w1"] + p["reg_b1"])
    yy = h @ p["reg_w2"] + p["reg_b2"]
    return yy.reshape(-1, 17, 2)


# ---------------------------------------------------------------------------
if __name__ == "__main__":
    key = jax.random.PRNGKey(0)
    kx, kp = jax.random.split(key)

    # Input (NCHW): batch=2, channels=4, spatial 14x4 so the stride-2 encoder
    # gives 7x2 and skunit2 flattens to 128*7*2 = 1792 = regression input_dim.
    x = jax.random.normal(kx, (2, 4, 14, 4), jnp.float32)
    params = init_params(kp)
    kernel_params = prepare_kernel_params(params)

    pose, _time_sum = four_layer_denoiser_hpe_forward(x, kernel_params)
    pose = jax.block_until_ready(pose)

    assert pose.shape == (2, 17, 2), pose.shape
    assert bool(jnp.all(jnp.isfinite(pose)))

    ref = jax.block_until_ready(reference_forward(x, params))
    max_diff = float(jnp.max(jnp.abs(pose - ref)))
    assert bool(jnp.allclose(pose, ref, atol=1e-1, rtol=1e-1)), max_diff

    print("KERNEL_OK")
</pallas_src>

<mosaic_0001>
module attributes {stable_mosaic.version = 11 : i64} {
  func.func @_fused_hpe_kernel(%arg0: memref<28x36xbf16, #tpu.memory_space<vmem>>, %arg1: memref<36x64xbf16, #tpu.memory_space<vmem>>, %arg2: memref<1x64xf32, #tpu.memory_space<vmem>>, %arg3: memref<9x28x28xbf16, #tpu.memory_space<vmem>>, %arg4: memref<64x64xbf16, #tpu.memory_space<vmem>>, %arg5: memref<1x64xf32, #tpu.memory_space<vmem>>, %arg6: memref<9x1x64xf32, #tpu.memory_space<vmem>>, %arg7: memref<1x64xf32, #tpu.memory_space<vmem>>, %arg8: memref<64x64xbf16, #tpu.memory_space<vmem>>, %arg9: memref<1x64xf32, #tpu.memory_space<vmem>>, %arg10: memref<64x128xbf16, #tpu.memory_space<vmem>>, %arg11: memref<1x128xf32, #tpu.memory_space<vmem>>, %arg12: memref<9x1x128xf32, #tpu.memory_space<vmem>>, %arg13: memref<9x1x128xf32, #tpu.memory_space<vmem>>, %arg14: memref<1x128xf32, #tpu.memory_space<vmem>>, %arg15: memref<64x128xbf16, #tpu.memory_space<vmem>>, %arg16: memref<1x128xf32, #tpu.memory_space<vmem>>, %arg17: memref<128x128xbf16, #tpu.memory_space<vmem>>, %arg18: memref<1x128xf32, #tpu.memory_space<vmem>>, %arg19: memref<14x2x28xbf16, #tpu.memory_space<vmem>>, %arg20: memref<14x128x32xbf16, #tpu.memory_space<vmem>>, %arg21: memref<1x32xf32, #tpu.memory_space<vmem>>, %arg22: memref<32x128xbf16, #tpu.memory_space<vmem>>, %arg23: memref<1x128xf32, #tpu.memory_space<vmem>>, %arg24: memref<2x128xf32, #tpu.memory_space<vmem>>) attributes {dimension_semantics = [], scalar_prefetch = 0 : i64, scratch_operands = 0 : i64, tpu.core_type = #tpu.core_type<tc>} {
    %c0 = arith.constant 0 : index
    %c0_0 = arith.constant 0 : index
    %0 = vector.load %arg0[%c0, %c0_0] : memref<28x36xbf16, #tpu.memory_space<vmem>>, vector<28x36xbf16>
    %c0_1 = arith.constant 0 : index
    %c0_2 = arith.constant 0 : index
    %1 = vector.load %arg1[%c0_1, %c0_2] : memref<36x64xbf16, #tpu.memory_space<vmem>>, vector<36x64xbf16>
    %cst = arith.constant dense<0.000000e+00> : vector<28x64xf32>
    %2 = tpu.matmul %0, %1, %cst {dimension_numbers = #tpu.dot_dimension_numbers<[1], [0], [0], [1], [0, 0, 1, 1], [], []>} : vector<28x36xbf16>, vector<36x64xbf16>, vector<28x64xf32> -> vector<28x64xf32>
    %c0_3 = arith.constant 0 : index
    %c0_4 = arith.constant 0 : index
    %3 = vector.load %arg2[%c0_3, %c0_4] : memref<1x64xf32, #tpu.memory_space<vmem>>, vector<1x64xf32>
    %4 = vector.broadcast %3 : vector<1x64xf32> to vector<28x64xf32>
    %5 = arith.addf %2, %4 : vector<28x64xf32>
    %cst_5 = arith.constant 0.000000e+00 : f32
    %6 = vector.broadcast %cst_5 : f32 to vector<28x64xf32>
    %7 = arith.maximumf %5, %6 : vector<28x64xf32>
    %c0_6 = arith.constant 0 : index
    %c0_7 = arith.constant 0 : index
    %8 = vector.load %arg4[%c0_6, %c0_7] : memref<64x64xbf16, #tpu.memory_space<vmem>>, vector<64x64xbf16>
    %9 = arith.truncf %7 : vector<28x64xf32> to vector<28x64xbf16>
    %cst_8 = arith.constant dense<0.000000e+00> : vector<28x64xf32>
    %10 = tpu.matmul %9, %8, %cst_8 {dimension_numbers = #tpu.dot_dimension_numbers<[1], [0], [0], [1], [0, 0, 1, 1], [], []>} : vector<28x64xbf16>, vector<64x64xbf16>, vector<28x64xf32> -> vector<28x64xf32>
    %c0_9 = arith.constant 0 : index
    %c0_10 = arith.constant 0 : index
    %11 = vector.load %arg5[%c0_9, %c0_10] : memref<1x64xf32, #tpu.memory_space<vmem>>, vector<1x64xf32>
    %12 = vector.broadcast %11 : vector<1x64xf32> to vector<28x64xf32>
    %13 = arith.addf %10, %12 : vector<28x64xf32>
    %cst_11 = arith.constant 0.000000e+00 : f32
    %14 = vector.broadcast %cst_11 : f32 to vector<28x64xf32>
    %15 = arith.maximumf %13, %14 : vector<28x64xf32>
    %16 = arith.truncf %15 : vector<28x64xf32> to vector<28x64xbf16>
    %cst_12 = arith.constant 0.000000e+00 : f32
    %17 = vector.broadcast %cst_12 : f32 to vector<28x64xf32>
    %c0_13 = arith.constant 0 : index
    %c0_14 = arith.constant 0 : index
    %c0_15 = arith.constant 0 : index
    %18 = vector.load %arg3[%c0_13, %c0_14, %c0_15] : memref<9x28x28xbf16, #tpu.memory_space<vmem>>, vector<1x28x28xbf16>
    %19 = vector.shape_cast %18 : vector<1x28x28xbf16> to vector<28x28xbf16>
    %cst_16 = arith.constant dense<0.000000e+00> : vector<28x64xf32>
    %20 = tpu.matmul %19, %16, %cst_16 {dimension_numbers = #tpu.dot_dimension_numbers<[1], [0], [0], [1], [0, 0, 1, 1], [], []>} : vector<28x28xbf16>, vector<28x64xbf16>, vector<28x64xf32> -> vector<28x64xf32>
    %c0_17 = arith.constant 0 : index
    %c0_18 = arith.constant 0 : index
    %c0_19 = arith.constant 0 : index
    %21 = vector.load %arg6[%c0_17, %c0_18, %c0_19] : memref<9x1x64xf32, #tpu.memory_space<vmem>>, vector<1x1x64xf32>
    %22 = vector.shape_cast %21 : vector<1x1x64xf32> to vector<1x64xf32>
    %23 = vector.broadcast %22 : vector<1x64xf32> to vector<28x64xf32>
    %24 = arith.mulf %20, %23 : vector<28x64xf32>
    %25 = arith.addf %17, %24 : vector<28x64xf32>
    %c1 = arith.constant 1 : index
    %c0_20 = arith.constant 0 : index
    %c0_21 = arith.constant 0 : index
    %26 = vector.load %arg3[%c1, %c0_20, %c0_21] : memref<9x28x28xbf16, #tpu.memory_space<vmem>>, vector<1x28x28xbf16>
    %27 = vector.shape_cast %26 : vector<1x28x28xbf16> to vector<28x28xbf16>
    %cst_22 = arith.constant dense<0.000000e+00> : vector<28x64xf32>
    %28 = tpu.matmul %27, %16, %cst_22 {dimension_numbers = #tpu.dot_dimension_numbers<[1], [0], [0], [1], [0, 0, 1, 1], [], []>} : vector<28x28xbf16>, vector<28x64xbf16>, vector<28x64xf32> -> vector<28x64xf32>
    %c1_23 = arith.constant 1 : index
    %c0_24 = arith.constant 0 : index
    %c0_25 = arith.constant 0 : index
    %29 = vector.load %arg6[%c1_23, %c0_24, %c0_25] : memref<9x1x64xf32, #tpu.memory_space<vmem>>, vector<1x1x64xf32>
    %30 = vector.shape_cast %29 : vector<1x1x64xf32> to vector<1x64xf32>
    %31 = vector.broadcast %30 : vector<1x64xf32> to vector<28x64xf32>
    %32 = arith.mulf %28, %31 : vector<28x64xf32>
    %33 = arith.addf %25, %32 : vector<28x64xf32>
    %c2 = arith.constant 2 : index
    %c0_26 = arith.constant 0 : index
    %c0_27 = arith.constant 0 : index
    %34 = vector.load %arg3[%c2, %c0_26, %c0_27] : memref<9x28x28xbf16, #tpu.memory_space<vmem>>, vector<1x28x28xbf16>
    %35 = vector.shape_cast %34 : vector<1x28x28xbf16> to vector<28x28xbf16>
    %cst_28 = arith.constant dense<0.000000e+00> : vector<28x64xf32>
    %36 = tpu.matmul %35, %16, %cst_28 {dimension_numbers = #tpu.dot_dimension_numbers<[1], [0], [0], [1], [0, 0, 1, 1], [], []>} : vector<28x28xbf16>, vector<28x64xbf16>, vector<28x64xf32> -> vector<28x64xf32>
    %c2_29 = arith.constant 2 : index
    %c0_30 = arith.constant 0 : index
    %c0_31 = arith.constant 0 : index
    %37 = vector.load %arg6[%c2_29, %c0_30, %c0_31] : memref<9x1x64xf32, #tpu.memory_space<vmem>>, vector<1x1x64xf32>
    %38 = vector.shape_cast %37 : vector<1x1x64xf32> to vector<1x64xf32>
    %39 = vector.broadcast %38 : vector<1x64xf32> to vector<28x64xf32>
    %40 = arith.mulf %36, %39 : vector<28x64xf32>
    %41 = arith.addf %33, %40 : vector<28x64xf32>
    %c3 = arith.constant 3 : index
    %c0_32 = arith.constant 0 : index
    %c0_33 = arith.constant 0 : index
    %42 = vector.load %arg3[%c3, %c0_32, %c0_33] : memref<9x28x28xbf16, #tpu.memory_space<vmem>>, vector<1x28x28xbf16>
    %43 = vector.shape_cast %42 : vector<1x28x28xbf16> to vector<28x28xbf16>
    %cst_34 = arith.constant dense<0.000000e+00> : vector<28x64xf32>
    %44 = tpu.matmul %43, %16, %cst_34 {dimension_numbers = #tpu.dot_dimension_numbers<[1], [0], [0], [1], [0, 0, 1, 1], [], []>} : vector<28x28xbf16>, vector<28x64xbf16>, vector<28x64xf32> -> vector<28x64xf32>
    %c3_35 = arith.constant 3 : index
    %c0_36 = arith.constant 0 : index
    %c0_37 = arith.constant 0 : index
    %45 = vector.load %arg6[%c3_35, %c0_36, %c0_37] : memref<9x1x64xf32, #tpu.memory_space<vmem>>, vector<1x1x64xf32>
    %46 = vector.shape_cast %45 : vector<1x1x64xf32> to vector<1x64xf32>
    %47 = vector.broadcast %46 : vector<1x64xf32> to vector<28x64xf32>
    %48 = arith.mulf %44, %47 : vector<28x64xf32>
    %49 = arith.addf %41, %48 : vector<28x64xf32>
    %c4 = arith.constant 4 : index
    %c0_38 = arith.constant 0 : index
    %c0_39 = arith.constant 0 : index
    %50 = vector.load %arg3[%c4, %c0_38, %c0_39] : memref<9x28x28xbf16, #tpu.memory_space<vmem>>, vector<1x28x28xbf16>
    %51 = vector.shape_cast %50 : vector<1x28x28xbf16> to vector<28x28xbf16>
    %cst_40 = arith.constant dense<0.000000e+00> : vector<28x64xf32>
    %52 = tpu.matmul %51, %16, %cst_40 {dimension_numbers = #tpu.dot_dimension_numbers<[1], [0], [0], [1], [0, 0, 1, 1], [], []>} : vector<28x28xbf16>, vector<28x64xbf16>, vector<28x64xf32> -> vector<28x64xf32>
    %c4_41 = arith.constant 4 : index
    %c0_42 = arith.constant 0 : index
    %c0_43 = arith.constant 0 : index
    %53 = vector.load %arg6[%c4_41, %c0_42, %c0_43] : memref<9x1x64xf32, #tpu.memory_space<vmem>>, vector<1x1x64xf32>
    %54 = vector.shape_cast %53 : vector<1x1x64xf32> to vector<1x64xf32>
    %55 = vector.broadcast %54 : vector<1x64xf32> to vector<28x64xf32>
    %56 = arith.mulf %52, %55 : vector<28x64xf32>
    %57 = arith.addf %49, %56 : vector<28x64xf32>
    %c5 = arith.constant 5 : index
    %c0_44 = arith.constant 0 : index
    %c0_45 = arith.constant 0 : index
    %58 = vector.load %arg3[%c5, %c0_44, %c0_45] : memref<9x28x28xbf16, #tpu.memory_space<vmem>>, vector<1x28x28xbf16>
    %59 = vector.shape_cast %58 : vector<1x28x28xbf16> to vector<28x28xbf16>
    %cst_46 = arith.constant dense<0.000000e+00> : vector<28x64xf32>
    %60 = tpu.matmul %59, %16, %cst_46 {dimension_numbers = #tpu.dot_dimension_numbers<[1], [0], [0], [1], [0, 0, 1, 1], [], []>} : vector<28x28xbf16>, vector<28x64xbf16>, vector<28x64xf32> -> vector<28x64xf32>
    %c5_47 = arith.constant 5 : index
    %c0_48 = arith.constant 0 : index
    %c0_49 = arith.constant 0 : index
    %61 = vector.load %arg6[%c5_47, %c0_48, %c0_49] : memref<9x1x64xf32, #tpu.memory_space<vmem>>, vector<1x1x64xf32>
    %62 = vector.shape_cast %61 : vector<1x1x64xf32> to vector<1x64xf32>
    %63 = vector.broadcast %62 : vector<1x64xf32> to vector<28x64xf32>
    %64 = arith.mulf %60, %63 : vector<28x64xf32>
    %65 = arith.addf %57, %64 : vector<28x64xf32>
    %c6 = arith.constant 6 : index
    %c0_50 = arith.constant 0 : index
    %c0_51 = arith.constant 0 : index
    %66 = vector.load %arg3[%c6, %c0_50, %c0_51] : memref<9x28x28xbf16, #tpu.memory_space<vmem>>, vector<1x28x28xbf16>
    %67 = vector.shape_cast %66 : vector<1x28x28xbf16> to vector<28x28xbf16>
    %cst_52 = arith.constant dense<0.000000e+00> : vector<28x64xf32>
    %68 = tpu.matmul %67, %16, %cst_52 {dimension_numbers = #tpu.dot_dimension_numbers<[1], [0], [0], [1], [0, 0, 1, 1], [], []>} : vector<28x28xbf16>, vector<28x64xbf16>, vector<28x64xf32> -> vector<28x64xf32>
    %c6_53 = arith.constant 6 : index
    %c0_54 = arith.constant 0 : index
    %c0_55 = arith.constant 0 : index
    %69 = vector.load %arg6[%c6_53, %c0_54, %c0_55] : memref<9x1x64xf32, #tpu.memory_space<vmem>>, vector<1x1x64xf32>
    %70 = vector.shape_cast %69 : vector<1x1x64xf32> to vector<1x64xf32>
    %71 = vector.broadcast %70 : vector<1x64xf32> to vector<28x64xf32>
    %72 = arith.mulf %68, %71 : vector<28x64xf32>
    %73 = arith.addf %65, %72 : vector<28x64xf32>
    %c7 = arith.constant 7 : index
    %c0_56 = arith.constant 0 : index
    %c0_57 = arith.constant 0 : index
    %74 = vector.load %arg3[%c7, %c0_56, %c0_57] : memref<9x28x28xbf16, #tpu.memory_space<vmem>>, vector<1x28x28xbf16>
    %75 = vector.shape_cast %74 : vector<1x28x28xbf16> to vector<28x28xbf16>
    %cst_58 = arith.constant dense<0.000000e+00> : vector<28x64xf32>
    %76 = tpu.matmul %75, %16, %cst_58 {dimension_numbers = #tpu.dot_dimension_numbers<[1], [0], [0], [1], [0, 0, 1, 1], [], []>} : vector<28x28xbf16>, vector<28x64xbf16>, vector<28x64xf32> -> vector<28x64xf32>
    %c7_59 = arith.constant 7 : index
    %c0_60 = arith.constant 0 : index
    %c0_61 = arith.constant 0 : index
    %77 = vector.load %arg6[%c7_59, %c0_60, %c0_61] : memref<9x1x64xf32, #tpu.memory_space<vmem>>, vector<1x1x64xf32>
    %78 = vector.shape_cast %77 : vector<1x1x64xf32> to vector<1x64xf32>
    %79 = vector.broadcast %78 : vector<1x64xf32> to vector<28x64xf32>
    %80 = arith.mulf %76, %79 : vector<28x64xf32>
    %81 = arith.addf %73, %80 : vector<28x64xf32>
    %c8 = arith.constant 8 : index
    %c0_62 = arith.constant 0 : index
    %c0_63 = arith.constant 0 : index
    %82 = vector.load %arg3[%c8, %c0_62, %c0_63] : memref<9x28x28xbf16, #tpu.memory_space<vmem>>, vector<1x28x28xbf16>
    %83 = vector.shape_cast %82 : vector<1x28x28xbf16> to vector<28x28xbf16>
    %cst_64 = arith.constant dense<0.000000e+00> : vector<28x64xf32>
    %84 = tpu.matmul %83, %16, %cst_64 {dimension_numbers = #tpu.dot_dimension_numbers<[1], [0], [0], [1], [0, 0, 1, 1], [], []>} : vector<28x28xbf16>, vector<28x64xbf16>, vector<28x64xf32> -> vector<28x64xf32>
    %c8_65 = arith.constant 8 : index
    %c0_66 = arith.constant 0 : index
    %c0_67 = arith.constant 0 : index
    %85 = vector.load %arg6[%c8_65, %c0_66, %c0_67] : memref<9x1x64xf32, #tpu.memory_space<vmem>>, vector<1x1x64xf32>
    %86 = vector.shape_cast %85 : vector<1x1x64xf32> to vector<1x64xf32>
    %87 = vector.broadcast %86 : vector<1x64xf32> to vector<28x64xf32>
    %88 = arith.mulf %84, %87 : vector<28x64xf32>
    %89 = arith.addf %81, %88 : vector<28x64xf32>
    %c0_68 = arith.constant 0 : index
    %c0_69 = arith.constant 0 : index
    %90 = vector.load %arg7[%c0_68, %c0_69] : memref<1x64xf32, #tpu.memory_space<vmem>>, vector<1x64xf32>
    %91 = vector.broadcast %90 : vector<1x64xf32> to vector<28x64xf32>
    %92 = arith.addf %89, %91 : vector<28x64xf32>
    %cst_70 = arith.constant 0.000000e+00 : f32
    %93 = vector.broadcast %cst_70 : f32 to vector<28x64xf32>
    %94 = arith.maximumf %92, %93 : vector<28x64xf32>
    %c0_71 = arith.constant 0 : index
    %c0_72 = arith.constant 0 : index
    %95 = vector.load %arg8[%c0_71, %c0_72] : memref<64x64xbf16, #tpu.memory_space<vmem>>, vector<64x64xbf16>
    %96 = arith.truncf %94 : vector<28x64xf32> to vector<28x64xbf16>
    %cst_73 = arith.constant dense<0.000000e+00> : vector<28x64xf32>
    %97 = tpu.matmul %96, %95, %cst_73 {dimension_numbers = #tpu.dot_dimension_numbers<[1], [0], [0], [1], [0, 0, 1, 1], [], []>} : vector<28x64xbf16>, vector<64x64xbf16>, vector<28x64xf32> -> vector<28x64xf32>
    %c0_74 = arith.constant 0 : index
    %c0_75 = arith.constant 0 : index
    %98 = vector.load %arg9[%c0_74, %c0_75] : memref<1x64xf32, #tpu.memory_space<vmem>>, vector<1x64xf32>
    %99 = vector.broadcast %98 : vector<1x64xf32> to vector<28x64xf32>
    %100 = arith.addf %97, %99 : vector<28x64xf32>
    %101 = arith.addf %100, %7 : vector<28x64xf32>
    %cst_76 = arith.constant 0.000000e+00 : f32
    %102 = vector.broadcast %cst_76 : f32 to vector<28x64xf32>
    %103 = arith.maximumf %101, %102 : vector<28x64xf32>
    %c0_77 = arith.constant 0 : index
    %c0_78 = arith.constant 0 : index
    %104 = vector.load %arg10[%c0_77, %c0_78] : memref<64x128xbf16, #tpu.memory_space<vmem>>, vector<64x128xbf16>
    %105 = arith.truncf %103 : vector<28x64xf32> to vector<28x64xbf16>
    %cst_79 = arith.constant dense<0.000000e+00> : vector<28x128xf32>
    %106 = tpu.matmul %105, %104, %cst_79 {dimension_numbers = #tpu.dot_dimension_numbers<[1], [0], [0], [1], [0, 0, 1, 1], [], []>} : vector<28x64xbf16>, vector<64x128xbf16>, vector<28x128xf32> -> vector<28x128xf32>
    %c0_80 = arith.constant 0 : index
    %c0_81 = arith.constant 0 : index
    %107 = vector.load %arg11[%c0_80, %c0_81] : memref<1x128xf32, #tpu.memory_space<vmem>>, vector<1x128xf32>
    %108 = vector.broadcast %107 : vector<1x128xf32> to vector<28x128xf32>
    %109 = arith.addf %106, %108 : vector<28x128xf32>
    %cst_82 = arith.constant 0.000000e+00 : f32
    %110 = vector.broadcast %cst_82 : f32 to vector<28x128xf32>
    %111 = arith.maximumf %109, %110 : vector<28x128xf32>
    %112 = arith.truncf %111 : vector<28x128xf32> to vector<28x128xbf16>
    %cst_83 = arith.constant 0.000000e+00 : f32
    %113 = vector.broadcast %cst_83 : f32 to vector<28x128xf32>
    %c0_84 = arith.constant 0 : index
    %c0_85 = arith.constant 0 : index
    %c0_86 = arith.constant 0 : index
    %114 = vector.load %arg3[%c0_84, %c0_85, %c0_86] : memref<9x28x28xbf16, #tpu.memory_space<vmem>>, vector<1x28x28xbf16>
    %115 = vector.shape_cast %114 : vector<1x28x28xbf16> to vector<28x28xbf16>
    %cst_87 = arith.constant dense<0.000000e+00> : vector<28x128xf32>
    %116 = tpu.matmul %115, %112, %cst_87 {dimension_numbers = #tpu.dot_dimension_numbers<[1], [0], [0], [1], [0, 0, 1, 1], [], []>} : vector<28x28xbf16>, vector<28x128xbf16>, vector<28x128xf32> -> vector<28x128xf32>
    %c64_i32 = arith.constant 64 : i32
    %117 = tpu.dynamic_rotate %116 by %c64_i32 dim 1 : vector<28x128xf32>, i32 -> vector<28x128xf32>
    %c0_88 = arith.constant 0 : index
    %c0_89 = arith.constant 0 : index
    %c0_90 = arith.constant 0 : index
    %118 = vector.load %arg12[%c0_88, %c0_89, %c0_90] : memref<9x1x128xf32, #tpu.memory_space<vmem>>, vector<1x1x128xf32>
    %119 = vector.shape_cast %118 : vector<1x1x128xf32> to vector<1x128xf32>
    %120 = vector.broadcast %119 : vector<1x128xf32> to vector<28x128xf32>
    %121 = arith.mulf %116, %120 : vector<28x128xf32>
    %122 = arith.addf %113, %121 : vector<28x128xf32>
    %c0_91 = arith.constant 0 : index
    %c0_92 = arith.constant 0 : index
    %c0_93 = arith.constant 0 : index
    %123 = vector.load %arg13[%c0_91, %c0_92, %c0_93] : memref<9x1x128xf32, #tpu.memory_space<vmem>>, vector<1x1x128xf32>
    %124 = vector.shape_cast %123 : vector<1x1x128xf32> to vector<1x128xf32>
    %125 = vector.broadcast %124 : vector<1x128xf32> to vector<28x128xf32>
    %126 = arith.mulf %117, %125 : vector<28x128xf32>
    %127 = arith.addf %122, %126 : vector<28x128xf32>
    %c1_94 = arith.constant 1 : index
    %c0_95 = arith.constant 0 : index
    %c0_96 = arith.constant 0 : index
    %128 = vector.load %arg3[%c1_94, %c0_95, %c0_96] : memref<9x28x28xbf16, #tpu.memory_space<vmem>>, vector<1x28x28xbf16>
    %129 = vector.shape_cast %128 : vector<1x28x28xbf16> to vector<28x28xbf16>
    %cst_97 = arith.constant dense<0.000000e+00> : vector<28x128xf32>
    %130 = tpu.matmul %129, %112, %cst_97 {dimension_numbers = #tpu.dot_dimension_numbers<[1], [0], [0], [1], [0, 0, 1, 1], [], []>} : vector<28x28xbf16>, vector<28x128xbf16>, vector<28x128xf32> -> vector<28x128xf32>
    %c64_i32_98 = arith.constant 64 : i32
    %131 = tpu.dynamic_rotate %130 by %c64_i32_98 dim 1 : vector<28x128xf32>, i32 -> vector<28x128xf32>
    %c1_99 = arith.constant 1 : index
    %c0_100 = arith.constant 0 : index
    %c0_101 = arith.constant 0 : index
    %132 = vector.load %arg12[%c1_99, %c0_100, %c0_101] : memref<9x1x128xf32, #tpu.memory_space<vmem>>, vector<1x1x128xf32>
    %133 = vector.shape_cast %132 : vector<1x1x128xf32> to vector<1x128xf32>
    %134 = vector.broadcast %133 : vector<1x128xf32> to vector<28x128xf32>
    %135 = arith.mulf %130, %134 : vector<28x128xf32>
    %136 = arith.addf %127, %135 : vector<28x128xf32>
    %c1_102 = arith.constant 1 : index
    %c0_103 = arith.constant 0 : index
    %c0_104 = arith.constant 0 : index
    %137 = vector.load %arg13[%c1_102, %c0_103, %c0_104] : memref<9x1x128xf32, #tpu.memory_space<vmem>>, vector<1x1x128xf32>
    %138 = vector.shape_cast %137 : vector<1x1x128xf32> to vector<1x128xf32>
    %139 = vector.broadcast %138 : vector<1x128xf32> to vector<28x128xf32>
    %140 = arith.mulf %131, %139 : vector<28x128xf32>
    %141 = arith.addf %136, %140 : vector<28x128xf32>
    %c2_105 = arith.constant 2 : index
    %c0_106 = arith.constant 0 : index
    %c0_107 = arith.constant 0 : index
    %142 = vector.load %arg3[%c2_105, %c0_106, %c0_107] : memref<9x28x28xbf16, #tpu.memory_space<vmem>>, vector<1x28x28xbf16>
    %143 = vector.shape_cast %142 : vector<1x28x28xbf16> to vector<28x28xbf16>
    %cst_108 = arith.constant dense<0.000000e+00> : vector<28x128xf32>
    %144 = tpu.matmul %143, %112, %cst_108 {dimension_numbers = #tpu.dot_dimension_numbers<[1], [0], [0], [1], [0, 0, 1, 1], [], []>} : vector<28x28xbf16>, vector<28x128xbf16>, vector<28x128xf32> -> vector<28x128xf32>
    %c64_i32_109 = arith.constant 64 : i32
    %145 = tpu.dynamic_rotate %144 by %c64_i32_109 dim 1 : vector<28x128xf32>, i32 -> vector<28x128xf32>
    %c2_110 = arith.constant 2 : index
    %c0_111 = arith.constant 0 : index
    %c0_112 = arith.constant 0 : index
    %146 = vector.load %arg12[%c2_110, %c0_111, %c0_112] : memref<9x1x128xf32, #tpu.memory_space<vmem>>, vector<1x1x128xf32>
    %147 = vector.shape_cast %146 : vector<1x1x128xf32> to vector<1x128xf32>
    %148 = vector.broadcast %147 : vector<1x128xf32> to vector<28x128xf32>
    %149 = arith.mulf %144, %148 : vector<28x128xf32>
    %150 = arith.addf %141, %149 : vector<28x128xf32>
    %c2_113 = arith.constant 2 : index
    %c0_114 = arith.constant 0 : index
    %c0_115 = arith.constant 0 : index
    %151 = vector.load %arg13[%c2_113, %c0_114, %c0_115] : memref<9x1x128xf32, #tpu.memory_space<vmem>>, vector<1x1x128xf32>
    %152 = vector.shape_cast %151 : vector<1x1x128xf32> to vector<1x128xf32>
    %153 = vector.broadcast %152 : vector<1x128xf32> to vector<28x128xf32>
    %154 = arith.mulf %145, %153 : vector<28x128xf32>
    %155 = arith.addf %150, %154 : vector<28x128xf32>
    %c3_116 = arith.constant 3 : index
    %c0_117 = arith.constant 0 : index
    %c0_118 = arith.constant 0 : index
    %156 = vector.load %arg3[%c3_116, %c0_117, %c0_118] : memref<9x28x28xbf16, #tpu.memory_space<vmem>>, vector<1x28x28xbf16>
    %157 = vector.shape_cast %156 : vector<1x28x28xbf16> to vector<28x28xbf16>
    %cst_119 = arith.constant dense<0.000000e+00> : vector<28x128xf32>
    %158 = tpu.matmul %157, %112, %cst_119 {dimension_numbers = #tpu.dot_dimension_numbers<[1], [0], [0], [1], [0, 0, 1, 1], [], []>} : vector<28x28xbf16>, vector<28x128xbf16>, vector<28x128xf32> -> vector<28x128xf32>
    %c64_i32_120 = arith.constant 64 : i32
    %159 = tpu.dynamic_rotate %158 by %c64_i32_120 dim 1 : vector<28x128xf32>, i32 -> vector<28x128xf32>
    %c3_121 = arith.constant 3 : index
    %c0_122 = arith.constant 0 : index
    %c0_123 = arith.constant 0 : index
    %160 = vector.load %arg12[%c3_121, %c0_122, %c0_123] : memref<9x1x128xf32, #tpu.memory_space<vmem>>, vector<1x1x128xf32>
    %161 = vector.shape_cast %160 : vector<1x1x128xf32> to vector<1x128xf32>
    %162 = vector.broadcast %161 : vector<1x128xf32> to vector<28x128xf32>
    %163 = arith.mulf %158, %162 : vector<28x128xf32>
    %164 = arith.addf %155, %163 : vector<28x128xf32>
    %c3_124 = arith.constant 3 : index
    %c0_125 = arith.constant 0 : index
    %c0_126 = arith.constant 0 : index
    %165 = vector.load %arg13[%c3_124, %c0_125, %c0_126] : memref<9x1x128xf32, #tpu.memory_space<vmem>>, vector<1x1x128xf32>
    %166 = vector.shape_cast %165 : vector<1x1x128xf32> to vector<1x128xf32>
    %167 = vector.broadcast %166 : vector<1x128xf32> to vector<28x128xf32>
    %168 = arith.mulf %159, %167 : vector<28x128xf32>
    %169 = arith.addf %164, %168 : vector<28x128xf32>
    %c4_127 = arith.constant 4 : index
    %c0_128 = arith.constant 0 : index
    %c0_129 = arith.constant 0 : index
    %170 = vector.load %arg3[%c4_127, %c0_128, %c0_129] : memref<9x28x28xbf16, #tpu.memory_space<vmem>>, vector<1x28x28xbf16>
    %171 = vector.shape_cast %170 : vector<1x28x28xbf16> to vector<28x28xbf16>
    %cst_130 = arith.constant dense<0.000000e+00> : vector<28x128xf32>
    %172 = tpu.matmul %171, %112, %cst_130 {dimension_numbers = #tpu.dot_dimension_numbers<[1], [0], [0], [1], [0, 0, 1, 1], [], []>} : vector<28x28xbf16>, vector<28x128xbf16>, vector<28x128xf32> -> vector<28x128xf32>
    %c64_i32_131 = arith.constant 64 : i32
    %173 = tpu.dynamic_rotate %172 by %c64_i32_131 dim 1 : vector<28x128xf32>, i32 -> vector<28x128xf32>
    %c4_132 = arith.constant 4 : index
    %c0_133 = arith.constant 0 : index
    %c0_134 = arith.constant 0 : index
    %174 = vector.load %arg12[%c4_132, %c0_133, %c0_134] : memref<9x1x128xf32, #tpu.memory_space<vmem>>, vector<1x1x128xf32>
    %175 = vector.shape_cast %174 : vector<1x1x128xf32> to vector<1x128xf32>
    %176 = vector.broadcast %175 : vector<1x128xf32> to vector<28x128xf32>
    %177 = arith.mulf %172, %176 : vector<28x128xf32>
    %178 = arith.addf %169, %177 : vector<28x128xf32>
    %c4_135 = arith.constant 4 : index
    %c0_136 = arith.constant 0 : index
    %c0_137 = arith.constant 0 : index
    %179 = vector.load %arg13[%c4_135, %c0_136, %c0_137] : memref<9x1x128xf32, #tpu.memory_space<vmem>>, vector<1x1x128xf32>
    %180 = vector.shape_cast %179 : vector<1x1x128xf32> to vector<1x128xf32>
    %181 = vector.broadcast %180 : vector<1x128xf32> to vector<28x128xf32>
    %182 = arith.mulf %173, %181 : vector<28x128xf32>
    %183 = arith.addf %178, %182 : vector<28x128xf32>
    %c5_138 = arith.constant 5 : index
    %c0_139 = arith.constant 0 : index
    %c0_140 = arith.constant 0 : index
    %184 = vector.load %arg3[%c5_138, %c0_139, %c0_140] : memref<9x28x28xbf16, #tpu.memory_space<vmem>>, vector<1x28x28xbf16>
    %185 = vector.shape_cast %184 : vector<1x28x28xbf16> to vector<28x28xbf16>
    %cst_141 = arith.constant dense<0.000000e+00> : vector<28x128xf32>
    %186 = tpu.matmul %185, %112, %cst_141 {dimension_numbers = #tpu.dot_dimension_numbers<[1], [0], [0], [1], [0, 0, 1, 1], [], []>} : vector<28x28xbf16>, vector<28x128xbf16>, vector<28x128xf32> -> vector<28x128xf32>
    %c64_i32_142 = arith.constant 64 : i32
    %187 = tpu.dynamic_rotate %186 by %c64_i32_142 dim 1 : vector<28x128xf32>, i32 -> vector<28x128xf32>
    %c5_143 = arith.constant 5 : index
    %c0_144 = arith.constant 0 : index
    %c0_145 = arith.constant 0 : index
    %188 = vector.load %arg12[%c5_143, %c0_144, %c0_145] : memref<9x1x128xf32, #tpu.memory_space<vmem>>, vector<1x1x128xf32>
    %189 = vector.shape_cast %188 : vector<1x1x128xf32> to vector<1x128xf32>
    %190 = vector.broadcast %189 : vector<1x128xf32> to vector<28x128xf32>
    %191 = arith.mulf %186, %190 : vector<28x128xf32>
    %192 = arith.addf %183, %191 : vector<28x128xf32>
    %c5_146 = arith.constant 5 : index
    %c0_147 = arith.constant 0 : index
    %c0_148 = arith.constant 0 : index
    %193 = vector.load %arg13[%c5_146, %c0_147, %c0_148] : memref<9x1x128xf32, #tpu.memory_space<vmem>>, vector<1x1x128xf32>
    %194 = vector.shape_cast %193 : vector<1x1x128xf32> to vector<1x128xf32>
    %195 = vector.broadcast %194 : vector<1x128xf32> to vector<28x128xf32>
    %196 = arith.mulf %187, %195 : vector<28x128xf32>
    %197 = arith.addf %192, %196 : vector<28x128xf32>
    %c6_149 = arith.constant 6 : index
    %c0_150 = arith.constant 0 : index
    %c0_151 = arith.constant 0 : index
    %198 = vector.load %arg3[%c6_149, %c0_150, %c0_151] : memref<9x28x28xbf16, #tpu.memory_space<vmem>>, vector<1x28x28xbf16>
    %199 = vector.shape_cast %198 : vector<1x28x28xbf16> to vector<28x28xbf16>
    %cst_152 = arith.constant dense<0.000000e+00> : vector<28x128xf32>
    %200 = tpu.matmul %199, %112, %cst_152 {dimension_numbers = #tpu.dot_dimension_numbers<[1], [0], [0], [1], [0, 0, 1, 1], [], []>} : vector<28x28xbf16>, vector<28x128xbf16>, vector<28x128xf32> -> vector<28x128xf32>
    %c64_i32_153 = arith.constant 64 : i32
    %201 = tpu.dynamic_rotate %200 by %c64_i32_153 dim 1 : vector<28x128xf32>, i32 -> vector<28x128xf32>
    %c6_154 = arith.constant 6 : index
    %c0_155 = arith.constant 0 : index
    %c0_156 = arith.constant 0 : index
    %202 = vector.load %arg12[%c6_154, %c0_155, %c0_156] : memref<9x1x128xf32, #tpu.memory_space<vmem>>, vector<1x1x128xf32>
    %203 = vector.shape_cast %202 : vector<1x1x128xf32> to vector<1x128xf32>
    %204 = vector.broadcast %203 : vector<1x128xf32> to vector<28x128xf32>
    %205 = arith.mulf %200, %204 : vector<28x128xf32>
    %206 = arith.addf %197, %205 : vector<28x128xf32>
    %c6_157 = arith.constant 6 : index
    %c0_158 = arith.constant 0 : index
    %c0_159 = arith.constant 0 : index
    %207 = vector.load %arg13[%c6_157, %c0_158, %c0_159] : memref<9x1x128xf32, #tpu.memory_space<vmem>>, vector<1x1x128xf32>
    %208 = vector.shape_cast %207 : vector<1x1x128xf32> to vector<1x128xf32>
    %209 = vector.broadcast %208 : vector<1x128xf32> to vector<28x128xf32>
    %210 = arith.mulf %201, %209 : vector<28x128xf32>
    %211 = arith.addf %206, %210 : vector<28x128xf32>
    %c7_160 = arith.constant 7 : index
    %c0_161 = arith.constant 0 : index
    %c0_162 = arith.constant 0 : index
    %212 = vector.load %arg3[%c7_160, %c0_161, %c0_162] : memref<9x28x28xbf16, #tpu.memory_space<vmem>>, vector<1x28x28xbf16>
    %213 = vector.shape_cast %212 : vector<1x28x28xbf16> to vector<28x28xbf16>
    %cst_163 = arith.constant dense<0.000000e+00> : vector<28x128xf32>
    %214 = tpu.matmul %213, %112, %cst_163 {dimension_numbers = #tpu.dot_dimension_numbers<[1], [0], [0], [1], [0, 0, 1, 1], [], []>} : vector<28x28xbf16>, vector<28x128xbf16>, vector<28x128xf32> -> vector<28x128xf32>
    %c64_i32_164 = arith.constant 64 : i32
    %215 = tpu.dynamic_rotate %214 by %c64_i32_164 dim 1 : vector<28x128xf32>, i32 -> vector<28x128xf32>
    %c7_165 = arith.constant 7 : index
    %c0_166 = arith.constant 0 : index
    %c0_167 = arith.constant 0 : index
    %216 = vector.load %arg12[%c7_165, %c0_166, %c0_167] : memref<9x1x128xf32, #tpu.memory_space<vmem>>, vector<1x1x128xf32>
    %217 = vector.shape_cast %216 : vector<1x1x128xf32> to vector<1x128xf32>
    %218 = vector.broadcast %217 : vector<1x128xf32> to vector<28x128xf32>
    %219 = arith.mulf %214, %218 : vector<28x128xf32>
    %220 = arith.addf %211, %219 : vector<28x128xf32>
    %c7_168 = arith.constant 7 : index
    %c0_169 = arith.constant 0 : index
    %c0_170 = arith.constant 0 : index
    %221 = vector.load %arg13[%c7_168, %c0_169, %c0_170] : memref<9x1x128xf32, #tpu.memory_space<vmem>>, vector<1x1x128xf32>
    %222 = vector.shape_cast %221 : vector<1x1x128xf32> to vector<1x128xf32>
    %223 = vector.broadcast %222 : vector<1x128xf32> to vector<28x128xf32>
    %224 = arith.mulf %215, %223 : vector<28x128xf32>
    %225 = arith.addf %220, %224 : vector<28x128xf32>
    %c8_171 = arith.constant 8 : index
    %c0_172 = arith.constant 0 : index
    %c0_173 = arith.constant 0 : index
    %226 = vector.load %arg3[%c8_171, %c0_172, %c0_173] : memref<9x28x28xbf16, #tpu.memory_space<vmem>>, vector<1x28x28xbf16>
    %227 = vector.shape_cast %226 : vector<1x28x28xbf16> to vector<28x28xbf16>
    %cst_174 = arith.constant dense<0.000000e+00> : vector<28x128xf32>
    %228 = tpu.matmul %227, %112, %cst_174 {dimension_numbers = #tpu.dot_dimension_numbers<[1], [0], [0], [1], [0, 0, 1, 1], [], []>} : vector<28x28xbf16>, vector<28x128xbf16>, vector<28x128xf32> -> vector<28x128xf32>
    %c64_i32_175 = arith.constant 64 : i32
    %229 = tpu.dynamic_rotate %228 by %c64_i32_175 dim 1 : vector<28x128xf32>, i32 -> vector<28x128xf32>
    %c8_176 = arith.constant 8 : index
    %c0_177 = arith.constant 0 : index
    %c0_178 = arith.constant 0 : index
    %230 = vector.load %arg12[%c8_176, %c0_177, %c0_178] : memref<9x1x128xf32, #tpu.memory_space<vmem>>, vector<1x1x128xf32>
    %231 = vector.shape_cast %230 : vector<1x1x128xf32> to vector<1x128xf32>
    %232 = vector.broadcast %231 : vector<1x128xf32> to vector<28x128xf32>
    %233 = arith.mulf %228, %232 : vector<28x128xf32>
    %234 = arith.addf %225, %233 : vector<28x128xf32>
    %c8_179 = arith.constant 8 : index
    %c0_180 = arith.constant 0 : index
    %c0_181 = arith.constant 0 : index
    %235 = vector.load %arg13[%c8_179, %c0_180, %c0_181] : memref<9x1x128xf32, #tpu.memory_space<vmem>>, vector<1x1x128xf32>
    %236 = vector.shape_cast %235 : vector<1x1x128xf32> to vector<1x128xf32>
    %237 = vector.broadcast %236 : vector<1x128xf32> to vector<28x128xf32>
    %238 = arith.mulf %229, %237 : vector<28x128xf32>
    %239 = arith.addf %234, %238 : vector<28x128xf32>
    %c0_182 = arith.constant 0 : index
    %c0_183 = arith.constant 0 : index
    %240 = vector.load %arg14[%c0_182, %c0_183] : memref<1x128xf32, #tpu.memory_space<vmem>>, vector<1x128xf32>
    %241 = vector.broadcast %240 : vector<1x128xf32> to vector<28x128xf32>
    %242 = arith.addf %239, %241 : vector<28x128xf32>
    %cst_184 = arith.constant 0.000000e+00 : f32
    %243 = vector.broadcast %cst_184 : f32 to vector<28x128xf32>
    %244 = arith.maximumf %242, %243 : vector<28x128xf32>
    %c0_185 = arith.constant 0 : index
    %c0_186 = arith.constant 0 : index
    %245 = vector.load %arg15[%c0_185, %c0_186] : memref<64x128xbf16, #tpu.memory_space<vmem>>, vector<64x128xbf16>
    %246 = arith.truncf %103 : vector<28x64xf32> to vector<28x64xbf16>
    %cst_187 = arith.constant dense<0.000000e+00> : vector<28x128xf32>
    %247 = tpu.matmul %246, %245, %cst_187 {dimension_numbers = #tpu.dot_dimension_numbers<[1], [0], [0], [1], [0, 0, 1, 1], [], []>} : vector<28x64xbf16>, vector<64x128xbf16>, vector<28x128xf32> -> vector<28x128xf32>
    %c0_188 = arith.constant 0 : index
    %c0_189 = arith.constant 0 : index
    %248 = vector.load %arg16[%c0_188, %c0_189] : memref<1x128xf32, #tpu.memory_space<vmem>>, vector<1x128xf32>
    %249 = vector.broadcast %248 : vector<1x128xf32> to vector<28x128xf32>
    %250 = arith.addf %247, %249 : vector<28x128xf32>
    %c0_190 = arith.constant 0 : index
    %c0_191 = arith.constant 0 : index
    %251 = vector.load %arg17[%c0_190, %c0_191] : memref<128x128xbf16, #tpu.memory_space<vmem>>, vector<128x128xbf16>
    %252 = arith.truncf %244 : vector<28x128xf32> to vector<28x128xbf16>
    %cst_192 = arith.constant dense<0.000000e+00> : vector<28x128xf32>
    %253 = tpu.matmul %252, %251, %cst_192 {dimension_numbers = #tpu.dot_dimension_numbers<[1], [0], [0], [1], [0, 0, 1, 1], [], []>} : vector<28x128xbf16>, vector<128x128xbf16>, vector<28x128xf32> -> vector<28x128xf32>
    %c0_193 = arith.constant 0 : index
    %c0_194 = arith.constant 0 : index
    %254 = vector.load %arg18[%c0_193, %c0_194] : memref<1x128xf32, #tpu.memory_space<vmem>>, vector<1x128xf32>
    %255 = vector.broadcast %254 : vector<1x128xf32> to vector<28x128xf32>
    %256 = arith.addf %253, %255 : vector<28x128xf32>
    %257 = arith.addf %256, %250 : vector<28x128xf32>
    %cst_195 = arith.constant 0.000000e+00 : f32
    %258 = vector.broadcast %cst_195 : f32 to vector<28x128xf32>
    %259 = arith.maximumf %257, %258 : vector<28x128xf32>
    %260 = arith.truncf %259 : vector<28x128xf32> to vector<28x128xbf16>
    %cst_196 = arith.constant 0.000000e+00 : f32
    %261 = vector.broadcast %cst_196 : f32 to vector<2x32xf32>
    %c0_197 = arith.constant 0 : index
    %c0_198 = arith.constant 0 : index
    %c0_199 = arith.constant 0 : index
    %262 = vector.load %arg19[%c0_197, %c0_198, %c0_199] : memref<14x2x28xbf16, #tpu.memory_space<vmem>>, vector<1x2x28xbf16>
    %263 = vector.shape_cast %262 : vector<1x2x28xbf16> to vector<2x28xbf16>
    %cst_200 = arith.constant dense<0.000000e+00> : vector<2x128xf32>
    %264 = tpu.matmul %263, %260, %cst_200 {dimension_numbers = #tpu.dot_dimension_numbers<[1], [0], [0], [1], [0, 0, 1, 1], [], []>} : vector<2x28xbf16>, vector<28x128xbf16>, vector<2x128xf32> -> vector<2x128xf32>
    %265 = arith.truncf %264 : vector<2x128xf32> to vector<2x128xbf16>
    %c0_201 = arith.constant 0 : index
    %c0_202 = arith.constant 0 : index
    %c0_203 = arith.constant 0 : index
    %266 = vector.load %arg20[%c0_201, %c0_202, %c0_203] : memref<14x128x32xbf16, #tpu.memory_space<vmem>>, vector<1x128x32xbf16>
    %267 = vector.shape_cast %266 : vector<1x128x32xbf16> to vector<128x32xbf16>
    %cst_204 = arith.constant dense<0.000000e+00> : vector<2x32xf32>
    %268 = tpu.matmul %265, %267, %cst_204 {dimension_numbers = #tpu.dot_dimension_numbers<[1], [0], [0], [1], [0, 0, 1, 1], [], []>} : vector<2x128xbf16>, vector<128x32xbf16>, vector<2x32xf32> -> vector<2x32xf32>
    %269 = arith.addf %261, %268 : vector<2x32xf32>
    %c1_205 = arith.constant 1 : index
    %c0_206 = arith.constant 0 : index
    %c0_207 = arith.constant 0 : index
    %270 = vector.load %arg19[%c1_205, %c0_206, %c0_207] : memref<14x2x28xbf16, #tpu.memory_space<vmem>>, vector<1x2x28xbf16>
    %271 = vector.shape_cast %270 : vector<1x2x28xbf16> to vector<2x28xbf16>
    %cst_208 = arith.constant dense<0.000000e+00> : vector<2x128xf32>
    %272 = tpu.matmul %271, %260, %cst_208 {dimension_numbers = #tpu.dot_dimension_numbers<[1], [0], [0], [1], [0, 0, 1, 1], [], []>} : vector<2x28xbf16>, vector<28x128xbf16>, vector<2x128xf32> -> vector<2x128xf32>
    %273 = arith.truncf %272 : vector<2x128xf32> to vector<2x128xbf16>
    %c1_209 = arith.constant 1 : index
    %c0_210 = arith.constant 0 : index
    %c0_211 = arith.constant 0 : index
    %274 = vector.load %arg20[%c1_209, %c0_210, %c0_211] : memref<14x128x32xbf16, #tpu.memory_space<vmem>>, vector<1x128x32xbf16>
    %275 = vector.shape_cast %274 : vector<1x128x32xbf16> to vector<128x32xbf16>
    %cst_212 = arith.constant dense<0.000000e+00> : vector<2x32xf32>
    %276 = tpu.matmul %273, %275, %cst_212 {dimension_numbers = #tpu.dot_dimension_numbers<[1], [0], [0], [1], [0, 0, 1, 1], [], []>} : vector<2x128xbf16>, vector<128x32xbf16>, vector<2x32xf32> -> vector<2x32xf32>
    %277 = arith.addf %269, %276 : vector<2x32xf32>
    %c2_213 = arith.constant 2 : index
    %c0_214 = arith.constant 0 : index
    %c0_215 = arith.constant 0 : index
    %278 = vector.load %arg19[%c2_213, %c0_214, %c0_215] : memref<14x2x28xbf16, #tpu.memory_space<vmem>>, vector<1x2x28xbf16>
    %279 = vector.shape_cast %278 : vector<1x2x28xbf16> to vector<2x28xbf16>
    %cst_216 = arith.constant dense<0.000000e+00> : vector<2x128xf32>
    %280 = tpu.matmul %279, %260, %cst_216 {dimension_numbers = #tpu.dot_dimension_numbers<[1], [0], [0], [1], [0, 0, 1, 1], [], []>} : vector<2x28xbf16>, vector<28x128xbf16>, vector<2x128xf32> -> vector<2x128xf32>
    %281 = arith.truncf %280 : vector<2x128xf32> to vector<2x128xbf16>
    %c2_217 = arith.constant 2 : index
    %c0_218 = arith.constant 0 : index
    %c0_219 = arith.constant 0 : index
    %282 = vector.load %arg20[%c2_217, %c0_218, %c0_219] : memref<14x128x32xbf16, #tpu.memory_space<vmem>>, vector<1x128x32xbf16>
    %283 = vector.shape_cast %282 : vector<1x128x32xbf16> to vector<128x32xbf16>
    %cst_220 = arith.constant dense<0.000000e+00> : vector<2x32xf32>
    %284 = tpu.matmul %281, %283, %cst_220 {dimension_numbers = #tpu.dot_dimension_numbers<[1], [0], [0], [1], [0, 0, 1, 1], [], []>} : vector<2x128xbf16>, vector<128x32xbf16>, vector<2x32xf32> -> vector<2x32xf32>
    %285 = arith.addf %277, %284 : vector<2x32xf32>
    %c3_221 = arith.constant 3 : index
    %c0_222 = arith.constant 0 : index
    %c0_223 = arith.constant 0 : index
    %286 = vector.load %arg19[%c3_221, %c0_222, %c0_223] : memref<14x2x28xbf16, #tpu.memory_space<vmem>>, vector<1x2x28xbf16>
    %287 = vector.shape_cast %286 : vector<1x2x28xbf16> to vector<2x28xbf16>
    %cst_224 = arith.constant dense<0.000000e+00> : vector<2x128xf32>
    %288 = tpu.matmul %287, %260, %cst_224 {dimension_numbers = #tpu.dot_dimension_numbers<[1], [0], [0], [1], [0, 0, 1, 1], [], []>} : vector<2x28xbf16>, vector<28x128xbf16>, vector<2x128xf32> -> vector<2x128xf32>
    %289 = arith.truncf %288 : vector<2x128xf32> to vector<2x128xbf16>
    %c3_225 = arith.constant 3 : index
    %c0_226 = arith.constant 0 : index
    %c0_227 = arith.constant 0 : index
    %290 = vector.load %arg20[%c3_225, %c0_226, %c0_227] : memref<14x128x32xbf16, #tpu.memory_space<vmem>>, vector<1x128x32xbf16>
    %291 = vector.shape_cast %290 : vector<1x128x32xbf16> to vector<128x32xbf16>
    %cst_228 = arith.constant dense<0.000000e+00> : vector<2x32xf32>
    %292 = tpu.matmul %289, %291, %cst_228 {dimension_numbers = #tpu.dot_dimension_numbers<[1], [0], [0], [1], [0, 0, 1, 1], [], []>} : vector<2x128xbf16>, vector<128x32xbf16>, vector<2x32xf32> -> vector<2x32xf32>
    %293 = arith.addf %285, %292 : vector<2x32xf32>
    %c4_229 = arith.constant 4 : index
    %c0_230 = arith.constant 0 : index
    %c0_231 = arith.constant 0 : index
    %294 = vector.load %arg19[%c4_229, %c0_230, %c0_231] : memref<14x2x28xbf16, #tpu.memory_space<vmem>>, vector<1x2x28xbf16>
    %295 = vector.shape_cast %294 : vector<1x2x28xbf16> to vector<2x28xbf16>
    %cst_232 = arith.constant dense<0.000000e+00> : vector<2x128xf32>
    %296 = tpu.matmul %295, %260, %cst_232 {dimension_numbers = #tpu.dot_dimension_numbers<[1], [0], [0], [1], [0, 0, 1, 1], [], []>} : vector<2x28xbf16>, vector<28x128xbf16>, vector<2x128xf32> -> vector<2x128xf32>
    %297 = arith.truncf %296 : vector<2x128xf32> to vector<2x128xbf16>
    %c4_233 = arith.constant 4 : index
    %c0_234 = arith.constant 0 : index
    %c0_235 = arith.constant 0 : index
    %298 = vector.load %arg20[%c4_233, %c0_234, %c0_235] : memref<14x128x32xbf16, #tpu.memory_space<vmem>>, vector<1x128x32xbf16>
    %299 = vector.shape_cast %298 : vector<1x128x32xbf16> to vector<128x32xbf16>
    %cst_236 = arith.constant dense<0.000000e+00> : vector<2x32xf32>
    %300 = tpu.matmul %297, %299, %cst_236 {dimension_numbers = #tpu.dot_dimension_numbers<[1], [0], [0], [1], [0, 0, 1, 1], [], []>} : vector<2x128xbf16>, vector<128x32xbf16>, vector<2x32xf32> -> vector<2x32xf32>
    %301 = arith.addf %293, %300 : vector<2x32xf32>
    %c5_237 = arith.constant 5 : index
    %c0_238 = arith.constant 0 : index
    %c0_239 = arith.constant 0 : index
    %302 = vector.load %arg19[%c5_237, %c0_238, %c0_239] : memref<14x2x28xbf16, #tpu.memory_space<vmem>>, vector<1x2x28xbf16>
    %303 = vector.shape_cast %302 : vector<1x2x28xbf16> to vector<2x28xbf16>
    %cst_240 = arith.constant dense<0.000000e+00> : vector<2x128xf32>
    %304 = tpu.matmul %303, %260, %cst_240 {dimension_numbers = #tpu.dot_dimension_numbers<[1], [0], [0], [1], [0, 0, 1, 1], [], []>} : vector<2x28xbf16>, vector<28x128xbf16>, vector<2x128xf32> -> vector<2x128xf32>
    %305 = arith.truncf %304 : vector<2x128xf32> to vector<2x128xbf16>
    %c5_241 = arith.constant 5 : index
    %c0_242 = arith.constant 0 : index
    %c0_243 = arith.constant 0 : index
    %306 = vector.load %arg20[%c5_241, %c0_242, %c0_243] : memref<14x128x32xbf16, #tpu.memory_space<vmem>>, vector<1x128x32xbf16>
    %307 = vector.shape_cast %306 : vector<1x128x32xbf16> to vector<128x32xbf16>
    %cst_244 = arith.constant dense<0.000000e+00> : vector<2x32xf32>
    %308 = tpu.matmul %305, %307, %cst_244 {dimension_numbers = #tpu.dot_dimension_numbers<[1], [0], [0], [1], [0, 0, 1, 1], [], []>} : vector<2x128xbf16>, vector<128x32xbf16>, vector<2x32xf32> -> vector<2x32xf32>
    %309 = arith.addf %301, %308 : vector<2x32xf32>
    %c6_245 = arith.constant 6 : index
    %c0_246 = arith.constant 0 : index
    %c0_247 = arith.constant 0 : index
    %310 = vector.load %arg19[%c6_245, %c0_246, %c0_247] : memref<14x2x28xbf16, #tpu.memory_space<vmem>>, vector<1x2x28xbf16>
    %311 = vector.shape_cast %310 : vector<1x2x28xbf16> to vector<2x28xbf16>
    %cst_248 = arith.constant dense<0.000000e+00> : vector<2x128xf32>
    %312 = tpu.matmul %311, %260, %cst_248 {dimension_numbers = #tpu.dot_dimension_numbers<[1], [0], [0], [1], [0, 0, 1, 1], [], []>} : vector<2x28xbf16>, vector<28x128xbf16>, vector<2x128xf32> -> vector<2x128xf32>
    %313 = arith.truncf %312 : vector<2x128xf32> to vector<2x128xbf16>
    %c6_249 = arith.constant 6 : index
    %c0_250 = arith.constant 0 : index
    %c0_251 = arith.constant 0 : index
    %314 = vector.load %arg20[%c6_249, %c0_250, %c0_251] : memref<14x128x32xbf16, #tpu.memory_space<vmem>>, vector<1x128x32xbf16>
    %315 = vector.shape_cast %314 : vector<1x128x32xbf16> to vector<128x32xbf16>
    %cst_252 = arith.constant dense<0.000000e+00> : vector<2x32xf32>
    %316 = tpu.matmul %313, %315, %cst_252 {dimension_numbers = #tpu.dot_dimension_numbers<[1], [0], [0], [1], [0, 0, 1, 1], [], []>} : vector<2x128xbf16>, vector<128x32xbf16>, vector<2x32xf32> -> vector<2x32xf32>
    %317 = arith.addf %309, %316 : vector<2x32xf32>
    %c7_253 = arith.constant 7 : index
    %c0_254 = arith.constant 0 : index
    %c0_255 = arith.constant 0 : index
    %318 = vector.load %arg19[%c7_253, %c0_254, %c0_255] : memref<14x2x28xbf16, #tpu.memory_space<vmem>>, vector<1x2x28xbf16>
    %319 = vector.shape_cast %318 : vector<1x2x28xbf16> to vector<2x28xbf16>
    %cst_256 = arith.constant dense<0.000000e+00> : vector<2x128xf32>
    %320 = tpu.matmul %319, %260, %cst_256 {dimension_numbers = #tpu.dot_dimension_numbers<[1], [0], [0], [1], [0, 0, 1, 1], [], []>} : vector<2x28xbf16>, vector<28x128xbf16>, vector<2x128xf32> -> vector<2x128xf32>
    %321 = arith.truncf %320 : vector<2x128xf32> to vector<2x128xbf16>
    %c7_257 = arith.constant 7 : index
    %c0_258 = arith.constant 0 : index
    %c0_259 = arith.constant 0 : index
    %322 = vector.load %arg20[%c7_257, %c0_258, %c0_259] : memref<14x128x32xbf16, #tpu.memory_space<vmem>>, vector<1x128x32xbf16>
    %323 = vector.shape_cast %322 : vector<1x128x32xbf16> to vector<128x32xbf16>
    %cst_260 = arith.constant dense<0.000000e+00> : vector<2x32xf32>
    %324 = tpu.matmul %321, %323, %cst_260 {dimension_numbers = #tpu.dot_dimension_numbers<[1], [0], [0], [1], [0, 0, 1, 1], [], []>} : vector<2x128xbf16>, vector<128x32xbf16>, vector<2x32xf32> -> vector<2x32xf32>
    %325 = arith.addf %317, %324 : vector<2x32xf32>
    %c8_261 = arith.constant 8 : index
    %c0_262 = arith.constant 0 : index
    %c0_263 = arith.constant 0 : index
    %326 = vector.load %arg19[%c8_261, %c0_262, %c0_263] : memref<14x2x28xbf16, #tpu.memory_space<vmem>>, vector<1x2x28xbf16>
    %327 = vector.shape_cast %326 : vector<1x2x28xbf16> to vector<2x28xbf16>
    %cst_264 = arith.constant dense<0.000000e+00> : vector<2x128xf32>
    %328 = tpu.matmul %327, %260, %cst_264 {dimension_numbers = #tpu.dot_dimension_numbers<[1], [0], [0], [1], [0, 0, 1, 1], [], []>} : vector<2x28xbf16>, vector<28x128xbf16>, vector<2x128xf32> -> vector<2x128xf32>
    %329 = arith.truncf %328 : vector<2x128xf32> to vector<2x128xbf16>
    %c8_265 = arith.constant 8 : index
    %c0_266 = arith.constant 0 : index
    %c0_267 = arith.constant 0 : index
    %330 = vector.load %arg20[%c8_265, %c0_266, %c0_267] : memref<14x128x32xbf16, #tpu.memory_space<vmem>>, vector<1x128x32xbf16>
    %331 = vector.shape_cast %330 : vector<1x128x32xbf16> to vector<128x32xbf16>
    %cst_268 = arith.constant dense<0.000000e+00> : vector<2x32xf32>
    %332 = tpu.matmul %329, %331, %cst_268 {dimension_numbers = #tpu.dot_dimension_numbers<[1], [0], [0], [1], [0, 0, 1, 1], [], []>} : vector<2x128xbf16>, vector<128x32xbf16>, vector<2x32xf32> -> vector<2x32xf32>
    %333 = arith.addf %325, %332 : vector<2x32xf32>
    %c9 = arith.constant 9 : index
    %c0_269 = arith.constant 0 : index
    %c0_270 = arith.constant 0 : index
    %334 = vector.load %arg19[%c9, %c0_269, %c0_270] : memref<14x2x28xbf16, #tpu.memory_space<vmem>>, vector<1x2x28xbf16>
    %335 = vector.shape_cast %334 : vector<1x2x28xbf16> to vector<2x28xbf16>
    %cst_271 = arith.constant dense<0.000000e+00> : vector<2x128xf32>
    %336 = tpu.matmul %335, %260, %cst_271 {dimension_numbers = #tpu.dot_dimension_numbers<[1], [0], [0], [1], [0, 0, 1, 1], [], []>} : vector<2x28xbf16>, vector<28x128xbf16>, vector<2x128xf32> -> vector<2x128xf32>
    %337 = arith.truncf %336 : vector<2x128xf32> to vector<2x128xbf16>
    %c9_272 = arith.constant 9 : index
    %c0_273 = arith.constant 0 : index
    %c0_274 = arith.constant 0 : index
    %338 = vector.load %arg20[%c9_272, %c0_273, %c0_274] : memref<14x128x32xbf16, #tpu.memory_space<vmem>>, vector<1x128x32xbf16>
    %339 = vector.shape_cast %338 : vector<1x128x32xbf16> to vector<128x32xbf16>
    %cst_275 = arith.constant dense<0.000000e+00> : vector<2x32xf32>
    %340 = tpu.matmul %337, %339, %cst_275 {dimension_numbers = #tpu.dot_dimension_numbers<[1], [0], [0], [1], [0, 0, 1, 1], [], []>} : vector<2x128xbf16>, vector<128x32xbf16>, vector<2x32xf32> -> vector<2x32xf32>
    %341 = arith.addf %333, %340 : vector<2x32xf32>
    %c10 = arith.constant 10 : index
    %c0_276 = arith.constant 0 : index
    %c0_277 = arith.constant 0 : index
    %342 = vector.load %arg19[%c10, %c0_276, %c0_277] : memref<14x2x28xbf16, #tpu.memory_space<vmem>>, vector<1x2x28xbf16>
    %343 = vector.shape_cast %342 : vector<1x2x28xbf16> to vector<2x28xbf16>
    %cst_278 = arith.constant dense<0.000000e+00> : vector<2x128xf32>
    %344 = tpu.matmul %343, %260, %cst_278 {dimension_numbers = #tpu.dot_dimension_numbers<[1], [0], [0], [1], [0, 0, 1, 1], [], []>} : vector<2x28xbf16>, vector<28x128xbf16>, vector<2x128xf32> -> vector<2x128xf32>
    %345 = arith.truncf %344 : vector<2x128xf32> to vector<2x128xbf16>
    %c10_279 = arith.constant 10 : index
    %c0_280 = arith.constant 0 : index
    %c0_281 = arith.constant 0 : index
    %346 = vector.load %arg20[%c10_279, %c0_280, %c0_281] : memref<14x128x32xbf16, #tpu.memory_space<vmem>>, vector<1x128x32xbf16>
    %347 = vector.shape_cast %346 : vector<1x128x32xbf16> to vector<128x32xbf16>
    %cst_282 = arith.constant dense<0.000000e+00> : vector<2x32xf32>
    %348 = tpu.matmul %345, %347, %cst_282 {dimension_numbers = #tpu.dot_dimension_numbers<[1], [0], [0], [1], [0, 0, 1, 1], [], []>} : vector<2x128xbf16>, vector<128x32xbf16>, vector<2x32xf32> -> vector<2x32xf32>
    %349 = arith.addf %341, %348 : vector<2x32xf32>
    %c11 = arith.constant 11 : index
    %c0_283 = arith.constant 0 : index
    %c0_284 = arith.constant 0 : index
    %350 = vector.load %arg19[%c11, %c0_283, %c0_284] : memref<14x2x28xbf16, #tpu.memory_space<vmem>>, vector<1x2x28xbf16>
    %351 = vector.shape_cast %350 : vector<1x2x28xbf16> to vector<2x28xbf16>
    %cst_285 = arith.constant dense<0.000000e+00> : vector<2x128xf32>
    %352 = tpu.matmul %351, %260, %cst_285 {dimension_numbers = #tpu.dot_dimension_numbers<[1], [0], [0], [1], [0, 0, 1, 1], [], []>} : vector<2x28xbf16>, vector<28x128xbf16>, vector<2x128xf32> -> vector<2x128xf32>
    %353 = arith.truncf %352 : vector<2x128xf32> to vector<2x128xbf16>
    %c11_286 = arith.constant 11 : index
    %c0_287 = arith.constant 0 : index
    %c0_288 = arith.constant 0 : index
    %354 = vector.load %arg20[%c11_286, %c0_287, %c0_288] : memref<14x128x32xbf16, #tpu.memory_space<vmem>>, vector<1x128x32xbf16>
    %355 = vector.shape_cast %354 : vector<1x128x32xbf16> to vector<128x32xbf16>
    %cst_289 = arith.constant dense<0.000000e+00> : vector<2x32xf32>
    %356 = tpu.matmul %353, %355, %cst_289 {dimension_numbers = #tpu.dot_dimension_numbers<[1], [0], [0], [1], [0, 0, 1, 1], [], []>} : vector<2x128xbf16>, vector<128x32xbf16>, vector<2x32xf32> -> vector<2x32xf32>
    %357 = arith.addf %349, %356 : vector<2x32xf32>
    %c12 = arith.constant 12 : index
    %c0_290 = arith.constant 0 : index
    %c0_291 = arith.constant 0 : index
    %358 = vector.load %arg19[%c12, %c0_290, %c0_291] : memref<14x2x28xbf16, #tpu.memory_space<vmem>>, vector<1x2x28xbf16>
    %359 = vector.shape_cast %358 : vector<1x2x28xbf16> to vector<2x28xbf16>
    %cst_292 = arith.constant dense<0.000000e+00> : vector<2x128xf32>
    %360 = tpu.matmul %359, %260, %cst_292 {dimension_numbers = #tpu.dot_dimension_numbers<[1], [0], [0], [1], [0, 0, 1, 1], [], []>} : vector<2x28xbf16>, vector<28x128xbf16>, vector<2x128xf32> -> vector<2x128xf32>
    %361 = arith.truncf %360 : vector<2x128xf32> to vector<2x128xbf16>
    %c12_293 = arith.constant 12 : index
    %c0_294 = arith.constant 0 : index
    %c0_295 = arith.constant 0 : index
    %362 = vector.load %arg20[%c12_293, %c0_294, %c0_295] : memref<14x128x32xbf16, #tpu.memory_space<vmem>>, vector<1x128x32xbf16>
    %363 = vector.shape_cast %362 : vector<1x128x32xbf16> to vector<128x32xbf16>
    %cst_296 = arith.constant dense<0.000000e+00> : vector<2x32xf32>
    %364 = tpu.matmul %361, %363, %cst_296 {dimension_numbers = #tpu.dot_dimension_numbers<[1], [0], [0], [1], [0, 0, 1, 1], [], []>} : vector<2x128xbf16>, vector<128x32xbf16>, vector<2x32xf32> -> vector<2x32xf32>
    %365 = arith.addf %357, %364 : vector<2x32xf32>
    %c13 = arith.constant 13 : index
    %c0_297 = arith.constant 0 : index
    %c0_298 = arith.constant 0 : index
    %366 = vector.load %arg19[%c13, %c0_297, %c0_298] : memref<14x2x28xbf16, #tpu.memory_space<vmem>>, vector<1x2x28xbf16>
    %367 = vector.shape_cast %366 : vector<1x2x28xbf16> to vector<2x28xbf16>
    %cst_299 = arith.constant dense<0.000000e+00> : vector<2x128xf32>
    %368 = tpu.matmul %367, %260, %cst_299 {dimension_numbers = #tpu.dot_dimension_numbers<[1], [0], [0], [1], [0, 0, 1, 1], [], []>} : vector<2x28xbf16>, vector<28x128xbf16>, vector<2x128xf32> -> vector<2x128xf32>
    %369 = arith.truncf %368 : vector<2x128xf32> to vector<2x128xbf16>
    %c13_300 = arith.constant 13 : index
    %c0_301 = arith.constant 0 : index
    %c0_302 = arith.constant 0 : index
    %370 = vector.load %arg20[%c13_300, %c0_301, %c0_302] : memref<14x128x32xbf16, #tpu.memory_space<vmem>>, vector<1x128x32xbf16>
    %371 = vector.shape_cast %370 : vector<1x128x32xbf16> to vector<128x32xbf16>
    %cst_303 = arith.constant dense<0.000000e+00> : vector<2x32xf32>
    %372 = tpu.matmul %369, %371, %cst_303 {dimension_numbers = #tpu.dot_dimension_numbers<[1], [0], [0], [1], [0, 0, 1, 1], [], []>} : vector<2x128xbf16>, vector<128x32xbf16>, vector<2x32xf32> -> vector<2x32xf32>
    %373 = arith.addf %365, %372 : vector<2x32xf32>
    %c0_304 = arith.constant 0 : index
    %c0_305 = arith.constant 0 : index
    %374 = vector.load %arg21[%c0_304, %c0_305] : memref<1x32xf32, #tpu.memory_space<vmem>>, vector<1x32xf32>
    %375 = vector.broadcast %374 : vector<1x32xf32> to vector<2x32xf32>
    %376 = arith.addf %373, %375 : vector<2x32xf32>
    %cst_306 = arith.constant 0.000000e+00 : f32
    %377 = vector.broadcast %cst_306 : f32 to vector<2x32xf32>
    %378 = arith.maximumf %376, %377 : vector<2x32xf32>
    %379 = arith.truncf %378 : vector<2x32xf32> to vector<2x32xbf16>
    %c0_307 = arith.constant 0 : index
    %c0_308 = arith.constant 0 : index
    %380 = vector.load %arg22[%c0_307, %c0_308] : memref<32x128xbf16, #tpu.memory_space<vmem>>, vector<32x128xbf16>
    %cst_309 = arith.constant dense<0.000000e+00> : vector<2x128xf32>
    %381 = tpu.matmul %379, %380, %cst_309 {dimension_numbers = #tpu.dot_dimension_numbers<[1], [0], [0], [1], [0, 0, 1, 1], [], []>} : vector<2x32xbf16>, vector<32x128xbf16>, vector<2x128xf32> -> vector<2x128xf32>
    %c0_310 = arith.constant 0 : index
    %c0_311 = arith.constant 0 : index
    %382 = vector.load %arg23[%c0_310, %c0_311] : memref<1x128xf32, #tpu.memory_space<vmem>>, vector<1x128xf32>
    %383 = vector.broadcast %382 : vector<1x128xf32> to vector<2x128xf32>
    %384 = arith.addf %381, %383 : vector<2x128xf32>
    %c0_312 = arith.constant 0 : index
    %c0_313 = arith.constant 0 : index
    %385 = vector.load %arg24[%c0_312, %c0_313] : memref<2x128xf32, #tpu.memory_space<vmem>>, vector<2x128xf32>
    tpu.vector_store %arg24[%c0_312, %c0_313], %384 {strides = array<i32>} : memref<2x128xf32, #tpu.memory_space<vmem>>, vector<2x128xf32>,
    return
  }
}

</mosaic_0001>

<llo_original>
// kernel: hpe_forward.1
$region0: #{hpe_forward.1}
  #allocation0 [shape = 'u32[]', space=smem, size = 0x4, offset = 0x4, fixed_abs, tag = 'smem constant byte address 0x4 - core index']
  #allocation1 [shape = 'u32[144,128]{1,0:T(1,128)}', space=vmem, size = 0x12000, scoped, tag = 'internal scratch']
  %s0 = inlined_call_operand.vmem [shape: bf16[28,36], index: 0, kind: input, shape index: {}]
  %s1 = inlined_call_operand.vmem [shape: bf16[36,64], index: 1, kind: input, shape index: {}]
  %s2 = inlined_call_operand.vmem [shape: f32[1,64], index: 2, kind: input, shape index: {}]
  %s3 = inlined_call_operand.vmem [shape: bf16[9,28,28], index: 3, kind: input, shape index: {}]
  %s4 = inlined_call_operand.vmem [shape: bf16[64,64], index: 4, kind: input, shape index: {}]
  %s5 = inlined_call_operand.vmem [shape: f32[1,64], index: 5, kind: input, shape index: {}]
  %s6 = inlined_call_operand.vmem [shape: f32[9,1,64], index: 6, kind: input, shape index: {}]
  %s7 = inlined_call_operand.vmem [shape: f32[1,64], index: 7, kind: input, shape index: {}]
  %s8 = inlined_call_operand.vmem [shape: bf16[64,64], index: 8, kind: input, shape index: {}]
  %s9 = inlined_call_operand.vmem [shape: f32[1,64], index: 9, kind: input, shape index: {}]
  %s10 = inlined_call_operand.vmem [shape: bf16[64,128], index: 10, kind: input, shape index: {}]
  %s11 = inlined_call_operand.vmem [shape: f32[1,128], index: 11, kind: input, shape index: {}]
  %s12 = inlined_call_operand.vmem [shape: f32[9,1,128], index: 12, kind: input, shape index: {}]
  %s13 = inlined_call_operand.vmem [shape: f32[9,1,128], index: 13, kind: input, shape index: {}]
  %s14 = inlined_call_operand.vmem [shape: f32[1,128], index: 14, kind: input, shape index: {}]
  %s15 = inlined_call_operand.vmem [shape: bf16[64,128], index: 15, kind: input, shape index: {}]
  %s16 = inlined_call_operand.vmem [shape: f32[1,128], index: 16, kind: input, shape index: {}]
  %s17 = inlined_call_operand.vmem [shape: bf16[128,128], index: 17, kind: input, shape index: {}]
  %s18 = inlined_call_operand.vmem [shape: f32[1,128], index: 18, kind: input, shape index: {}]
  %s19 = inlined_call_operand.vmem [shape: bf16[14,2,28], index: 19, kind: input, shape index: {}]
  %s20 = inlined_call_operand.vmem [shape: bf16[14,128,32], index: 20, kind: input, shape index: {}]
  %s21 = inlined_call_operand.vmem [shape: f32[1,32], index: 21, kind: input, shape index: {}]
  %s22 = inlined_call_operand.vmem [shape: bf16[32,128], index: 22, kind: input, shape index: {}]
  %s23 = inlined_call_operand.vmem [shape: f32[1,128], index: 23, kind: input, shape index: {}]
  %s24 = inlined_call_operand.vmem [shape: f32[2,128], index: 24, kind: output, shape index: {}]
  %s25 = sld [smem:[#allocation0]]
  $region106: #{hpe_forward.1} parent=0
    _
  %s27 = ssub.s32 1, %s25
  %s28 = scalar_select 0, %s27, %s25
  // Predicated region
  $region2: #{hpe_forward.1} parent=0 // pred_check
    _
  $region3: #{hpe_forward.1} parent=0 // pred_check_branch
    %30 = sbr.rel (0) target = $region5
  $region4: #{hpe_forward.1} parent=0 // pred_region
    _
  $region5: #{hpe_forward.1} parent=0 // pred_fallthru
    _
  // Predicated region
  $region6: #{hpe_forward.1} parent=0 // pred_check
    _
  $region7: #{hpe_forward.1} parent=0 // pred_check_branch
    %32 = sbr.rel (0) target = $region9
  $region8: #{hpe_forward.1} parent=0 // pred_region
    _
  $region9: #{hpe_forward.1} parent=0 // pred_fallthru
    _
  // Predicated region
  $region10: #{hpe_forward.1} parent=0 // pred_check
    _
  $region11: #{hpe_forward.1} parent=0 // pred_check_branch
    %34 = sbr.rel (0) target = $region13
  $region12: #{hpe_forward.1} parent=0 // pred_region
    _
  $region13: #{hpe_forward.1} parent=0 // pred_fallthru
    _
  // Predicated region
  $region14: #{hpe_forward.1} parent=0 // pred_check
    _
  $region15: #{hpe_forward.1} parent=0 // pred_check_branch
    %36 = sbr.rel (0) target = $region17
  $region16: #{hpe_forward.1} parent=0 // pred_region
    _
  $region17: #{hpe_forward.1} parent=0 // pred_fallthru
    _
  // Predicated region
  $region18: #{hpe_forward.1} parent=0 // pred_check
    _
  $region19: #{hpe_forward.1} parent=0 // pred_check_branch
    %38 = sbr.rel (0) target = $region21
  $region20: #{hpe_forward.1} parent=0 // pred_region
    _
  $region21: #{hpe_forward.1} parent=0 // pred_fallthru
    _
  // Predicated region
  $region22: #{hpe_forward.1} parent=0 // pred_check
    _
  $region23: #{hpe_forward.1} parent=0 // pred_check_branch
    %40 = sbr.rel (0) target = $region25
  $region24: #{hpe_forward.1} parent=0 // pred_region
    _
  $region25: #{hpe_forward.1} parent=0 // pred_fallthru
    _
  // Predicated region
  $region26: #{hpe_forward.1} parent=0 // pred_check
    _
  $region27: #{hpe_forward.1} parent=0 // pred_check_branch
    %42 = sbr.rel (0) target = $region29
  $region28: #{hpe_forward.1} parent=0 // pred_region
    _
  $region29: #{hpe_forward.1} parent=0 // pred_fallthru
    _
  // Predicated region
  $region30: #{hpe_forward.1} parent=0 // pred_check
    _
  $region31: #{hpe_forward.1} parent=0 // pred_check_branch
    %44 = sbr.rel (0) target = $region33
  $region32: #{hpe_forward.1} parent=0 // pred_region
    _
  $region33: #{hpe_forward.1} parent=0 // pred_fallthru
    _
  // Predicated region
  $region34: #{hpe_forward.1} parent=0 // pred_check
    _
  $region35: #{hpe_forward.1} parent=0 // pred_check_branch
    %46 = sbr.rel (0) target = $region37
  $region36: #{hpe_forward.1} parent=0 // pred_region
    _
  $region37: #{hpe_forward.1} parent=0 // pred_fallthru
    _
  // Predicated region
  $region38: #{hpe_forward.1} parent=0 // pred_check
    _
  $region39: #{hpe_forward.1} parent=0 // pred_check_branch
    %48 = sbr.rel (0) target = $region41
  $region40: #{hpe_forward.1} parent=0 // pred_region
    _
  $region41: #{hpe_forward.1} parent=0 // pred_fallthru
    _
  // Predicated region
  $region42: #{hpe_forward.1} parent=0 // pred_check
    _
  $region43: #{hpe_forward.1} parent=0 // pred_check_branch
    %50 = sbr.rel (0) target = $region45
  $region44: #{hpe_forward.1} parent=0 // pred_region
    _
  $region45: #{hpe_forward.1} parent=0 // pred_fallthru
    _
  // Predicated region
  $region46: #{hpe_forward.1} parent=0 // pred_check
    _
  $region47: #{hpe_forward.1} parent=0 // pred_check_branch
    %52 = sbr.rel (0) target = $region49
  $region48: #{hpe_forward.1} parent=0 // pred_region
    _
  $region49: #{hpe_forward.1} parent=0 // pred_fallthru
    _
  // Predicated region
  $region50: #{hpe_forward.1} parent=0 // pred_check
    _
  $region51: #{hpe_forward.1} parent=0 // pred_check_branch
    %54 = sbr.rel (0) target = $region53
  $region52: #{hpe_forward.1} parent=0 // pred_region
    _
  $region53: #{hpe_forward.1} parent=0 // pred_fallthru
    _
  // Predicated region
  $region54: #{hpe_forward.1} parent=0 // pred_check
    _
  $region55: #{hpe_forward.1} parent=0 // pred_check_branch
    %56 = sbr.rel (0) target = $region57
  $region56: #{hpe_forward.1} parent=0 // pred_region
    _
  $region57: #{hpe_forward.1} parent=0 // pred_fallthru
    _
  // Predicated region
  $region58: #{hpe_forward.1} parent=0 // pred_check
    _
  $region59: #{hpe_forward.1} parent=0 // pred_check_branch
    %58 = sbr.rel (0) target = $region61
  $region60: #{hpe_forward.1} parent=0 // pred_region
    _
  $region61: #{hpe_forward.1} parent=0 // pred_fallthru
    _
  // Predicated region
  $region62: #{hpe_forward.1} parent=0 // pred_check
    _
  $region63: #{hpe_forward.1} parent=0 // pred_check_branch
    %60 = sbr.rel (0) target = $region65
  $region64: #{hpe_forward.1} parent=0 // pred_region
    _
  $region65: #{hpe_forward.1} parent=0 // pred_fallthru
    _
  // Predicated region
  $region66: #{hpe_forward.1} parent=0 // pred_check
    _
  $region67: #{hpe_forward.1} parent=0 // pred_check_branch
    %62 = sbr.rel (0) target = $region69
  $region68: #{hpe_forward.1} parent=0 // pred_region
    _
  $region69: #{hpe_forward.1} parent=0 // pred_fallthru
    _
  // Predicated region
  $region70: #{hpe_forward.1} parent=0 // pred_check
    _
  $region71: #{hpe_forward.1} parent=0 // pred_check_branch
    %64 = sbr.rel (0) target = $region73
  $region72: #{hpe_forward.1} parent=0 // pred_region
    _
  $region73: #{hpe_forward.1} parent=0 // pred_fallthru
    _
  // Predicated region
  $region74: #{hpe_forward.1} parent=0 // pred_check
    _
  $region75: #{hpe_forward.1} parent=0 // pred_check_branch
    %66 = sbr.rel (0) target = $region77
  $region76: #{hpe_forward.1} parent=0 // pred_region
    _
  $region77: #{hpe_forward.1} parent=0 // pred_fallthru
    _
  // Predicated region
  $region78: #{hpe_forward.1} parent=0 // pred_check
    _
  $region79: #{hpe_forward.1} parent=0 // pred_check_branch
    %68 = sbr.rel (0) target = $region81
  $region80: #{hpe_forward.1} parent=0 // pred_region
    _
  $region81: #{hpe_forward.1} parent=0 // pred_fallthru
    _
  // Predicated region
  $region82: #{hpe_forward.1} parent=0 // pred_check
    _
  $region83: #{hpe_forward.1} parent=0 // pred_check_branch
    %70 = sbr.rel (0) target = $region85
  $region84: #{hpe_forward.1} parent=0 // pred_region
    _
  $region85: #{hpe_forward.1} parent=0 // pred_fallthru
    _
  // Predicated region
  $region86: #{hpe_forward.1} parent=0 // pred_check
    _
  $region87: #{hpe_forward.1} parent=0 // pred_check_branch
    %72 = sbr.rel (0) target = $region89
  $region88: #{hpe_forward.1} parent=0 // pred_region
    _
  $region89: #{hpe_forward.1} parent=0 // pred_fallthru
    _
  // Predicated region
  $region90: #{hpe_forward.1} parent=0 // pred_check
    _
  $region91: #{hpe_forward.1} parent=0 // pred_check_branch
    %74 = sbr.rel (0) target = $region93
  $region92: #{hpe_forward.1} parent=0 // pred_region
    _
  $region93: #{hpe_forward.1} parent=0 // pred_fallthru
    _
  // Predicated region
  $region94: #{hpe_forward.1} parent=0 // pred_check
    _
  $region95: #{hpe_forward.1} parent=0 // pred_check_branch
    %76 = sbr.rel (0) target = $region97
  $region96: #{hpe_forward.1} parent=0 // pred_region
    _
  $region97: #{hpe_forward.1} parent=0 // pred_fallthru
    _
  %v78 = vld [vmem:[%s0] sm:$0xf]
  %v79 = vld [vmem:[%s0 + $0x4] sm:$0xf]
  %v80 = vld [vmem:[%s0 + $0x8] sm:$0xf]
  %v81 = vld [vmem:[%s0 + $0xc] sm:$0x3]
  %v82 = vld [vmem:[%s1] sm:$0xf]
  %v83 = vld [vmem:[%s1 + $0x4] sm:$0xf]
  %v84 = vld [vmem:[%s1 + $0x8] sm:$0xf]
  %v85 = vld [vmem:[%s1 + $0xc] sm:$0xf]
  %v86 = vld [vmem:[%s1 + $0x10] sm:$0x3]
  %v87 = vld [vmem:[%s2] sm:$0x1]
  %v89 = vlaneseq
  %v90 = vshrl.u32 %v89, 7
  %v91 = vsub.s32 0, %v90
  %v92 = vrot.slane %v87, %v91
  %v98 = vunpack.c.l.b16 %v78
  %v99 = vunpack.c.l.b16 %v79
  %v100 = vunpack.c.l.b16 %v80
  %v101 = vunpack.c.l.b16 %v81
  %v102 = vpack.c.b16 %v99, %v98
  %v103 = vpack.c.b16 %v101, %v100
  %v109 = vunpack.c.l.b16 %v82
  %v110 = vunpack.c.l.b16 %v83
  %v111 = vunpack.c.l.b16 %v84
  %v112 = vunpack.c.l.b16 %v85
  %v113 = vunpack.c.l.b16 %v86
  %v114 = vpack.c.b16 %v110, %v109
  %v115 = vpack.c.b16 %v112, %v111
  %v116 = vpack.c.b16 %v113, %v113
  %vm119 = vcmask 293888
  %v121 = vsel %vm119, %v102, 0
  %v124 = vsel %vm119, %v103, 0
  %vm126 = vcmask 1041408
  %v128 = vsel %vm126, %v116, 0
  %130 = vmatprep.subr.bf16.mxu0 0
  %131 = vmatpush1.bf16.msra.mxu0 %v114
  %132 = vmatprep.subr.bf16.mxu0 0
  %133 = vmatpush1.bf16.msra.mxu0 %v115
  %134 = vmatprep.subr.bf16.mxu0 0
  %135 = vmatpush1.bf16.msra.mxu0 %v128
  %136 = vmatprep.subr.bf16.mxu0 0
  %137 = vmatpush1.bf16.msra.mxu0 0
  %138 = vmatprep.subr.bf16.mxu0 0
  %139 = vmatpush1.bf16.msra.mxu0 0
  %140 = vmatprep.subr.bf16.mxu0 0
  %141 = vmatpush1.bf16.msra.mxu0 0
  %142 = vmatprep.subr.bf16.mxu0 0
  %143 = vmatpush1.bf16.msra.mxu0 0
  %144 = vmatprep.subr.bf16.mxu0 0
  %145 = vmatpush1.bf16.msra.mxu0 0
  %146 = vmatprep.subr.bf16.mxu0 0
  %147 = vmatpush1.bf16.msra.mxu0 0
  %148 = vmatprep.subr.bf16.mxu0 0
  %149 = vmatpush1.bf16.msra.mxu0 0
  %150 = vmatprep.subr.bf16.mxu0 0
  %151 = vmatpush1.bf16.msra.mxu0 0
  %152 = vmatprep.subr.bf16.mxu0 0
  %153 = vmatpush1.bf16.msra.mxu0 0
  %154 = vmatprep.subr.bf16.mxu0 0
  %155 = vmatpush1.bf16.msra.mxu0 0
  %156 = vmatprep.subr.bf16.mxu0 0
  %157 = vmatpush1.bf16.msra.mxu0 0
  %158 = vmatprep.subr.bf16.mxu0 0
  %159 = vmatpush1.bf16.msra.mxu0 0
  %160 = vmatprep.subr.bf16.mxu0 0
  %161 = vmatpush1.bf16.msra.mxu0 0
  %162 = vmatprep.mubr.bf16.mxu0 0
  %163 = vmatmul.mubr.bf16.gmra.mrb[0].mxu0 %v121
  %v164 = vpop.f32.mrb[0].mxu0
  %v165 = vadd.f32 %v92, %v164
  %v166 = vpop.f32.mrb[0].mxu0
  %v167 = vpop.f32.mrb[0].mxu0
  %v168 = vadd.f32 %v92, %v167
  %v169 = vpop.f32.mrb[0].mxu0
  %170 = vmatprep.mubr.bf16.mxu0 0
  %171 = vmatmul.mubr.bf16.gmra.mrb[0].mxu0 %v124
  %v172 = vpop.f32.mrb[0].mxu0
  %v173 = vadd.f32 %v92, %v172
  %v174 = vpop.f32.mrb[0].mxu0
  %v175 = vpop.f32.mrb[0].mxu0
  %v176 = vadd.f32 %v92, %v175
  %v177 = vpop.f32.mrb[0].mxu0
  %178 = vdwg.mxu0
  %v179 = vmax.f32 %v165, 0.0
  %v180 = vmax.f32 %v168, 0.0
  %v181 = vmax.f32 %v173, 0.0
  %v182 = vmax.f32 %v176, 0.0
  %v183 = vld [vmem:[%s4] sm:$0xf]
  %v184 = vld [vmem:[%s4 + $0x4] sm:$0xf]
  %v185 = vld [vmem:[%s4 + $0x8] sm:$0xf]
  %v186 = vld [vmem:[%s4 + $0xc] sm:$0xf]
  %v187 = vld [vmem:[%s4 + $0x10] sm:$0xf]
  %v188 = vld [vmem:[%s4 + $0x14] sm:$0xf]
  %v189 = vld [vmem:[%s4 + $0x18] sm:$0xf]
  %v190 = vld [vmem:[%s4 + $0x1c] sm:$0xf]
  %v191 = vpack.c.bf16 %v180, %v179
  %v192 = vpack.c.bf16 %v182, %v181
  %v193 = vld [vmem:[%s5] sm:$0x1]
  %v195 = vlaneseq
  %v196 = vshrl.u32 %v195, 7
  %v197 = vsub.s32 0, %v196
  %v198 = vrot.slane %v193, %v197
  %v208 = vunpack.c.l.b16 %v183
  %v209 = vunpack.c.l.b16 %v184
  %v210 = vunpack.c.l.b16 %v185
  %v211 = vunpack.c.l.b16 %v186
  %v212 = vunpack.c.l.b16 %v187
  %v213 = vunpack.c.l.b16 %v188
  %v214 = vunpack.c.l.b16 %v189
  %v215 = vunpack.c.l.b16 %v190
  %v216 = vpack.c.b16 %v209, %v208
  %v217 = vpack.c.b16 %v211, %v210
  %v218 = vpack.c.b16 %v213, %v212
  %v219 = vpack.c.b16 %v215, %v214
  %vm224 = vcmask 523264
  %v226 = vsel %vm224, %v191, 0
  %v229 = vsel %vm224, %v192, 0
  %231 = vmatprep.subr.bf16.mxu0 0
  %232 = vmatpush1.bf16.msra.mxu0 %v216
  %233 = vmatprep.subr.bf16.mxu0 0
  %234 = vmatpush1.bf16.msra.mxu0 %v217
  %235 = vmatprep.subr.bf16.mxu0 0
  %236 = vmatpush1.bf16.msra.mxu0 %v218
  %237 = vmatprep.subr.bf16.mxu0 0
  %238 = vmatpush1.bf16.msra.mxu0 %v219
  %239 = vmatprep.subr.bf16.mxu0 0
  %240 = vmatpush1.bf16.msra.mxu0 0
  %241 = vmatprep.subr.bf16.mxu0 0
  %242 = vmatpush1.bf16.msra.mxu0 0
  %243 = vmatprep.subr.bf16.mxu0 0
  %244 = vmatpush1.bf16.msra.mxu0 0
  %245 = vmatprep.subr.bf16.mxu0 0
  %246 = vmatpush1.bf16.msra.mxu0 0
  %247 = vmatprep.subr.bf16.mxu0 0
  %248 = vmatpush1.bf16.msra.mxu0 0
  %249 = vmatprep.subr.bf16.mxu0 0
  %250 = vmatpush1.bf16.msra.mxu0 0
  %251 = vmatprep.subr.bf16.mxu0 0
  %252 = vmatpush1.bf16.msra.mxu0 0
  %253 = vmatprep.subr.bf16.mxu0 0
  %254 = vmatpush1.bf16.msra.mxu0 0
  %255 = vmatprep.subr.bf16.mxu0 0
  %256 = vmatpush1.bf16.msra.mxu0 0
  %257 = vmatprep.subr.bf16.mxu0 0
  %258 = vmatpush1.bf16.msra.mxu0 0
  %259 = vmatprep.subr.bf16.mxu0 0
  %260 = vmatpush1.bf16.msra.mxu0 0
  %261 = vmatprep.subr.bf16.mxu0 0
  %262 = vmatpush1.bf16.msra.mxu0 0
  %263 = vmatprep.mubr.bf16.mxu0 0
  %264 = vmatmul.mubr.bf16.gmra.mrb[0].mxu0 %v226
  %v265 = vpop.f32.mrb[0].mxu0
  %v266 = vadd.f32 %v198, %v265
  %v267 = vpop.f32.mrb[0].mxu0
  %v268 = vpop.f32.mrb[0].mxu0
  %v269 = vadd.f32 %v198, %v268
  %v270 = vpop.f32.mrb[0].mxu0
  %271 = vmatprep.mubr.bf16.mxu0 0
  %272 = vmatmul.mubr.bf16.gmra.mrb[0].mxu0 %v229
  %v273 = vpop.f32.mrb[0].mxu0
  %v274 = vadd.f32 %v198, %v273
  %v275 = vpop.f32.mrb[0].mxu0
  %v276 = vpop.f32.mrb[0].mxu0
  %v277 = vadd.f32 %v198, %v276
  %v278 = vpop.f32.mrb[0].mxu0
  %279 = vdwg.mxu0
  %v280 = vmax.f32 %v266, 0.0
  %v281 = vmax.f32 %v269, 0.0
  %v282 = vmax.f32 %v274, 0.0
  %v283 = vmax.f32 %v277, 0.0
  %v284 = vpack.c.bf16 %v281, %v280
  %v285 = vpack.c.bf16 %v283, %v282
  %v286 = vld [vmem:[%s3] sm:$0xf]
  %v287 = vld [vmem:[%s3 + $0x4] sm:$0xf]
  %v288 = vld [vmem:[%s3 + $0x8] sm:$0xf]
  %v289 = vld [vmem:[%s3 + $0xc] sm:$0x3]
  %v294 = vunpack.c.l.b16 %v286
  %v295 = vunpack.c.l.b16 %v287
  %v296 = vunpack.c.l.b16 %v288
  %v297 = vunpack.c.l.b16 %v289
  %v298 = vpack.c.b16 %v295, %v294
  %v299 = vpack.c.b16 %v297, %v296
  %vm300 = vcmask 228352
  %v302 = vsel %vm300, %v298, 0
  %v305 = vsel %vm300, %v299, 0
  %vm307 = vcmask 1045504
  %v309 = vsel %vm307, %v285, 0
  %311 = vmatprep.subr.bf16.mxu0 0
  %312 = vmatpush1.bf16.msra.mxu0 %v284
  %313 = vmatprep.subr.bf16.mxu0 0
  %314 = vmatpush1.bf16.msra.mxu0 %v309
  %315 = vmatprep.subr.bf16.mxu0 0
  %316 = vmatpush1.bf16.msra.mxu0 0
  %317 = vmatprep.subr.bf16.mxu0 0
  %318 = vmatpush1.bf16.msra.mxu0 0
  %319 = vmatprep.subr.bf16.mxu0 0
  %320 = vmatpush1.bf16.msra.mxu0 0
  %321 = vmatprep.subr.bf16.mxu0 0
  %322 = vmatpush1.bf16.msra.mxu0 0
  %323 = vmatprep.subr.bf16.mxu0 0
  %324 = vmatpush1.bf16.msra.mxu0 0
  %325 = vmatprep.subr.bf16.mxu0 0
  %326 = vmatpush1.bf16.msra.mxu0 0
  %327 = vmatprep.subr.bf16.mxu0 0
  %328 = vmatpush1.bf16.msra.mxu0 0
  %329 = vmatprep.subr.bf16.mxu0 0
  %330 = vmatpush1.bf16.msra.mxu0 0
  %331 = vmatprep.subr.bf16.mxu0 0
  %332 = vmatpush1.bf16.msra.mxu0 0
  %333 = vmatprep.subr.bf16.mxu0 0
  %334 = vmatpush1.bf16.msra.mxu0 0
  %335 = vmatprep.subr.bf16.mxu0 0
  %336 = vmatpush1.bf16.msra.mxu0 0
  %337 = vmatprep.subr.bf16.mxu0 0
  %338 = vmatpush1.bf16.msra.mxu0 0
  %339 = vmatprep.subr.bf16.mxu0 0
  %340 = vmatpush1.bf16.msra.mxu0 0
  %341 = vmatprep.subr.bf16.mxu0 0
  %342 = vmatpush1.bf16.msra.mxu0 0
  %343 = vmatprep.mubr.bf16.mxu0 0
  %344 = vmatmul.mubr.bf16.gmra.mrb[0].mxu0 %v302
  %v345 = vpop.f32.mrb[0].mxu0
  %v346 = vadd.f32 0.0, %v345
  %v347 = vpop.f32.mrb[0].mxu0
  %v348 = vpop.f32.mrb[0].mxu0
  %v349 = vadd.f32 0.0, %v348
  %v350 = vpop.f32.mrb[0].mxu0
  %351 = vmatprep.mubr.bf16.mxu0 0
  %352 = vmatmul.mubr.bf16.gmra.mrb[0].mxu0 %v305
  %v353 = vpop.f32.mrb[0].mxu0
  %v354 = vadd.f32 0.0, %v353
  %v355 = vpop.f32.mrb[0].mxu0
  %v356 = vpop.f32.mrb[0].mxu0
  %v357 = vadd.f32 0.0, %v356
  %v358 = vpop.f32.mrb[0].mxu0
  %359 = vdwg.mxu0
  %v360 = vld [vmem:[%s6] sm:$0x1]
  %v362 = vlaneseq
  %v363 = vshrl.u32 %v362, 7
  %v364 = vsub.s32 0, %v363
  %v365 = vrot.slane %v360, %v364
  %v367 = vmul.f32 %v346, %v365
  %v368 = vmul.f32 %v349, %v365
  %v369 = vmul.f32 %v354, %v365
  %v370 = vmul.f32 %v357, %v365
  %v371 = vadd.f32 %v367, 0.0
  %v372 = vadd.f32 %v368, 0.0
  %v373 = vadd.f32 %v369, 0.0
  %v374 = vadd.f32 %v370, 0.0
  %s375 = scalar_lea.vmem %s3, 16
  %v376 = vld [vmem:[%s375] sm:$0xf]
  %v377 = vld [vmem:[%s375 + $0x4] sm:$0xf]
  %v378 = vld [vmem:[%s375 + $0x8] sm:$0xf]
  %v379 = vld [vmem:[%s375 + $0xc] sm:$0x3]
  %v384 = vunpack.c.l.b16 %v376
  %v385 = vunpack.c.l.b16 %v377
  %v386 = vunpack.c.l.b16 %v378
  %v387 = vunpack.c.l.b16 %v379
  %v388 = vpack.c.b16 %v385, %v384
  %v389 = vpack.c.b16 %v387, %v386
  %v391 = vsel %vm300, %v388, 0
  %v394 = vsel %vm300, %v389, 0
  %396 = vmatprep.subr.bf16.mxu0 0
  %397 = vmatpush1.bf16.msra.mxu0 %v284
  %398 = vmatprep.subr.bf16.mxu0 0
  %399 = vmatpush1.bf16.msra.mxu0 %v309
  %400 = vmatprep.subr.bf16.mxu0 0
  %401 = vmatpush1.bf16.msra.mxu0 0
  %402 = vmatprep.subr.bf16.mxu0 0
  %403 = vmatpush1.bf16.msra.mxu0 0
  %404 = vmatprep.subr.bf16.mxu0 0
  %405 = vmatpush1.bf16.msra.mxu0 0
  %406 = vmatprep.subr.bf16.mxu0 0
  %407 = vmatpush1.bf16.msra.mxu0 0
  %408 = vmatprep.subr.bf16.mxu0 0
  %409 = vmatpush1.bf16.msra.mxu0 0
  %410 = vmatprep.subr.bf16.mxu0 0
  %411 = vmatpush1.bf16.msra.mxu0 0
  %412 = vmatprep.subr.bf16.mxu0 0
  %413 = vmatpush1.bf16.msra.mxu0 0
  %414 = vmatprep.subr.bf16.mxu0 0
  %415 = vmatpush1.bf16.msra.mxu0 0
  %416 = vmatprep.subr.bf16.mxu0 0
  %417 = vmatpush1.bf16.msra.mxu0 0
  %418 = vmatprep.subr.bf16.mxu0 0
  %419 = vmatpush1.bf16.msra.mxu0 0
  %420 = vmatprep.subr.bf16.mxu0 0
  %421 = vmatpush1.bf16.msra.mxu0 0
  %422 = vmatprep.subr.bf16.mxu0 0
  %423 = vmatpush1.bf16.msra.mxu0 0
  %424 = vmatprep.subr.bf16.mxu0 0
  %425 = vmatpush1.bf16.msra.mxu0 0
  %426 = vmatprep.subr.bf16.mxu0 0
  %427 = vmatpush1.bf16.msra.mxu0 0
  %428 = vmatprep.mubr.bf16.mxu0 0
  %429 = vmatmul.mubr.bf16.gmra.mrb[0].mxu0 %v391
  %v430 = vpop.f32.mrb[0].mxu0
  %v431 = vadd.f32 0.0, %v430
  %v432 = vpop.f32.mrb[0].mxu0
  %v433 = vpop.f32.mrb[0].mxu0
  %v434 = vadd.f32 0.0, %v433
  %v435 = vpop.f32.mrb[0].mxu0
  %436 = vmatprep.mubr.bf16.mxu0 0
  %437 = vmatmul.mubr.bf16.gmra.mrb[0].mxu0 %v394
  %v438 = vpop.f32.mrb[0].mxu0
  %v439 = vadd.f32 0.0, %v438
  %v440 = vpop.f32.mrb[0].mxu0
  %v441 = vpop.f32.mrb[0].mxu0
  %v442 = vadd.f32 0.0, %v441
  %v443 = vpop.f32.mrb[0].mxu0
  %444 = vdwg.mxu0
  %s445 = scalar_lea.vmem %s6, 1
  %v446 = vld [vmem:[%s445] sm:$0x1]
  %v448 = vlaneseq
  %v449 = vshrl.u32 %v448, 7
  %v450 = vsub.s32 0, %v449
  %v451 = vrot.slane %v446, %v450
  %v453 = vmul.f32 %v431, %v451
  %v454 = vmul.f32 %v434, %v451
  %v455 = vmul.f32 %v439, %v451
  %v456 = vmul.f32 %v442, %v451
  %v457 = vadd.f32 %v371, %v453
  %v458 = vadd.f32 %v372, %v454
  %v459 = vadd.f32 %v373, %v455
  %v460 = vadd.f32 %v374, %v456
  %s461 = scalar_lea.vmem %s3, 32
  %v462 = vld [vmem:[%s461] sm:$0xf]
  %v463 = vld [vmem:[%s461 + $0x4] sm:$0xf]
  %v464 = vld [vmem:[%s461 + $0x8] sm:$0xf]
  %v465 = vld [vmem:[%s461 + $0xc] sm:$0x3]
  %v470 = vunpack.c.l.b16 %v462
  %v471 = vunpack.c.l.b16 %v463
  %v472 = vunpack.c.l.b16 %v464
  %v473 = vunpack.c.l.b16 %v465
  %v474 = vpack.c.b16 %v471, %v470
  %v475 = vpack.c.b16 %v473, %v472
  %v477 = vsel %vm300, %v474, 0
  %v480 = vsel %vm300, %v475, 0
  %482 = vmatprep.subr.bf16.mxu0 0
  %483 = vmatpush1.bf16.msra.mxu0 %v284
  %484 = vmatprep.subr.bf16.mxu0 0
  %485 = vmatpush1.bf16.msra.mxu0 %v309
  %486 = vmatprep.subr.bf16.mxu0 0
  %487 = vmatpush1.bf16.msra.mxu0 0
  %488 = vmatprep.subr.bf16.mxu0 0
  %489 = vmatpush1.bf16.msra.mxu0 0
  %490 = vmatprep.subr.bf16.mxu0 0
  %491 = vmatpush1.bf16.msra.mxu0 0
  %492 = vmatprep.subr.bf16.mxu0 0
  %493 = vmatpush1.bf16.msra.mxu0 0
  %494 = vmatprep.subr.bf16.mxu0 0
  %495 = vmatpush1.bf16.msra.mxu0 0
  %496 = vmatprep.subr.bf16.mxu0 0
  %497 = vmatpush1.bf16.msra.mxu0 0
  %498 = vmatprep.subr.bf16.mxu0 0
  %499 = vmatpush1.bf16.msra.mxu0 0
  %500 = vmatprep.subr.bf16.mxu0 0
  %501 = vmatpush1.bf16.msra.mxu0 0
  %502 = vmatprep.subr.bf16.mxu0 0
  %503 = vmatpush1.bf16.msra.mxu0 0
  %504 = vmatprep.subr.bf16.mxu0 0
  %505 = vmatpush1.bf16.msra.mxu0 0
  %506 = vmatprep.subr.bf16.mxu0 0
  %507 = vmatpush1.bf16.msra.mxu0 0
  %508 = vmatprep.subr.bf16.mxu0 0
  %509 = vmatpush1.bf16.msra.mxu0 0
  %510 = vmatprep.subr.bf16.mxu0 0
  %511 = vmatpush1.bf16.msra.mxu0 0
  %512 = vmatprep.subr.bf16.mxu0 0
  %513 = vmatpush1.bf16.msra.mxu0 0
  %514 = vmatprep.mubr.bf16.mxu0 0
  %515 = vmatmul.mubr.bf16.gmra.mrb[0].mxu0 %v477
  %v516 = vpop.f32.mrb[0].mxu0
  %v517 = vadd.f32 0.0, %v516
  %v518 = vpop.f32.mrb[0].mxu0
  %v519 = vpop.f32.mrb[0].mxu0
  %v520 = vadd.f32 0.0, %v519
  %v521 = vpop.f32.mrb[0].mxu0
  %522 = vmatprep.mubr.bf16.mxu0 0
  %523 = vmatmul.mubr.bf16.gmra.mrb[0].mxu0 %v480
  %v524 = vpop.f32.mrb[0].mxu0
  %v525 = vadd.f32 0.0, %v524
  %v526 = vpop.f32.mrb[0].mxu0
  %v527 = vpop.f32.mrb[0].mxu0
  %v528 = vadd.f32 0.0, %v527
  %v529 = vpop.f32.mrb[0].mxu0
  %530 = vdwg.mxu0
  %s531 = scalar_lea.vmem %s6, 2
  %v532 = vld [vmem:[%s531] sm:$0x1]
  %v534 = vlaneseq
  %v535 = vshrl.u32 %v534, 7
  %v536 = vsub.s32 0, %v535
  %v537 = vrot.slane %v532, %v536
  %v539 = vmul.f32 %v517, %v537
  %v540 = vmul.f32 %v520, %v537
  %v541 = vmul.f32 %v525, %v537
  %v542 = vmul.f32 %v528, %v537
  %v543 = vadd.f32 %v457, %v539
  %v544 = vadd.f32 %v458, %v540
  %v545 = vadd.f32 %v459, %v541
  %v546 = vadd.f32 %v460, %v542
  %s547 = scalar_lea.vmem %s3, 48
  %v548 = vld [vmem:[%s547] sm:$0xf]
  %v549 = vld [vmem:[%s547 + $0x4] sm:$0xf]
  %v550 = vld [vmem:[%s547 + $0x8] sm:$0xf]
  %v551 = vld [vmem:[%s547 + $0xc] sm:$0x3]
  %v556 = vunpack.c.l.b16 %v548
  %v557 = vunpack.c.l.b16 %v549
  %v558 = vunpack.c.l.b16 %v550
  %v559 = vunpack.c.l.b16 %v551
  %v560 = vpack.c.b16 %v557, %v556
  %v561 = vpack.c.b16 %v559, %v558
  %v563 = vsel %vm300, %v560, 0
  %v566 = vsel %vm300, %v561, 0
  %568 = vmatprep.subr.bf16.mxu0 0
  %569 = vmatpush1.bf16.msra.mxu0 %v284
  %570 = vmatprep.subr.bf16.mxu0 0
  %571 = vmatpush1.bf16.msra.mxu0 %v309
  %572 = vmatprep.subr.bf16.mxu0 0
  %573 = vmatpush1.bf16.msra.mxu0 0
  %574 = vmatprep.subr.bf16.mxu0 0
  %575 = vmatpush1.bf16.msra.mxu0 0
  %576 = vmatprep.subr.bf16.mxu0 0
  %577 = vmatpush1.bf16.msra.mxu0 0
  %578 = vmatprep.subr.bf16.mxu0 0
  %579 = vmatpush1.bf16.msra.mxu0 0
  %580 = vmatprep.subr.bf16.mxu0 0
  %581 = vmatpush1.bf16.msra.mxu0 0
  %582 = vmatprep.subr.bf16.mxu0 0
  %583 = vmatpush1.bf16.msra.mxu0 0
  %584 = vmatprep.subr.bf16.mxu0 0
  %585 = vmatpush1.bf16.msra.mxu0 0
  %586 = vmatprep.subr.bf16.mxu0 0
  %587 = vmatpush1.bf16.msra.mxu0 0
  %588 = vmatprep.subr.bf16.mxu0 0
  %589 = vmatpush1.bf16.msra.mxu0 0
  %590 = vmatprep.subr.bf16.mxu0 0
  %591 = vmatpush1.bf16.msra.mxu0 0
  %592 = vmatprep.subr.bf16.mxu0 0
  %593 = vmatpush1.bf16.msra.mxu0 0
  %594 = vmatprep.subr.bf16.mxu0 0
  %595 = vmatpush1.bf16.msra.mxu0 0
  %596 = vmatprep.subr.bf16.mxu0 0
  %597 = vmatpush1.bf16.msra.mxu0 0
  %598 = vmatprep.subr.bf16.mxu0 0
  %599 = vmatpush1.bf16.msra.mxu0 0
  %600 = vmatprep.mubr.bf16.mxu0 0
  %601 = vmatmul.mubr.bf16.gmra.mrb[0].mxu0 %v563
  %v602 = vpop.f32.mrb[0].mxu0
  %v603 = vadd.f32 0.0, %v602
  %v604 = vpop.f32.mrb[0].mxu0
  %v605 = vpop.f32.mrb[0].mxu0
  %v606 = vadd.f32 0.0, %v605
  %v607 = vpop.f32.mrb[0].mxu0
  %608 = vmatprep.mubr.bf16.mxu0 0
  %609 = vmatmul.mubr.bf16.gmra.mrb[0].mxu0 %v566
  %v610 = vpop.f32.mrb[0].mxu0
  %v611 = vadd.f32 0.0, %v610
  %v612 = vpop.f32.mrb[0].mxu0
  %v613 = vpop.f32.mrb[0].mxu0
  %v614 = vadd.f32 0.0, %v613
  %v615 = vpop.f32.mrb[0].mxu0
  %616 = vdwg.mxu0
  %s617 = scalar_lea.vmem %s6, 3
  %v618 = vld [vmem:[%s617] sm:$0x1]
  %v620 = vlaneseq
  %v621 = vshrl.u32 %v620, 7
  %v622 = vsub.s32 0, %v621
  %v623 = vrot.slane %v618, %v622
  %v625 = vmul.f32 %v603, %v623
  %v626 = vmul.f32 %v606, %v623
  %v627 = vmul.f32 %v611, %v623
  %v628 = vmul.f32 %v614, %v623
  %v629 = vadd.f32 %v543, %v625
  %v630 = vadd.f32 %v544, %v626
  %v631 = vadd.f32 %v545, %v627
  %v632 = vadd.f32 %v546, %v628
  %s633 = scalar_lea.vmem %s3, 64
  %v634 = vld [vmem:[%s633] sm:$0xf]
  %v635 = vld [vmem:[%s633 + $0x4] sm:$0xf]
  %v636 = vld [vmem:[%s633 + $0x8] sm:$0xf]
  %v637 = vld [vmem:[%s633 + $0xc] sm:$0x3]
  %v642 = vunpack.c.l.b16 %v634
  %v643 = vunpack.c.l.b16 %v635
  %v644 = vunpack.c.l.b16 %v636
  %v645 = vunpack.c.l.b16 %v637
  %v646 = vpack.c.b16 %v643, %v642
  %v647 = vpack.c.b16 %v645, %v644
  %v649 = vsel %vm300, %v646, 0
  %v652 = vsel %vm300, %v647, 0
  %654 = vmatprep.subr.bf16.mxu0 0
  %655 = vmatpush1.bf16.msra.mxu0 %v284
  %656 = vmatprep.subr.bf16.mxu0 0
  %657 = vmatpush1.bf16.msra.mxu0 %v309
  %658 = vmatprep.subr.bf16.mxu0 0
  %659 = vmatpush1.bf16.msra.mxu0 0
  %660 = vmatprep.subr.bf16.mxu0 0
  %661 = vmatpush1.bf16.msra.mxu0 0
  %662 = vmatprep.subr.bf16.mxu0 0
  %663 = vmatpush1.bf16.msra.mxu0 0
  %664 = vmatprep.subr.bf16.mxu0 0
  %665 = vmatpush1.bf16.msra.mxu0 0
  %666 = vmatprep.subr.bf16.mxu0 0
  %667 = vmatpush1.bf16.msra.mxu0 0
  %668 = vmatprep.subr.bf16.mxu0 0
  %669 = vmatpush1.bf16.msra.mxu0 0
  %670 = vmatprep.subr.bf16.mxu0 0
  %671 = vmatpush1.bf16.msra.mxu0 0
  %672 = vmatprep.subr.bf16.mxu0 0
  %673 = vmatpush1.bf16.msra.mxu0 0
  %674 = vmatprep.subr.bf16.mxu0 0
  %675 = vmatpush1.bf16.msra.mxu0 0
  %676 = vmatprep.subr.bf16.mxu0 0
  %677 = vmatpush1.bf16.msra.mxu0 0
  %678 = vmatprep.subr.bf16.mxu0 0
  %679 = vmatpush1.bf16.msra.mxu0 0
  %680 = vmatprep.subr.bf16.mxu0 0
  %681 = vmatpush1.bf16.msra.mxu0 0
  %682 = vmatprep.subr.bf16.mxu0 0
  %683 = vmatpush1.bf16.msra.mxu0 0
  %684 = vmatprep.subr.bf16.mxu0 0
  %685 = vmatpush1.bf16.msra.mxu0 0
  %686 = vmatprep.mubr.bf16.mxu0 0
  %687 = vmatmul.mubr.bf16.gmra.mrb[0].mxu0 %v649
  %v688 = vpop.f32.mrb[0].mxu0
  %v689 = vadd.f32 0.0, %v688
  %v690 = vpop.f32.mrb[0].mxu0
  %v691 = vpop.f32.mrb[0].mxu0
  %v692 = vadd.f32 0.0, %v691
  %v693 = vpop.f32.mrb[0].mxu0
  %694 = vmatprep.mubr.bf16.mxu0 0
  %695 = vmatmul.mubr.bf16.gmra.mrb[0].mxu0 %v652
  %v696 = vpop.f32.mrb[0].mxu0
  %v697 = vadd.f32 0.0, %v696
  %v698 = vpop.f32.mrb[0].mxu0
  %v699 = vpop.f32.mrb[0].mxu0
  %v700 = vadd.f32 0.0, %v699
  %v701 = vpop.f32.mrb[0].mxu0
  %702 = vdwg.mxu0
  %s703 = scalar_lea.vmem %s6, 4
  %v704 = vld [vmem:[%s703] sm:$0x1]
  %v706 = vlaneseq
  %v707 = vshrl.u32 %v706, 7
  %v708 = vsub.s32 0, %v707
  %v709 = vrot.slane %v704, %v708
  %v711 = vmul.f32 %v689, %v709
  %v712 = vmul.f32 %v692, %v709
  %v713 = vmul.f32 %v697, %v709
  %v714 = vmul.f32 %v700, %v709
  %v715 = vadd.f32 %v629, %v711
  %v716 = vadd.f32 %v630, %v712
  %v717 = vadd.f32 %v631, %v713
  %v718 = vadd.f32 %v632, %v714
  %s719 = scalar_lea.vmem %s3, 80
  %v720 = vld [vmem:[%s719] sm:$0xf]
  %v721 = vld [vmem:[%s719 + $0x4] sm:$0xf]
  %v722 = vld [vmem:[%s719 + $0x8] sm:$0xf]
  %v723 = vld [vmem:[%s719 + $0xc] sm:$0x3]
  %v728 = vunpack.c.l.b16 %v720
  %v729 = vunpack.c.l.b16 %v721
  %v730 = vunpack.c.l.b16 %v722
  %v731 = vunpack.c.l.b16 %v723
  %v732 = vpack.c.b16 %v729, %v728
  %v733 = vpack.c.b16 %v731, %v730
  %v735 = vsel %vm300, %v732, 0
  %v738 = vsel %vm300, %v733, 0
  %740 = vmatprep.subr.bf16.mxu0 0
  %741 = vmatpush1.bf16.msra.mxu0 %v284
  %742 = vmatprep.subr.bf16.mxu0 0
  %743 = vmatpush1.bf16.msra.mxu0 %v309
  %744 = vmatprep.subr.bf16.mxu0 0
  %745 = vmatpush1.bf16.msra.mxu0 0
  %746 = vmatprep.subr.bf16.mxu0 0
  %747 = vmatpush1.bf16.msra.mxu0 0
  %748 = vmatprep.subr.bf16.mxu0 0
  %749 = vmatpush1.bf16.msra.mxu0 0
  %750 = vmatprep.subr.bf16.mxu0 0
  %751 = vmatpush1.bf16.msra.mxu0 0
  %752 = vmatprep.subr.bf16.mxu0 0
  %753 = vmatpush1.bf16.msra.mxu0 0
  %754 = vmatprep.subr.bf16.mxu0 0
  %755 = vmatpush1.bf16.msra.mxu0 0
  %756 = vmatprep.subr.bf16.mxu0 0
  %757 = vmatpush1.bf16.msra.mxu0 0
  %758 = vmatprep.subr.bf16.mxu0 0
  %759 = vmatpush1.bf16.msra.mxu0 0
  %760 = vmatprep.subr.bf16.mxu0 0
  %761 = vmatpush1.bf16.msra.mxu0 0
  %762 = vmatprep.subr.bf16.mxu0 0
  %763 = vmatpush1.bf16.msra.mxu0 0
  %764 = vmatprep.subr.bf16.mxu0 0
  %765 = vmatpush1.bf16.msra.mxu0 0
  %766 = vmatprep.subr.bf16.mxu0 0
  %767 = vmatpush1.bf16.msra.mxu0 0
  %768 = vmatprep.subr.bf16.mxu0 0
  %769 = vmatpush1.bf16.msra.mxu0 0
  %770 = vmatprep.subr.bf16.mxu0 0
  %771 = vmatpush1.bf16.msra.mxu0 0
  %772 = vmatprep.mubr.bf16.mxu0 0
  %773 = vmatmul.mubr.bf16.gmra.mrb[0].mxu0 %v735
  %v774 = vpop.f32.mrb[0].mxu0
  %v775 = vadd.f32 0.0, %v774
  %v776 = vpop.f32.mrb[0].mxu0
  %v777 = vpop.f32.mrb[0].mxu0
  %v778 = vadd.f32 0.0, %v777
  %v779 = vpop.f32.mrb[0].mxu0
  %780 = vmatprep.mubr.bf16.mxu0 0
  %781 = vmatmul.mubr.bf16.gmra.mrb[0].mxu0 %v738
  %v782 = vpop.f32.mrb[0].mxu0
  %v783 = vadd.f32 0.0, %v782
  %v784 = vpop.f32.mrb[0].mxu0
  %v785 = vpop.f32.mrb[0].mxu0
  %v786 = vadd.f32 0.0, %v785
  %v787 = vpop.f32.mrb[0].mxu0
  %788 = vdwg.mxu0
  %s789 = scalar_lea.vmem %s6, 5
  %v790 = vld [vmem:[%s789] sm:$0x1]
  %v792 = vlaneseq
  %v793 = vshrl.u32 %v792, 7
  %v794 = vsub.s32 0, %v793
  %v795 = vrot.slane %v790, %v794
  %v797 = vmul.f32 %v775, %v795
  %v798 = vmul.f32 %v778, %v795
  %v799 = vmul.f32 %v783, %v795
  %v800 = vmul.f32 %v786, %v795
  %v801 = vadd.f32 %v715, %v797
  %v802 = vadd.f32 %v716, %v798
  %v803 = vadd.f32 %v717, %v799
  %v804 = vadd.f32 %v718, %v800
  %s805 = scalar_lea.vmem %s3, 96
  %v806 = vld [vmem:[%s805] sm:$0xf]
  %v807 = vld [vmem:[%s805 + $0x4] sm:$0xf]
  %v808 = vld [vmem:[%s805 + $0x8] sm:$0xf]
  %v809 = vld [vmem:[%s805 + $0xc] sm:$0x3]
  %v814 = vunpack.c.l.b16 %v806
  %v815 = vunpack.c.l.b16 %v807
  %v816 = vunpack.c.l.b16 %v808
  %v817 = vunpack.c.l.b16 %v809
  %v818 = vpack.c.b16 %v815, %v814
  %v819 = vpack.c.b16 %v817, %v816
  %v821 = vsel %vm300, %v818, 0
  %v824 = vsel %vm300, %v819, 0
  %826 = vmatprep.subr.bf16.mxu0 0
  %827 = vmatpush1.bf16.msra.mxu0 %v284
  %828 = vmatprep.subr.bf16.mxu0 0
  %829 = vmatpush1.bf16.msra.mxu0 %v309
  %830 = vmatprep.subr.bf16.mxu0 0
  %831 = vmatpush1.bf16.msra.mxu0 0
  %832 = vmatprep.subr.bf16.mxu0 0
  %833 = vmatpush1.bf16.msra.mxu0 0
  %834 = vmatprep.subr.bf16.mxu0 0
  %835 = vmatpush1.bf16.msra.mxu0 0
  %836 = vmatprep.subr.bf16.mxu0 0
  %837 = vmatpush1.bf16.msra.mxu0 0
  %838 = vmatprep.subr.bf16.mxu0 0
  %839 = vmatpush1.bf16.msra.mxu0 0
  %840 = vmatprep.subr.bf16.mxu0 0
  %841 = vmatpush1.bf16.msra.mxu0 0
  %842 = vmatprep.subr.bf16.mxu0 0
  %843 = vmatpush1.bf16.msra.mxu0 0
  %844 = vmatprep.subr.bf16.mxu0 0
  %845 = vmatpush1.bf16.msra.mxu0 0
  %846 = vmatprep.subr.bf16.mxu0 0
  %847 = vmatpush1.bf16.msra.mxu0 0
  %848 = vmatprep.subr.bf16.mxu0 0
  %849 = vmatpush1.bf16.msra.mxu0 0
  %850 = vmatprep.subr.bf16.mxu0 0
  %851 = vmatpush1.bf16.msra.mxu0 0
  %852 = vmatprep.subr.bf16.mxu0 0
  %853 = vmatpush1.bf16.msra.mxu0 0
  %854 = vmatprep.subr.bf16.mxu0 0
  %855 = vmatpush1.bf16.msra.mxu0 0
  %856 = vmatprep.subr.bf16.mxu0 0
  %857 = vmatpush1.bf16.msra.mxu0 0
  %858 = vmatprep.mubr.bf16.mxu0 0
  %859 = vmatmul.mubr.bf16.gmra.mrb[0].mxu0 %v821
  %v860 = vpop.f32.mrb[0].mxu0
  %v861 = vadd.f32 0.0, %v860
  %v862 = vpop.f32.mrb[0].mxu0
  %v863 = vpop.f32.mrb[0].mxu0
  %v864 = vadd.f32 0.0, %v863
  %v865 = vpop.f32.mrb[0].mxu0
  %866 = vmatprep.mubr.bf16.mxu0 0
  %867 = vmatmul.mubr.bf16.gmra.mrb[0].mxu0 %v824
  %v868 = vpop.f32.mrb[0].mxu0
  %v869 = vadd.f32 0.0, %v868
  %v870 = vpop.f32.mrb[0].mxu0
  %v871 = vpop.f32.mrb[0].mxu0
  %v872 = vadd.f32 0.0, %v871
  %v873 = vpop.f32.mrb[0].mxu0
  %874 = vdwg.mxu0
  %s875 = scalar_lea.vmem %s6, 6
  %v876 = vld [vmem:[%s875] sm:$0x1]
  %v878 = vlaneseq
  %v879 = vshrl.u32 %v878, 7
  %v880 = vsub.s32 0, %v879
  %v881 = vrot.slane %v876, %v880
  %v883 = vmul.f32 %v861, %v881
  %v884 = vmul.f32 %v864, %v881
  %v885 = vmul.f32 %v869, %v881
  %v886 = vmul.f32 %v872, %v881
  %v887 = vadd.f32 %v801, %v883
  %v888 = vadd.f32 %v802, %v884
  %v889 = vadd.f32 %v803, %v885
  %v890 = vadd.f32 %v804, %v886
  %s891 = scalar_lea.vmem %s3, 112
  %v892 = vld [vmem:[%s891] sm:$0xf]
  %v893 = vld [vmem:[%s891 + $0x4] sm:$0xf]
  %v894 = vld [vmem:[%s891 + $0x8] sm:$0xf]
  %v895 = vld [vmem:[%s891 + $0xc] sm:$0x3]
  %v900 = vunpack.c.l.b16 %v892
  %v901 = vunpack.c.l.b16 %v893
  %v902 = vunpack.c.l.b16 %v894
  %v903 = vunpack.c.l.b16 %v895
  %v904 = vpack.c.b16 %v901, %v900
  %v905 = vpack.c.b16 %v903, %v902
  %v907 = vsel %vm300, %v904, 0
  %v910 = vsel %vm300, %v905, 0
  %912 = vmatprep.subr.bf16.mxu0 0
  %913 = vmatpush1.bf16.msra.mxu0 %v284
  %914 = vmatprep.subr.bf16.mxu0 0
  %915 = vmatpush1.bf16.msra.mxu0 %v309
  %916 = vmatprep.subr.bf16.mxu0 0
  %917 = vmatpush1.bf16.msra.mxu0 0
  %918 = vmatprep.subr.bf16.mxu0 0
  %919 = vmatpush1.bf16.msra.mxu0 0
  %920 = vmatprep.subr.bf16.mxu0 0
  %921 = vmatpush1.bf16.msra.mxu0 0
  %922 = vmatprep.subr.bf16.mxu0 0
  %923 = vmatpush1.bf16.msra.mxu0 0
  %924 = vmatprep.subr.bf16.mxu0 0
  %925 = vmatpush1.bf16.msra.mxu0 0
  %926 = vmatprep.subr.bf16.mxu0 0
  %927 = vmatpush1.bf16.msra.mxu0 0
  %928 = vmatprep.subr.bf16.mxu0 0
  %929 = vmatpush1.bf16.msra.mxu0 0
  %930 = vmatprep.subr.bf16.mxu0 0
  %931 = vmatpush1.bf16.msra.mxu0 0
  %932 = vmatprep.subr.bf16.mxu0 0
  %933 = vmatpush1.bf16.msra.mxu0 0
  %934 = vmatprep.subr.bf16.mxu0 0
  %935 = vmatpush1.bf16.msra.mxu0 0
  %936 = vmatprep.subr.bf16.mxu0 0
  %937 = vmatpush1.bf16.msra.mxu0 0
  %938 = vmatprep.subr.bf16.mxu0 0
  %939 = vmatpush1.bf16.msra.mxu0 0
  %940 = vmatprep.subr.bf16.mxu0 0
  %941 = vmatpush1.bf16.msra.mxu0 0
  %942 = vmatprep.subr.bf16.mxu0 0
  %943 = vmatpush1.bf16.msra.mxu0 0
  %944 = vmatprep.mubr.bf16.mxu0 0
  %945 = vmatmul.mubr.bf16.gmra.mrb[0].mxu0 %v907
  %v946 = vpop.f32.mrb[0].mxu0
  %v947 = vadd.f32 0.0, %v946
  %v948 = vpop.f32.mrb[0].mxu0
  %v949 = vpop.f32.mrb[0].mxu0
  %v950 = vadd.f32 0.0, %v949
  %v951 = vpop.f32.mrb[0].mxu0
  %952 = vmatprep.mubr.bf16.mxu0 0
  %953 = vmatmul.mubr.bf16.gmra.mrb[0].mxu0 %v910
  %v954 = vpop.f32.mrb[0].mxu0
  %v955 = vadd.f32 0.0, %v954
  %v956 = vpop.f32.mrb[0].mxu0
  %v957 = vpop.f32.mrb[0].mxu0
  %v958 = vadd.f32 0.0, %v957
  %v959 = vpop.f32.mrb[0].mxu0
  %960 = vdwg.mxu0
  %s961 = scalar_lea.vmem %s6, 7
  %v962 = vld [vmem:[%s961] sm:$0x1]
  %v964 = vlaneseq
  %v965 = vshrl.u32 %v964, 7
  %v966 = vsub.s32 0, %v965
  %v967 = vrot.slane %v962, %v966
  %v969 = vmul.f32 %v947, %v967
  %v970 = vmul.f32 %v950, %v967
  %v971 = vmul.f32 %v955, %v967
  %v972 = vmul.f32 %v958, %v967
  %v973 = vadd.f32 %v887, %v969
  %v974 = vadd.f32 %v888, %v970
  %v975 = vadd.f32 %v889, %v971
  %v976 = vadd.f32 %v890, %v972
  %s977 = scalar_lea.vmem %s3, 128
  %v978 = vld [vmem:[%s977] sm:$0xf]
  %v979 = vld [vmem:[%s977 + $0x4] sm:$0xf]
  %v980 = vld [vmem:[%s977 + $0x8] sm:$0xf]
  %v981 = vld [vmem:[%s977 + $0xc] sm:$0x3]
  %v986 = vunpack.c.l.b16 %v978
  %v987 = vunpack.c.l.b16 %v979
  %v988 = vunpack.c.l.b16 %v980
  %v989 = vunpack.c.l.b16 %v981
  %v990 = vpack.c.b16 %v987, %v986
  %v991 = vpack.c.b16 %v989, %v988
  %v993 = vsel %vm300, %v990, 0
  %v996 = vsel %vm300, %v991, 0
  %998 = vmatprep.subr.bf16.mxu0 0
  %999 = vmatpush1.bf16.msra.mxu0 %v284
  %1000 = vmatprep.subr.bf16.mxu0 0
  %1001 = vmatpush1.bf16.msra.mxu0 %v309
  %1002 = vmatprep.subr.bf16.mxu0 0
  %1003 = vmatpush1.bf16.msra.mxu0 0
  %1004 = vmatprep.subr.bf16.mxu0 0
  %1005 = vmatpush1.bf16.msra.mxu0 0
  %1006 = vmatprep.subr.bf16.mxu0 0
  %1007 = vmatpush1.bf16.msra.mxu0 0
  %1008 = vmatprep.subr.bf16.mxu0 0
  %1009 = vmatpush1.bf16.msra.mxu0 0
  %1010 = vmatprep.subr.bf16.mxu0 0
  %1011 = vmatpush1.bf16.msra.mxu0 0
  %1012 = vmatprep.subr.bf16.mxu0 0
  %1013 = vmatpush1.bf16.msra.mxu0 0
  %1014 = vmatprep.subr.bf16.mxu0 0
  %1015 = vmatpush1.bf16.msra.mxu0 0
  %1016 = vmatprep.subr.bf16.mxu0 0
  %1017 = vmatpush1.bf16.msra.mxu0 0
  %1018 = vmatprep.subr.bf16.mxu0 0
  %1019 = vmatpush1.bf16.msra.mxu0 0
  %1020 = vmatprep.subr.bf16.mxu0 0
  %1021 = vmatpush1.bf16.msra.mxu0 0
  %1022 = vmatprep.subr.bf16.mxu0 0
  %1023 = vmatpush1.bf16.msra.mxu0 0
  %1024 = vmatprep.subr.bf16.mxu0 0
  %1025 = vmatpush1.bf16.msra.mxu0 0
  %1026 = vmatprep.subr.bf16.mxu0 0
  %1027 = vmatpush1.bf16.msra.mxu0 0
  %1028 = vmatprep.subr.bf16.mxu0 0
  %1029 = vmatpush1.bf16.msra.mxu0 0
  %1030 = vmatprep.mubr.bf16.mxu0 0
  %1031 = vmatmul.mubr.bf16.gmra.mrb[0].mxu0 %v993
  %v1032 = vpop.f32.mrb[0].mxu0
  %v1033 = vadd.f32 0.0, %v1032
  %v1034 = vpop.f32.mrb[0].mxu0
  %v1035 = vpop.f32.mrb[0].mxu0
  %v1036 = vadd.f32 0.0, %v1035
  %v1037 = vpop.f32.mrb[0].mxu0
  %1038 = vmatprep.mubr.bf16.mxu0 0
  %1039 = vmatmul.mubr.bf16.gmra.mrb[0].mxu0 %v996
  %v1040 = vpop.f32.mrb[0].mxu0
  %v1041 = vadd.f32 0.0, %v1040
  %v1042 = vpop.f32.mrb[0].mxu0
  %v1043 = vpop.f32.mrb[0].mxu0
  %v1044 = vadd.f32 0.0, %v1043
  %v1045 = vpop.f32.mrb[0].mxu0
  %1046 = vdwg.mxu0
  %s1047 = scalar_lea.vmem %s6, 8
  %v1048 = vld [vmem:[%s1047] sm:$0x1]
  %v1050 = vlaneseq
  %v1051 = vshrl.u32 %v1050, 7
  %v1052 = vsub.s32 0, %v1051
  %v1053 = vrot.slane %v1048, %v1052
  %v1055 = vmul.f32 %v1033, %v1053
  %v1056 = vmul.f32 %v1036, %v1053
  %v1057 = vmul.f32 %v1041, %v1053
  %v1058 = vmul.f32 %v1044, %v1053
  %v1059 = vadd.f32 %v973, %v1055
  %v1060 = vadd.f32 %v974, %v1056
  %v1061 = vadd.f32 %v975, %v1057
  %v1062 = vadd.f32 %v976, %v1058
  %v1063 = vld [vmem:[%s7] sm:$0x1]
  %v1065 = vlaneseq
  %v1066 = vshrl.u32 %v1065, 7
  %v1067 = vsub.s32 0, %v1066
  %v1068 = vrot.slane %v1063, %v1067
  %v1070 = vadd.f32 %v1059, %v1068
  %v1071 = vadd.f32 %v1060, %v1068
  %v1072 = vadd.f32 %v1061, %v1068
  %v1073 = vadd.f32 %v1062, %v1068
  %v1074 = vmax.f32 %v1070, 0.0
  %v1075 = vmax.f32 %v1071, 0.0
  %v1076 = vmax.f32 %v1072, 0.0
  %v1077 = vmax.f32 %v1073, 0.0
  %v1078 = vld [vmem:[%s8] sm:$0xf]
  %v1079 = vld [vmem:[%s8 + $0x4] sm:$0xf]
  %v1080 = vld [vmem:[%s8 + $0x8] sm:$0xf]
  %v1081 = vld [vmem:[%s8 + $0xc] sm:$0xf]
  %v1082 = vld [vmem:[%s8 + $0x10] sm:$0xf]
  %v1083 = vld [vmem:[%s8 + $0x14] sm:$0xf]
  %v1084 = vld [vmem:[%s8 + $0x18] sm:$0xf]
  %v1085 = vld [vmem:[%s8 + $0x1c] sm:$0xf]
  %v1086 = vpack.c.bf16 %v1075, %v1074
  %v1087 = vpack.c.bf16 %v1077, %v1076
  %v1088 = vld [vmem:[%s9] sm:$0x1]
  %v1090 = vlaneseq
  %v1091 = vshrl.u32 %v1090, 7
  %v1092 = vsub.s32 0, %v1091
  %v1093 = vrot.slane %v1088, %v1092
  %v1103 = vunpack.c.l.b16 %v1078
  %v1104 = vunpack.c.l.b16 %v1079
  %v1105 = vunpack.c.l.b16 %v1080
  %v1106 = vunpack.c.l.b16 %v1081
  %v1107 = vunpack.c.l.b16 %v1082
  %v1108 = vunpack.c.l.b16 %v1083
  %v1109 = vunpack.c.l.b16 %v1084
  %v1110 = vunpack.c.l.b16 %v1085
  %v1111 = vpack.c.b16 %v1104, %v1103
  %v1112 = vpack.c.b16 %v1106, %v1105
  %v1113 = vpack.c.b16 %v1108, %v1107
  %v1114 = vpack.c.b16 %v1110, %v1109
  %v1120 = vsel %vm224, %v1086, 0
  %v1123 = vsel %vm224, %v1087, 0
  %1125 = vmatprep.subr.bf16.mxu0 0
  %1126 = vmatpush1.bf16.msra.mxu0 %v1111
  %1127 = vmatprep.subr.bf16.mxu0 0
  %1128 = vmatpush1.bf16.msra.mxu0 %v1112
  %1129 = vmatprep.subr.bf16.mxu0 0
  %1130 = vmatpush1.bf16.msra.mxu0 %v1113
  %1131 = vmatprep.subr.bf16.mxu0 0
  %1132 = vmatpush1.bf16.msra.mxu0 %v1114
  %1133 = vmatprep.subr.bf16.mxu0 0
  %1134 = vmatpush1.bf16.msra.mxu0 0
  %1135 = vmatprep.subr.bf16.mxu0 0
  %1136 = vmatpush1.bf16.msra.mxu0 0
  %1137 = vmatprep.subr.bf16.mxu0 0
  %1138 = vmatpush1.bf16.msra.mxu0 0
  %1139 = vmatprep.subr.bf16.mxu0 0
  %1140 = vmatpush1.bf16.msra.mxu0 0
  %1141 = vmatprep.subr.bf16.mxu0 0
  %1142 = vmatpush1.bf16.msra.mxu0 0
  %1143 = vmatprep.subr.bf16.mxu0 0
  %1144 = vmatpush1.bf16.msra.mxu0 0
  %1145 = vmatprep.subr.bf16.mxu0 0
  %1146 = vmatpush1.bf16.msra.mxu0 0
  %1147 = vmatprep.subr.bf16.mxu0 0
  %1148 = vmatpush1.bf16.msra.mxu0 0
  %1149 = vmatprep.subr.bf16.mxu0 0
  %1150 = vmatpush1.bf16.msra.mxu0 0
  %1151 = vmatprep.subr.bf16.mxu0 0
  %1152 = vmatpush1.bf16.msra.mxu0 0
  %1153 = vmatprep.subr.bf16.mxu0 0
  %1154 = vmatpush1.bf16.msra.mxu0 0
  %1155 = vmatprep.subr.bf16.mxu0 0
  %1156 = vmatpush1.bf16.msra.mxu0 0
  %1157 = vmatprep.mubr.bf16.mxu0 0
  %1158 = vmatmul.mubr.bf16.gmra.mrb[0].mxu0 %v1120
  %v1159 = vpop.f32.mrb[0].mxu0
  %v1160 = vadd.f32 %v1093, %v1159
  %v1161 = vpop.f32.mrb[0].mxu0
  %v1162 = vpop.f32.mrb[0].mxu0
  %v1163 = vadd.f32 %v1093, %v1162
  %v1164 = vpop.f32.mrb[0].mxu0
  %1165 = vmatprep.mubr.bf16.mxu0 0
  %1166 = vmatmul.mubr.bf16.gmra.mrb[0].mxu0 %v1123
  %v1167 = vpop.f32.mrb[0].mxu0
  %v1168 = vadd.f32 %v1093, %v1167
  %v1169 = vpop.f32.mrb[0].mxu0
  %v1170 = vpop.f32.mrb[0].mxu0
  %v1171 = vadd.f32 %v1093, %v1170
  %v1172 = vpop.f32.mrb[0].mxu0
  %1173 = vdwg.mxu0
  %v1174 = vadd.f32 %v1160, %v179
  %v1175 = vadd.f32 %v1163, %v180
  %v1176 = vadd.f32 %v1168, %v181
  %v1177 = vadd.f32 %v1171, %v182
  %v1178 = vmax.f32 %v1174, 0.0
  %v1179 = vmax.f32 %v1175, 0.0
  %v1180 = vmax.f32 %v1176, 0.0
  %v1181 = vmax.f32 %v1177, 0.0
  %v1182 = vld [vmem:[%s10] sm:$0xf]
  %v1183 = vld [vmem:[%s10 + $0x4] sm:$0xf]
  %v1184 = vld [vmem:[%s10 + $0x8] sm:$0xf]
  %v1185 = vld [vmem:[%s10 + $0xc] sm:$0xf]
  %v1186 = vld [vmem:[%s10 + $0x10] sm:$0xf]
  %v1187 = vld [vmem:[%s10 + $0x14] sm:$0xf]
  %v1188 = vld [vmem:[%s10 + $0x18] sm:$0xf]
  %v1189 = vld [vmem:[%s10 + $0x1c] sm:$0xf]
  %v1190 = vpack.c.bf16 %v1179, %v1178
  %v1191 = vpack.c.bf16 %v1181, %v1180
  %v1192 = vld [vmem:[%s11] sm:$0x1]
  %v1194 = vlaneseq
  %v1195 = vshrl.u32 %v1194, 7
  %v1196 = vsub.s32 0, %v1195
  %v1197 = vrot.slane %v1192, %v1196
  %v1207 = vunpack.c.l.b16 %v1182
  %v1208 = vunpack.c.l.b16 %v1183
  %v1209 = vunpack.c.l.b16 %v1184
  %v1210 = vunpack.c.l.b16 %v1185
  %v1211 = vunpack.c.l.b16 %v1186
  %v1212 = vunpack.c.l.b16 %v1187
  %v1213 = vunpack.c.l.b16 %v1188
  %v1214 = vunpack.c.l.b16 %v1189
  %v1215 = vpack.c.b16 %v1208, %v1207
  %v1216 = vpack.c.b16 %v1210, %v1209
  %v1217 = vpack.c.b16 %v1212, %v1211
  %v1218 = vpack.c.b16 %v1214, %v1213
  %v1224 = vsel %vm224, %v1190, 0
  %v1227 = vsel %vm224, %v1191, 0
  %1229 = vmatprep.subr.bf16.mxu0 0
  %1230 = vmatpush1.bf16.msra.mxu0 %v1215
  %1231 = vmatprep.subr.bf16.mxu0 0
  %1232 = vmatpush1.bf16.msra.mxu0 %v1216
  %1233 = vmatprep.subr.bf16.mxu0 0
  %1234 = vmatpush1.bf16.msra.mxu0 %v1217
  %1235 = vmatprep.subr.bf16.mxu0 0
  %1236 = vmatpush1.bf16.msra.mxu0 %v1218
  %1237 = vmatprep.subr.bf16.mxu0 0
  %1238 = vmatpush1.bf16.msra.mxu0 0
  %1239 = vmatprep.subr.bf16.mxu0 0
  %1240 = vmatpush1.bf16.msra.mxu0 0
  %1241 = vmatprep.subr.bf16.mxu0 0
  %1242 = vmatpush1.bf16.msra.mxu0 0
  %1243 = vmatprep.subr.bf16.mxu0 0
  %1244 = vmatpush1.bf16.msra.mxu0 0
  %1245 = vmatprep.subr.bf16.mxu0 0
  %1246 = vmatpush1.bf16.msra.mxu0 0
  %1247 = vmatprep.subr.bf16.mxu0 0
  %1248 = vmatpush1.bf16.msra.mxu0 0
  %1249 = vmatprep.subr.bf16.mxu0 0
  %1250 = vmatpush1.bf16.msra.mxu0 0
  %1251 = vmatprep.subr.bf16.mxu0 0
  %1252 = vmatpush1.bf16.msra.mxu0 0
  %1253 = vmatprep.subr.bf16.mxu0 0
  %1254 = vmatpush1.bf16.msra.mxu0 0
  %1255 = vmatprep.subr.bf16.mxu0 0
  %1256 = vmatpush1.bf16.msra.mxu0 0
  %1257 = vmatprep.subr.bf16.mxu0 0
  %1258 = vmatpush1.bf16.msra.mxu0 0
  %1259 = vmatprep.subr.bf16.mxu0 0
  %1260 = vmatpush1.bf16.msra.mxu0 0
  %1261 = vmatprep.mubr.bf16.mxu0 0
  %1262 = vmatmul.mubr.bf16.gmra.mrb[0].mxu0 %v1224
  %v1263 = vpop.f32.mrb[0].mxu0
  %v1264 = vadd.f32 %v1197, %v1263
  %v1265 = vpop.f32.mrb[0].mxu0
  %v1266 = vpop.f32.mrb[0].mxu0
  %v1267 = vadd.f32 %v1197, %v1266
  %v1268 = vpop.f32.mrb[0].mxu0
  %1269 = vmatprep.mubr.bf16.mxu0 0
  %1270 = vmatmul.mubr.bf16.gmra.mrb[0].mxu0 %v1227
  %v1271 = vpop.f32.mrb[0].mxu0
  %v1272 = vadd.f32 %v1197, %v1271
  %v1273 = vpop.f32.mrb[0].mxu0
  %v1274 = vpop.f32.mrb[0].mxu0
  %v1275 = vadd.f32 %v1197, %v1274
  %v1276 = vpop.f32.mrb[0].mxu0
  %1277 = vdwg.mxu0
  %v1278 = vmax.f32 %v1264, 0.0
  %v1279 = vmax.f32 %v1267, 0.0
  %v1280 = vmax.f32 %v1272, 0.0
  %v1281 = vmax.f32 %v1275, 0.0
  %v1282 = vpack.c.bf16 %v1279, %v1278
  %v1283 = vpack.c.bf16 %v1281, %v1280
  %v1285 = vsel %vm307, %v1283, 0
  %1287 = vmatprep.subr.bf16.mxu0 0
  %1288 = vmatpush1.bf16.msra.mxu0 %v1282
  %1289 = vmatprep.subr.bf16.mxu0 0
  %1290 = vmatpush1.bf16.msra.mxu0 %v1285
  %1291 = vmatprep.subr.bf16.mxu0 0
  %1292 = vmatpush1.bf16.msra.mxu0 0
  %1293 = vmatprep.subr.bf16.mxu0 0
  %1294 = vmatpush1.bf16.msra.mxu0 0
  %1295 = vmatprep.subr.bf16.mxu0 0
  %1296 = vmatpush1.bf16.msra.mxu0 0
  %1297 = vmatprep.subr.bf16.mxu0 0
  %1298 = vmatpush1.bf16.msra.mxu0 0
  %1299 = vmatprep.subr.bf16.mxu0 0
  %1300 = vmatpush1.bf16.msra.mxu0 0
  %1301 = vmatprep.subr.bf16.mxu0 0
  %1302 = vmatpush1.bf16.msra.mxu0 0
  %1303 = vmatprep.subr.bf16.mxu0 0
  %1304 = vmatpush1.bf16.msra.mxu0 0
  %1305 = vmatprep.subr.bf16.mxu0 0
  %1306 = vmatpush1.bf16.msra.mxu0 0
  %1307 = vmatprep.subr.bf16.mxu0 0
  %1308 = vmatpush1.bf16.msra.mxu0 0
  %1309 = vmatprep.subr.bf16.mxu0 0
  %1310 = vmatpush1.bf16.msra.mxu0 0
  %1311 = vmatprep.subr.bf16.mxu0 0
  %1312 = vmatpush1.bf16.msra.mxu0 0
  %1313 = vmatprep.subr.bf16.mxu0 0
  %1314 = vmatpush1.bf16.msra.mxu0 0
  %1315 = vmatprep.subr.bf16.mxu0 0
  %1316 = vmatpush1.bf16.msra.mxu0 0
  %1317 = vmatprep.subr.bf16.mxu0 0
  %1318 = vmatpush1.bf16.msra.mxu0 0
  %1319 = vmatprep.mubr.bf16.mxu0 0
  %1320 = vmatmul.mubr.bf16.gmra.mrb[0].mxu0 %v302
  %v1321 = vpop.f32.mrb[0].mxu0
  %v1322 = vadd.f32 0.0, %v1321
  %v1323 = vpop.f32.mrb[0].mxu0
  %v1324 = vpop.f32.mrb[0].mxu0
  %v1325 = vadd.f32 0.0, %v1324
  %v1326 = vpop.f32.mrb[0].mxu0
  %1327 = vmatprep.mubr.bf16.mxu0 0
  %1328 = vmatmul.mubr.bf16.gmra.mrb[0].mxu0 %v305
  %v1329 = vpop.f32.mrb[0].mxu0
  %v1330 = vadd.f32 0.0, %v1329
  %v1331 = vpop.f32.mrb[0].mxu0
  %v1332 = vpop.f32.mrb[0].mxu0
  %v1333 = vadd.f32 0.0, %v1332
  %v1334 = vpop.f32.mrb[0].mxu0
  %1335 = vdwg.mxu0
  %1336 = vrot.lane.b32.xlu0 %v1322, 64
  %v1337 = vpop.permute.xlu0 %1336
  %1338 = vrot.lane.b32.xlu0 %v1325, 64
  %v1339 = vpop.permute.xlu0 %1338
  %1340 = vrot.lane.b32.xlu0 %v1330, 64
  %v1341 = vpop.permute.xlu0 %1340
  %1342 = vrot.lane.b32.xlu0 %v1333, 64
  %v1343 = vpop.permute.xlu0 %1342
  %v1344 = vld [vmem:[%s12] sm:$0x1]
  %v1346 = vlaneseq
  %v1347 = vshrl.u32 %v1346, 7
  %v1348 = vsub.s32 0, %v1347
  %v1349 = vrot.slane %v1344, %v1348
  %v1351 = vmul.f32 %v1322, %v1349
  %v1352 = vmul.f32 %v1325, %v1349
  %v1353 = vmul.f32 %v1330, %v1349
  %v1354 = vmul.f32 %v1333, %v1349
  %v1355 = vadd.f32 %v1351, 0.0
  %v1356 = vadd.f32 %v1352, 0.0
  %v1357 = vadd.f32 %v1353, 0.0
  %v1358 = vadd.f32 %v1354, 0.0
  %v1359 = vld [vmem:[%s13] sm:$0x1]
  %v1361 = vlaneseq
  %v1362 = vshrl.u32 %v1361, 7
  %v1363 = vsub.s32 0, %v1362
  %v1364 = vrot.slane %v1359, %v1363
  %v1366 = vmul.f32 %v1337, %v1364
  %v1367 = vmul.f32 %v1339, %v1364
  %v1368 = vmul.f32 %v1341, %v1364
  %v1369 = vmul.f32 %v1343, %v1364
  %v1370 = vadd.f32 %v1355, %v1366
  %v1371 = vadd.f32 %v1356, %v1367
  %v1372 = vadd.f32 %v1357, %v1368
  %v1373 = vadd.f32 %v1358, %v1369
  %1374 = vmatprep.subr.bf16.mxu0 0
  %1375 = vmatpush1.bf16.msra.mxu0 %v1282
  %1376 = vmatprep.subr.bf16.mxu0 0
  %1377 = vmatpush1.bf16.msra.mxu0 %v1285
  %1378 = vmatprep.subr.bf16.mxu0 0
  %1379 = vmatpush1.bf16.msra.mxu0 0
  %1380 = vmatprep.subr.bf16.mxu0 0
  %1381 = vmatpush1.bf16.msra.mxu0 0
  %1382 = vmatprep.subr.bf16.mxu0 0
  %1383 = vmatpush1.bf16.msra.mxu0 0
  %1384 = vmatprep.subr.bf16.mxu0 0
  %1385 = vmatpush1.bf16.msra.mxu0 0
  %1386 = vmatprep.subr.bf16.mxu0 0
  %1387 = vmatpush1.bf16.msra.mxu0 0
  %1388 = vmatprep.subr.bf16.mxu0 0
  %1389 = vmatpush1.bf16.msra.mxu0 0
  %1390 = vmatprep.subr.bf16.mxu0 0
  %1391 = vmatpush1.bf16.msra.mxu0 0
  %1392 = vmatprep.subr.bf16.mxu0 0
  %1393 = vmatpush1.bf16.msra.mxu0 0
  %1394 = vmatprep.subr.bf16.mxu0 0
  %1395 = vmatpush1.bf16.msra.mxu0 0
  %1396 = vmatprep.subr.bf16.mxu0 0
  %1397 = vmatpush1.bf16.msra.mxu0 0
  %1398 = vmatprep.subr.bf16.mxu0 0
  %1399 = vmatpush1.bf16.msra.mxu0 0
  %1400 = vmatprep.subr.bf16.mxu0 0
  %1401 = vmatpush1.bf16.msra.mxu0 0
  %1402 = vmatprep.subr.bf16.mxu0 0
  %1403 = vmatpush1.bf16.msra.mxu0 0
  %1404 = vmatprep.subr.bf16.mxu0 0
  %1405 = vmatpush1.bf16.msra.mxu0 0
  %1406 = vmatprep.mubr.bf16.mxu0 0
  %1407 = vmatmul.mubr.bf16.gmra.mrb[0].mxu0 %v391
  %v1408 = vpop.f32.mrb[0].mxu0
  %v1409 = vadd.f32 0.0, %v1408
  %v1410 = vpop.f32.mrb[0].mxu0
  %v1411 = vpop.f32.mrb[0].mxu0
  %v1412 = vadd.f32 0.0, %v1411
  %v1413 = vpop.f32.mrb[0].mxu0
  %1414 = vmatprep.mubr.bf16.mxu0 0
  %1415 = vmatmul.mubr.bf16.gmra.mrb[0].mxu0 %v394
  %v1416 = vpop.f32.mrb[0].mxu0
  %v1417 = vadd.f32 0.0, %v1416
  %v1418 = vpop.f32.mrb[0].mxu0
  %v1419 = vpop.f32.mrb[0].mxu0
  %v1420 = vadd.f32 0.0, %v1419
  %v1421 = vpop.f32.mrb[0].mxu0
  %1422 = vdwg.mxu0
  %1423 = vrot.lane.b32.xlu0 %v1409, 64
  %v1424 = vpop.permute.xlu0 %1423
  %1425 = vrot.lane.b32.xlu0 %v1412, 64
  %v1426 = vpop.permute.xlu0 %1425
  %1427 = vrot.lane.b32.xlu0 %v1417, 64
  %v1428 = vpop.permute.xlu0 %1427
  %1429 = vrot.lane.b32.xlu0 %v1420, 64
  %v1430 = vpop.permute.xlu0 %1429
  %s1431 = scalar_lea.vmem %s12, 1
  %v1432 = vld [vmem:[%s1431] sm:$0x1]
  %v1434 = vlaneseq
  %v1435 = vshrl.u32 %v1434, 7
  %v1436 = vsub.s32 0, %v1435
  %v1437 = vrot.slane %v1432, %v1436
  %v1439 = vmul.f32 %v1409, %v1437
  %v1440 = vmul.f32 %v1412, %v1437
  %v1441 = vmul.f32 %v1417, %v1437
  %v1442 = vmul.f32 %v1420, %v1437
  %v1443 = vadd.f32 %v1370, %v1439
  %v1444 = vadd.f32 %v1371, %v1440
  %v1445 = vadd.f32 %v1372, %v1441
  %v1446 = vadd.f32 %v1373, %v1442
  %s1447 = scalar_lea.vmem %s13, 1
  %v1448 = vld [vmem:[%s1447] sm:$0x1]
  %v1450 = vlaneseq
  %v1451 = vshrl.u32 %v1450, 7
  %v1452 = vsub.s32 0, %v1451
  %v1453 = vrot.slane %v1448, %v1452
  %v1455 = vmul.f32 %v1424, %v1453
  %v1456 = vmul.f32 %v1426, %v1453
  %v1457 = vmul.f32 %v1428, %v1453
  %v1458 = vmul.f32 %v1430, %v1453
  %v1459 = vadd.f32 %v1443, %v1455
  %v1460 = vadd.f32 %v1444, %v1456
  %v1461 = vadd.f32 %v1445, %v1457
  %v1462 = vadd.f32 %v1446, %v1458
  %1463 = vmatprep.subr.bf16.mxu0 0
  %1464 = vmatpush1.bf16.msra.mxu0 %v1282
  %1465 = vmatprep.subr.bf16.mxu0 0
  %1466 = vmatpush1.bf16.msra.mxu0 %v1285
  %1467 = vmatprep.subr.bf16.mxu0 0
  %1468 = vmatpush1.bf16.msra.mxu0 0
  %1469 = vmatprep.subr.bf16.mxu0 0
  %1470 = vmatpush1.bf16.msra.mxu0 0
  %1471 = vmatprep.subr.bf16.mxu0 0
  %1472 = vmatpush1.bf16.msra.mxu0 0
  %1473 = vmatprep.subr.bf16.mxu0 0
  %1474 = vmatpush1.bf16.msra.mxu0 0
  %1475 = vmatprep.subr.bf16.mxu0 0
  %1476 = vmatpush1.bf16.msra.mxu0 0
  %1477 = vmatprep.subr.bf16.mxu0 0
  %1478 = vmatpush1.bf16.msra.mxu0 0
  %1479 = vmatprep.subr.bf16.mxu0 0
  %1480 = vmatpush1.bf16.msra.mxu0 0
  %1481 = vmatprep.subr.bf16.mxu0 0
  %1482 = vmatpush1.bf16.msra.mxu0 0
  %1483 = vmatprep.subr.bf16.mxu0 0
  %1484 = vmatpush1.bf16.msra.mxu0 0
  %1485 = vmatprep.subr.bf16.mxu0 0
  %1486 = vmatpush1.bf16.msra.mxu0 0
  %1487 = vmatprep.subr.bf16.mxu0 0
  %1488 = vmatpush1.bf16.msra.mxu0 0
  %1489 = vmatprep.subr.bf16.mxu0 0
  %1490 = vmatpush1.bf16.msra.mxu0 0
  %1491 = vmatprep.subr.bf16.mxu0 0
  %1492 = vmatpush1.bf16.msra.mxu0 0
  %1493 = vmatprep.subr.bf16.mxu0 0
  %1494 = vmatpush1.bf16.msra.mxu0 0
  %1495 = vmatprep.mubr.bf16.mxu0 0
  %1496 = vmatmul.mubr.bf16.gmra.mrb[0].mxu0 %v477
  %v1497 = vpop.f32.mrb[0].mxu0
  %v1498 = vadd.f32 0.0, %v1497
  %v1499 = vpop.f32.mrb[0].mxu0
  %v1500 = vpop.f32.mrb[0].mxu0
  %v1501 = vadd.f32 0.0, %v1500
  %v1502 = vpop.f32.mrb[0].mxu0
  %1503 = vmatprep.mubr.bf16.mxu0 0
  %1504 = vmatmul.mubr.bf16.gmra.mrb[0].mxu0 %v480
  %v1505 = vpop.f32.mrb[0].mxu0
  %v1506 = vadd.f32 0.0, %v1505
  %v1507 = vpop.f32.mrb[0].mxu0
  %v1508 = vpop.f32.mrb[0].mxu0
  %v1509 = vadd.f32 0.0, %v1508
  %v1510 = vpop.f32.mrb[0].mxu0
  %1511 = vdwg.mxu0
  %1512 = vrot.lane.b32.xlu0 %v1498, 64
  %v1513 = vpop.permute.xlu0 %1512
  %1514 = vrot.lane.b32.xlu0 %v1501, 64
  %v1515 = vpop.permute.xlu0 %1514
  %1516 = vrot.lane.b32.xlu0 %v1506, 64
  %v1517 = vpop.permute.xlu0 %1516
  %1518 = vrot.lane.b32.xlu0 %v1509, 64
  %v1519 = vpop.permute.xlu0 %1518
  %s1520 = scalar_lea.vmem %s12, 2
  %v1521 = vld [vmem:[%s1520] sm:$0x1]
  %v1523 = vlaneseq
  %v1524 = vshrl.u32 %v1523, 7
  %v1525 = vsub.s32 0, %v1524
  %v1526 = vrot.slane %v1521, %v1525
  %v1528 = vmul.f32 %v1498, %v1526
  %v1529 = vmul.f32 %v1501, %v1526
  %v1530 = vmul.f32 %v1506, %v1526
  %v1531 = vmul.f32 %v1509, %v1526
  %v1532 = vadd.f32 %v1459, %v1528
  %v1533 = vadd.f32 %v1460, %v1529
  %v1534 = vadd.f32 %v1461, %v1530
  %v1535 = vadd.f32 %v1462, %v1531
  %s1536 = scalar_lea.vmem %s13, 2
  %v1537 = vld [vmem:[%s1536] sm:$0x1]
  %v1539 = vlaneseq
  %v1540 = vshrl.u32 %v1539, 7
  %v1541 = vsub.s32 0, %v1540
  %v1542 = vrot.slane %v1537, %v1541
  %v1544 = vmul.f32 %v1513, %v1542
  %v1545 = vmul.f32 %v1515, %v1542
  %v1546 = vmul.f32 %v1517, %v1542
  %v1547 = vmul.f32 %v1519, %v1542
  %v1548 = vadd.f32 %v1532, %v1544
  %v1549 = vadd.f32 %v1533, %v1545
  %v1550 = vadd.f32 %v1534, %v1546
  %v1551 = vadd.f32 %v1535, %v1547
  %1552 = vmatprep.subr.bf16.mxu0 0
  %1553 = vmatpush1.bf16.msra.mxu0 %v1282
  %1554 = vmatprep.subr.bf16.mxu0 0
  %1555 = vmatpush1.bf16.msra.mxu0 %v1285
  %1556 = vmatprep.subr.bf16.mxu0 0
  %1557 = vmatpush1.bf16.msra.mxu0 0
  %1558 = vmatprep.subr.bf16.mxu0 0
  %1559 = vmatpush1.bf16.msra.mxu0 0
  %1560 = vmatprep.subr.bf16.mxu0 0
  %1561 = vmatpush1.bf16.msra.mxu0 0
  %1562 = vmatprep.subr.bf16.mxu0 0
  %1563 = vmatpush1.bf16.msra.mxu0 0
  %1564 = vmatprep.subr.bf16.mxu0 0
  %1565 = vmatpush1.bf16.msra.mxu0 0
  %1566 = vmatprep.subr.bf16.mxu0 0
  %1567 = vmatpush1.bf16.msra.mxu0 0
  %1568 = vmatprep.subr.bf16.mxu0 0
  %1569 = vmatpush1.bf16.msra.mxu0 0
  %1570 = vmatprep.subr.bf16.mxu0 0
  %1571 = vmatpush1.bf16.msra.mxu0 0
  %1572 = vmatprep.subr.bf16.mxu0 0
  %1573 = vmatpush1.bf16.msra.mxu0 0
  %1574 = vmatprep.subr.bf16.mxu0 0
  %1575 = vmatpush1.bf16.msra.mxu0 0
  %1576 = vmatprep.subr.bf16.mxu0 0
  %1577 = vmatpush1.bf16.msra.mxu0 0
  %1578 = vmatprep.subr.bf16.mxu0 0
  %1579 = vmatpush1.bf16.msra.mxu0 0
  %1580 = vmatprep.subr.bf16.mxu0 0
  %1581 = vmatpush1.bf16.msra.mxu0 0
  %1582 = vmatprep.subr.bf16.mxu0 0
  %1583 = vmatpush1.bf16.msra.mxu0 0
  %1584 = vmatprep.mubr.bf16.mxu0 0
  %1585 = vmatmul.mubr.bf16.gmra.mrb[0].mxu0 %v563
  %v1586 = vpop.f32.mrb[0].mxu0
  %v1587 = vadd.f32 0.0, %v1586
  %v1588 = vpop.f32.mrb[0].mxu0
  %v1589 = vpop.f32.mrb[0].mxu0
  %v1590 = vadd.f32 0.0, %v1589
  %v1591 = vpop.f32.mrb[0].mxu0
  %1592 = vmatprep.mubr.bf16.mxu0 0
  %1593 = vmatmul.mubr.bf16.gmra.mrb[0].mxu0 %v566
  %v1594 = vpop.f32.mrb[0].mxu0
  %v1595 = vadd.f32 0.0, %v1594
  %v1596 = vpop.f32.mrb[0].mxu0
  %v1597 = vpop.f32.mrb[0].mxu0
  %v1598 = vadd.f32 0.0, %v1597
  %v1599 = vpop.f32.mrb[0].mxu0
  %1600 = vdwg.mxu0
  %1601 = vrot.lane.b32.xlu0 %v1587, 64
  %v1602 = vpop.permute.xlu0 %1601
  %1603 = vrot.lane.b32.xlu0 %v1590, 64
  %v1604 = vpop.permute.xlu0 %1603
  %1605 = vrot.lane.b32.xlu0 %v1595, 64
  %v1606 = vpop.permute.xlu0 %1605
  %1607 = vrot.lane.b32.xlu0 %v1598, 64
  %v1608 = vpop.permute.xlu0 %1607
  %s1609 = scalar_lea.vmem %s12, 3
  %v1610 = vld [vmem:[%s1609] sm:$0x1]
  %v1612 = vlaneseq
  %v1613 = vshrl.u32 %v1612, 7
  %v1614 = vsub.s32 0, %v1613
  %v1615 = vrot.slane %v1610, %v1614
  %v1617 = vmul.f32 %v1587, %v1615
  %v1618 = vmul.f32 %v1590, %v1615
  %v1619 = vmul.f32 %v1595, %v1615
  %v1620 = vmul.f32 %v1598, %v1615
  %v1621 = vadd.f32 %v1548, %v1617
  %v1622 = vadd.f32 %v1549, %v1618
  %v1623 = vadd.f32 %v1550, %v1619
  %v1624 = vadd.f32 %v1551, %v1620
  %s1625 = scalar_lea.vmem %s13, 3
  %v1626 = vld [vmem:[%s1625] sm:$0x1]
  %v1628 = vlaneseq
  %v1629 = vshrl.u32 %v1628, 7
  %v1630 = vsub.s32 0, %v1629
  %v1631 = vrot.slane %v1626, %v1630
  %v1633 = vmul.f32 %v1602, %v1631
  %v1634 = vmul.f32 %v1604, %v1631
  %v1635 = vmul.f32 %v1606, %v1631
  %v1636 = vmul.f32 %v1608, %v1631
  %v1637 = vadd.f32 %v1621, %v1633
  %v1638 = vadd.f32 %v1622, %v1634
  %v1639 = vadd.f32 %v1623, %v1635
  %v1640 = vadd.f32 %v1624, %v1636
  %1641 = vmatprep.subr.bf16.mxu0 0
  %1642 = vmatpush1.bf16.msra.mxu0 %v1282
  %1643 = vmatprep.subr.bf16.mxu0 0
  %1644 = vmatpush1.bf16.msra.mxu0 %v1285
  %1645 = vmatprep.subr.bf16.mxu0 0
  %1646 = vmatpush1.bf16.msra.mxu0 0
  %1647 = vmatprep.subr.bf16.mxu0 0
  %1648 = vmatpush1.bf16.msra.mxu0 0
  %1649 = vmatprep.subr.bf16.mxu0 0
  %1650 = vmatpush1.bf16.msra.mxu0 0
  %1651 = vmatprep.subr.bf16.mxu0 0
  %1652 = vmatpush1.bf16.msra.mxu0 0
  %1653 = vmatprep.subr.bf16.mxu0 0
  %1654 = vmatpush1.bf16.msra.mxu0 0
  %1655 = vmatprep.subr.bf16.mxu0 0
  %1656 = vmatpush1.bf16.msra.mxu0 0
  %1657 = vmatprep.subr.bf16.mxu0 0
  %1658 = vmatpush1.bf16.msra.mxu0 0
  %1659 = vmatprep.subr.bf16.mxu0 0
  %1660 = vmatpush1.bf16.msra.mxu0 0
  %1661 = vmatprep.subr.bf16.mxu0 0
  %1662 = vmatpush1.bf16.msra.mxu0 0
  %1663 = vmatprep.subr.bf16.mxu0 0
  %1664 = vmatpush1.bf16.msra.mxu0 0
  %1665 = vmatprep.subr.bf16.mxu0 0
  %1666 = vmatpush1.bf16.msra.mxu0 0
  %1667 = vmatprep.subr.bf16.mxu0 0
  %1668 = vmatpush1.bf16.msra.mxu0 0
  %1669 = vmatprep.subr.bf16.mxu0 0
  %1670 = vmatpush1.bf16.msra.mxu0 0
  %1671 = vmatprep.subr.bf16.mxu0 0
  %1672 = vmatpush1.bf16.msra.mxu0 0
  %1673 = vmatprep.mubr.bf16.mxu0 0
  %1674 = vmatmul.mubr.bf16.gmra.mrb[0].mxu0 %v649
  %v1675 = vpop.f32.mrb[0].mxu0
  %v1676 = vadd.f32 0.0, %v1675
  %v1677 = vpop.f32.mrb[0].mxu0
  %v1678 = vpop.f32.mrb[0].mxu0
  %v1679 = vadd.f32 0.0, %v1678
  %v1680 = vpop.f32.mrb[0].mxu0
  %1681 = vmatprep.mubr.bf16.mxu0 0
  %1682 = vmatmul.mubr.bf16.gmra.mrb[0].mxu0 %v652
  %v1683 = vpop.f32.mrb[0].mxu0
  %v1684 = vadd.f32 0.0, %v1683
  %v1685 = vpop.f32.mrb[0].mxu0
  %v1686 = vpop.f32.mrb[0].mxu0
  %v1687 = vadd.f32 0.0, %v1686
  %v1688 = vpop.f32.mrb[0].mxu0
  %1689 = vdwg.mxu0
  %1690 = vrot.lane.b32.xlu0 %v1676, 64
  %v1691 = vpop.permute.xlu0 %1690
  %1692 = vrot.lane.b32.xlu0 %v1679, 64
  %v1693 = vpop.permute.xlu0 %1692
  %1694 = vrot.lane.b32.xlu0 %v1684, 64
  %v1695 = vpop.permute.xlu0 %1694
  %1696 = vrot.lane.b32.xlu0 %v1687, 64
  %v1697 = vpop.permute.xlu0 %1696
  %s1698 = scalar_lea.vmem %s12, 4
  %v1699 = vld [vmem:[%s1698] sm:$0x1]
  %v1701 = vlaneseq
  %v1702 = vshrl.u32 %v1701, 7
  %v1703 = vsub.s32 0, %v1702
  %v1704 = vrot.slane %v1699, %v1703
  %v1706 = vmul.f32 %v1676, %v1704
  %v1707 = vmul.f32 %v1679, %v1704
  %v1708 = vmul.f32 %v1684, %v1704
  %v1709 = vmul.f32 %v1687, %v1704
  %v1710 = vadd.f32 %v1637, %v1706
  %v1711 = vadd.f32 %v1638, %v1707
  %v1712 = vadd.f32 %v1639, %v1708
  %v1713 = vadd.f32 %v1640, %v1709
  %s1714 = scalar_lea.vmem %s13, 4
  %v1715 = vld [vmem:[%s1714] sm:$0x1]
  %v1717 = vlaneseq
  %v1718 = vshrl.u32 %v1717, 7
  %v1719 = vsub.s32 0, %v1718
  %v1720 = vrot.slane %v1715, %v1719
  %v1722 = vmul.f32 %v1691, %v1720
  %v1723 = vmul.f32 %v1693, %v1720
  %v1724 = vmul.f32 %v1695, %v1720
  %v1725 = vmul.f32 %v1697, %v1720
  %v1726 = vadd.f32 %v1710, %v1722
  %v1727 = vadd.f32 %v1711, %v1723
  %v1728 = vadd.f32 %v1712, %v1724
  %v1729 = vadd.f32 %v1713, %v1725
  %1730 = vmatprep.subr.bf16.mxu0 0
  %1731 = vmatpush1.bf16.msra.mxu0 %v1282
  %1732 = vmatprep.subr.bf16.mxu0 0
  %1733 = vmatpush1.bf16.msra.mxu0 %v1285
  %1734 = vmatprep.subr.bf16.mxu0 0
  %1735 = vmatpush1.bf16.msra.mxu0 0
  %1736 = vmatprep.subr.bf16.mxu0 0
  %1737 = vmatpush1.bf16.msra.mxu0 0
  %1738 = vmatprep.subr.bf16.mxu0 0
  %1739 = vmatpush1.bf16.msra.mxu0 0
  %1740 = vmatprep.subr.bf16.mxu0 0
  %1741 = vmatpush1.bf16.msra.mxu0 0
  %1742 = vmatprep.subr.bf16.mxu0 0
  %1743 = vmatpush1.bf16.msra.mxu0 0
  %1744 = vmatprep.subr.bf16.mxu0 0
  %1745 = vmatpush1.bf16.msra.mxu0 0
  %1746 = vmatprep.subr.bf16.mxu0 0
  %1747 = vmatpush1.bf16.msra.mxu0 0
  %1748 = vmatprep.subr.bf16.mxu0 0
  %1749 = vmatpush1.bf16.msra.mxu0 0
  %1750 = vmatprep.subr.bf16.mxu0 0
  %1751 = vmatpush1.bf16.msra.mxu0 0
  %1752 = vmatprep.subr.bf16.mxu0 0
  %1753 = vmatpush1.bf16.msra.mxu0 0
  %1754 = vmatprep.subr.bf16.mxu0 0
  %1755 = vmatpush1.bf16.msra.mxu0 0
  %1756 = vmatprep.subr.bf16.mxu0 0
  %1757 = vmatpush1.bf16.msra.mxu0 0
  %1758 = vmatprep.subr.bf16.mxu0 0
  %1759 = vmatpush1.bf16.msra.mxu0 0
  %1760 = vmatprep.subr.bf16.mxu0 0
  %1761 = vmatpush1.bf16.msra.mxu0 0
  %1762 = vmatprep.mubr.bf16.mxu0 0
  %1763 = vmatmul.mubr.bf16.gmra.mrb[0].mxu0 %v735
  %v1764 = vpop.f32.mrb[0].mxu0
  %v1765 = vadd.f32 0.0, %v1764
  %v1766 = vpop.f32.mrb[0].mxu0
  %v1767 = vpop.f32.mrb[0].mxu0
  %v1768 = vadd.f32 0.0, %v1767
  %v1769 = vpop.f32.mrb[0].mxu0
  %1770 = vmatprep.mubr.bf16.mxu0 0
  %1771 = vmatmul.mubr.bf16.gmra.mrb[0].mxu0 %v738
  %v1772 = vpop.f32.mrb[0].mxu0
  %v1773 = vadd.f32 0.0, %v1772
  %v1774 = vpop.f32.mrb[0].mxu0
  %v1775 = vpop.f32.mrb[0].mxu0
  %v1776 = vadd.f32 0.0, %v1775
  %v1777 = vpop.f32.mrb[0].mxu0
  %1778 = vdwg.mxu0
  %1779 = vrot.lane.b32.xlu0 %v1765, 64
  %v1780 = vpop.permute.xlu0 %1779
  %1781 = vrot.lane.b32.xlu0 %v1768, 64
  %v1782 = vpop.permute.xlu0 %1781
  %1783 = vrot.lane.b32.xlu0 %v1773, 64
  %v1784 = vpop.permute.xlu0 %1783
  %1785 = vrot.lane.b32.xlu0 %v1776, 64
  %v1786 = vpop.permute.xlu0 %1785
  %s1787 = scalar_lea.vmem %s12, 5
  %v1788 = vld [vmem:[%s1787] sm:$0x1]
  %v1790 = vlaneseq
  %v1791 = vshrl.u32 %v1790, 7
  %v1792 = vsub.s32 0, %v1791
  %v1793 = vrot.slane %v1788, %v1792
  %v1795 = vmul.f32 %v1765, %v1793
  %v1796 = vmul.f32 %v1768, %v1793
  %v1797 = vmul.f32 %v1773, %v1793
  %v1798 = vmul.f32 %v1776, %v1793
  %v1799 = vadd.f32 %v1726, %v1795
  %v1800 = vadd.f32 %v1727, %v1796
  %v1801 = vadd.f32 %v1728, %v1797
  %v1802 = vadd.f32 %v1729, %v1798
  %s1803 = scalar_lea.vmem %s13, 5
  %v1804 = vld [vmem:[%s1803] sm:$0x1]
  %v1806 = vlaneseq
  %v1807 = vshrl.u32 %v1806, 7
  %v1808 = vsub.s32 0, %v1807
  %v1809 = vrot.slane %v1804, %v1808
  %v1811 = vmul.f32 %v1780, %v1809
  %v1812 = vmul.f32 %v1782, %v1809
  %v1813 = vmul.f32 %v1784, %v1809
  %v1814 = vmul.f32 %v1786, %v1809
  %v1815 = vadd.f32 %v1799, %v1811
  %v1816 = vadd.f32 %v1800, %v1812
  %v1817 = vadd.f32 %v1801, %v1813
  %v1818 = vadd.f32 %v1802, %v1814
  %1819 = vmatprep.subr.bf16.mxu0 0
  %1820 = vmatpush1.bf16.msra.mxu0 %v1282
  %1821 = vmatprep.subr.bf16.mxu0 0
  %1822 = vmatpush1.bf16.msra.mxu0 %v1285
  %1823 = vmatprep.subr.bf16.mxu0 0
  %1824 = vmatpush1.bf16.msra.mxu0 0
  %1825 = vmatprep.subr.bf16.mxu0 0
  %1826 = vmatpush1.bf16.msra.mxu0 0
  %1827 = vmatprep.subr.bf16.mxu0 0
  %1828 = vmatpush1.bf16.msra.mxu0 0
  %1829 = vmatprep.subr.bf16.mxu0 0
  %1830 = vmatpush1.bf16.msra.mxu0 0
  %1831 = vmatprep.subr.bf16.mxu0 0
  %1832 = vmatpush1.bf16.msra.mxu0 0
  %1833 = vmatprep.subr.bf16.mxu0 0
  %1834 = vmatpush1.bf16.msra.mxu0 0
  %1835 = vmatprep.subr.bf16.mxu0 0
  %1836 = vmatpush1.bf16.msra.mxu0 0
  %1837 = vmatprep.subr.bf16.mxu0 0
  %1838 = vmatpush1.bf16.msra.mxu0 0
  %1839 = vmatprep.subr.bf16.mxu0 0
  %1840 = vmatpush1.bf16.msra.mxu0 0
  %1841 = vmatprep.subr.bf16.mxu0 0
  %1842 = vmatpush1.bf16.msra.mxu0 0
  %1843 = vmatprep.subr.bf16.mxu0 0
  %1844 = vmatpush1.bf16.msra.mxu0 0
  %1845 = vmatprep.subr.bf16.mxu0 0
  %1846 = vmatpush1.bf16.msra.mxu0 0
  %1847 = vmatprep.subr.bf16.mxu0 0
  %1848 = vmatpush1.bf16.msra.mxu0 0
  %1849 = vmatprep.subr.bf16.mxu0 0
  %1850 = vmatpush1.bf16.msra.mxu0 0
  %1851 = vmatprep.mubr.bf16.mxu0 0
  %1852 = vmatmul.mubr.bf16.gmra.mrb[0].mxu0 %v821
  %v1853 = vpop.f32.mrb[0].mxu0
  %v1854 = vadd.f32 0.0, %v1853
  %v1855 = vpop.f32.mrb[0].mxu0
  %v1856 = vpop.f32.mrb[0].mxu0
  %v1857 = vadd.f32 0.0, %v1856
  %v1858 = vpop.f32.mrb[0].mxu0
  %1859 = vmatprep.mubr.bf16.mxu0 0
  %1860 = vmatmul.mubr.bf16.gmra.mrb[0].mxu0 %v824
  %v1861 = vpop.f32.mrb[0].mxu0
  %v1862 = vadd.f32 0.0, %v1861
  %v1863 = vpop.f32.mrb[0].mxu0
  %v1864 = vpop.f32.mrb[0].mxu0
  %v1865 = vadd.f32 0.0, %v1864
  %v1866 = vpop.f32.mrb[0].mxu0
  %1867 = vdwg.mxu0
  %1868 = vrot.lane.b32.xlu0 %v1854, 64
  %v1869 = vpop.permute.xlu0 %1868
  %1870 = vrot.lane.b32.xlu0 %v1857, 64
  %v1871 = vpop.permute.xlu0 %1870
  %1872 = vrot.lane.b32.xlu0 %v1862, 64
  %v1873 = vpop.permute.xlu0 %1872
  %1874 = vrot.lane.b32.xlu0 %v1865, 64
  %v1875 = vpop.permute.xlu0 %1874
  %s1876 = scalar_lea.vmem %s12, 6
  %v1877 = vld [vmem:[%s1876] sm:$0x1]
  %v1879 = vlaneseq
  %v1880 = vshrl.u32 %v1879, 7
  %v1881 = vsub.s32 0, %v1880
  %v1882 = vrot.slane %v1877, %v1881
  %v1884 = vmul.f32 %v1854, %v1882
  %v1885 = vmul.f32 %v1857, %v1882
  %v1886 = vmul.f32 %v1862, %v1882
  %v1887 = vmul.f32 %v1865, %v1882
  %v1888 = vadd.f32 %v1815, %v1884
  %v1889 = vadd.f32 %v1816, %v1885
  %v1890 = vadd.f32 %v1817, %v1886
  %v1891 = vadd.f32 %v1818, %v1887
  %s1892 = scalar_lea.vmem %s13, 6
  %v1893 = vld [vmem:[%s1892] sm:$0x1]
  %v1895 = vlaneseq
  %v1896 = vshrl.u32 %v1895, 7
  %v1897 = vsub.s32 0, %v1896
  %v1898 = vrot.slane %v1893, %v1897
  %v1900 = vmul.f32 %v1869, %v1898
  %v1901 = vmul.f32 %v1871, %v1898
  %v1902 = vmul.f32 %v1873, %v1898
  %v1903 = vmul.f32 %v1875, %v1898
  %v1904 = vadd.f32 %v1888, %v1900
  %v1905 = vadd.f32 %v1889, %v1901
  %v1906 = vadd.f32 %v1890, %v1902
  %v1907 = vadd.f32 %v1891, %v1903
  %1908 = vmatprep.subr.bf16.mxu0 0
  %1909 = vmatpush1.bf16.msra.mxu0 %v1282
  %1910 = vmatprep.subr.bf16.mxu0 0
  %1911 = vmatpush1.bf16.msra.mxu0 %v1285
  %1912 = vmatprep.subr.bf16.mxu0 0
  %1913 = vmatpush1.bf16.msra.mxu0 0
  %1914 = vmatprep.subr.bf16.mxu0 0
  %1915 = vmatpush1.bf16.msra.mxu0 0
  %1916 = vmatprep.subr.bf16.mxu0 0
  %1917 = vmatpush1.bf16.msra.mxu0 0
  %1918 = vmatprep.subr.bf16.mxu0 0
  %1919 = vmatpush1.bf16.msra.mxu0 0
  %1920 = vmatprep.subr.bf16.mxu0 0
  %1921 = vmatpush1.bf16.msra.mxu0 0
  %1922 = vmatprep.subr.bf16.mxu0 0
  %1923 = vmatpush1.bf16.msra.mxu0 0
  %1924 = vmatprep.subr.bf16.mxu0 0
  %1925 = vmatpush1.bf16.msra.mxu0 0
  %1926 = vmatprep.subr.bf16.mxu0 0
  %1927 = vmatpush1.bf16.msra.mxu0 0
  %1928 = vmatprep.subr.bf16.mxu0 0
  %1929 = vmatpush1.bf16.msra.mxu0 0
  %1930 = vmatprep.subr.bf16.mxu0 0
  %1931 = vmatpush1.bf16.msra.mxu0 0
  %1932 = vmatprep.subr.bf16.mxu0 0
  %1933 = vmatpush1.bf16.msra.mxu0 0
  %1934 = vmatprep.subr.bf16.mxu0 0
  %1935 = vmatpush1.bf16.msra.mxu0 0
  %1936 = vmatprep.subr.bf16.mxu0 0
  %1937 = vmatpush1.bf16.msra.mxu0 0
  %1938 = vmatprep.subr.bf16.mxu0 0
  %1939 = vmatpush1.bf16.msra.mxu0 0
  %1940 = vmatprep.mubr.bf16.mxu0 0
  %1941 = vmatmul.mubr.bf16.gmra.mrb[0].mxu0 %v907
  %v1942 = vpop.f32.mrb[0].mxu0
  %v1943 = vadd.f32 0.0, %v1942
  %v1944 = vpop.f32.mrb[0].mxu0
  %v1945 = vpop.f32.mrb[0].mxu0
  %v1946 = vadd.f32 0.0, %v1945
  %v1947 = vpop.f32.mrb[0].mxu0
  %1948 = vmatprep.mubr.bf16.mxu0 0
  %1949 = vmatmul.mubr.bf16.gmra.mrb[0].mxu0 %v910
  %v1950 = vpop.f32.mrb[0].mxu0
  %v1951 = vadd.f32 0.0, %v1950
  %v1952 = vpop.f32.mrb[0].mxu0
  %v1953 = vpop.f32.mrb[0].mxu0
  %v1954 = vadd.f32 0.0, %v1953
  %v1955 = vpop.f32.mrb[0].mxu0
  %1956 = vdwg.mxu0
  %1957 = vrot.lane.b32.xlu0 %v1943, 64
  %v1958 = vpop.permute.xlu0 %1957
  %1959 = vrot.lane.b32.xlu0 %v1946, 64
  %v1960 = vpop.permute.xlu0 %1959
  %1961 = vrot.lane.b32.xlu0 %v1951, 64
  %v1962 = vpop.permute.xlu0 %1961
  %1963 = vrot.lane.b32.xlu0 %v1954, 64
  %v1964 = vpop.permute.xlu0 %1963
  %s1965 = scalar_lea.vmem %s12, 7
  %v1966 = vld [vmem:[%s1965] sm:$0x1]
  %v1968 = vlaneseq
  %v1969 = vshrl.u32 %v1968, 7
  %v1970 = vsub.s32 0, %v1969
  %v1971 = vrot.slane %v1966, %v1970
  %v1973 = vmul.f32 %v1943, %v1971
  %v1974 = vmul.f32 %v1946, %v1971
  %v1975 = vmul.f32 %v1951, %v1971
  %v1976 = vmul.f32 %v1954, %v1971
  %v1977 = vadd.f32 %v1904, %v1973
  %v1978 = vadd.f32 %v1905, %v1974
  %v1979 = vadd.f32 %v1906, %v1975
  %v1980 = vadd.f32 %v1907, %v1976
  %s1981 = scalar_lea.vmem %s13, 7
  %v1982 = vld [vmem:[%s1981] sm:$0x1]
  %v1984 = vlaneseq
  %v1985 = vshrl.u32 %v1984, 7
  %v1986 = vsub.s32 0, %v1985
  %v1987 = vrot.slane %v1982, %v1986
  %v1989 = vmul.f32 %v1958, %v1987
  %v1990 = vmul.f32 %v1960, %v1987
  %v1991 = vmul.f32 %v1962, %v1987
  %v1992 = vmul.f32 %v1964, %v1987
  %v1993 = vadd.f32 %v1977, %v1989
  %v1994 = vadd.f32 %v1978, %v1990
  %v1995 = vadd.f32 %v1979, %v1991
  %v1996 = vadd.f32 %v1980, %v1992
  %1997 = vmatprep.subr.bf16.mxu0 0
  %1998 = vmatpush1.bf16.msra.mxu0 %v1282
  %1999 = vmatprep.subr.bf16.mxu0 0
  %2000 = vmatpush1.bf16.msra.mxu0 %v1285
  %2001 = vmatprep.subr.bf16.mxu0 0
  %2002 = vmatpush1.bf16.msra.mxu0 0
  %2003 = vmatprep.subr.bf16.mxu0 0
  %2004 = vmatpush1.bf16.msra.mxu0 0
  %2005 = vmatprep.subr.bf16.mxu0 0
  %2006 = vmatpush1.bf16.msra.mxu0 0
  %2007 = vmatprep.subr.bf16.mxu0 0
  %2008 = vmatpush1.bf16.msra.mxu0 0
  %2009 = vmatprep.subr.bf16.mxu0 0
  %2010 = vmatpush1.bf16.msra.mxu0 0
  %2011 = vmatprep.subr.bf16.mxu0 0
  %2012 = vmatpush1.bf16.msra.mxu0 0
  %2013 = vmatprep.subr.bf16.mxu0 0
  %2014 = vmatpush1.bf16.msra.mxu0 0
  %2015 = vmatprep.subr.bf16.mxu0 0
  %2016 = vmatpush1.bf16.msra.mxu0 0
  %2017 = vmatprep.subr.bf16.mxu0 0
  %2018 = vmatpush1.bf16.msra.mxu0 0
  %2019 = vmatprep.subr.bf16.mxu0 0
  %2020 = vmatpush1.bf16.msra.mxu0 0
  %2021 = vmatprep.subr.bf16.mxu0 0
  %2022 = vmatpush1.bf16.msra.mxu0 0
  %2023 = vmatprep.subr.bf16.mxu0 0
  %2024 = vmatpush1.bf16.msra.mxu0 0
  %2025 = vmatprep.subr.bf16.mxu0 0
  %2026 = vmatpush1.bf16.msra.mxu0 0
  %2027 = vmatprep.subr.bf16.mxu0 0
  %2028 = vmatpush1.bf16.msra.mxu0 0
  %2029 = vmatprep.mubr.bf16.mxu0 0
  %2030 = vmatmul.mubr.bf16.gmra.mrb[0].mxu0 %v993
  %v2031 = vpop.f32.mrb[0].mxu0
  %v2032 = vadd.f32 0.0, %v2031
  %v2033 = vpop.f32.mrb[0].mxu0
  %v2034 = vpop.f32.mrb[0].mxu0
  %v2035 = vadd.f32 0.0, %v2034
  %v2036 = vpop.f32.mrb[0].mxu0
  %2037 = vmatprep.mubr.bf16.mxu0 0
  %2038 = vmatmul.mubr.bf16.gmra.mrb[0].mxu0 %v996
  %v2039 = vpop.f32.mrb[0].mxu0
  %v2040 = vadd.f32 0.0, %v2039
  %v2041 = vpop.f32.mrb[0].mxu0
  %v2042 = vpop.f32.mrb[0].mxu0
  %v2043 = vadd.f32 0.0, %v2042
  %v2044 = vpop.f32.mrb[0].mxu0
  %2045 = vdwg.mxu0
  %2046 = vrot.lane.b32.xlu0 %v2032, 64
  %v2047 = vpop.permute.xlu0 %2046
  %2048 = vrot.lane.b32.xlu0 %v2035, 64
  %v2049 = vpop.permute.xlu0 %2048
  %2050 = vrot.lane.b32.xlu0 %v2040, 64
  %v2051 = vpop.permute.xlu0 %2050
  %2052 = vrot.lane.b32.xlu0 %v2043, 64
  %v2053 = vpop.permute.xlu0 %2052
  %s2054 = scalar_lea.vmem %s12, 8
  %v2055 = vld [vmem:[%s2054] sm:$0x1]
  %v2057 = vlaneseq
  %v2058 = vshrl.u32 %v2057, 7
  %v2059 = vsub.s32 0, %v2058
  %v2060 = vrot.slane %v2055, %v2059
  %v2062 = vmul.f32 %v2032, %v2060
  %v2063 = vmul.f32 %v2035, %v2060
  %v2064 = vmul.f32 %v2040, %v2060
  %v2065 = vmul.f32 %v2043, %v2060
  %v2066 = vadd.f32 %v1993, %v2062
  %v2067 = vadd.f32 %v1994, %v2063
  %v2068 = vadd.f32 %v1995, %v2064
  %v2069 = vadd.f32 %v1996, %v2065
  %s2070 = scalar_lea.vmem %s13, 8
  %v2071 = vld [vmem:[%s2070] sm:$0x1]
  %v2073 = vlaneseq
  %v2074 = vshrl.u32 %v2073, 7
  %v2075 = vsub.s32 0, %v2074
  %v2076 = vrot.slane %v2071, %v2075
  %v2078 = vmul.f32 %v2047, %v2076
  %v2079 = vmul.f32 %v2049, %v2076
  %v2080 = vmul.f32 %v2051, %v2076
  %v2081 = vmul.f32 %v2053, %v2076
  %v2082 = vadd.f32 %v2066, %v2078
  %v2083 = vadd.f32 %v2067, %v2079
  %v2084 = vadd.f32 %v2068, %v2080
  %v2085 = vadd.f32 %v2069, %v2081
  %v2086 = vld [vmem:[%s14] sm:$0x1]
  %v2088 = vlaneseq
  %v2089 = vshrl.u32 %v2088, 7
  %v2090 = vsub.s32 0, %v2089
  %v2091 = vrot.slane %v2086, %v2090
  %v2093 = vadd.f32 %v2082, %v2091
  %v2094 = vadd.f32 %v2083, %v2091
  %v2095 = vadd.f32 %v2084, %v2091
  %v2096 = vadd.f32 %v2085, %v2091
  %v2097 = vmax.f32 %v2093, 0.0
  %v2098 = vmax.f32 %v2094, 0.0
  %v2099 = vmax.f32 %v2095, 0.0
  %v2100 = vmax.f32 %v2096, 0.0
  %v2101 = vld [vmem:[%s15] sm:$0xf]
  %v2102 = vld [vmem:[%s15 + $0x4] sm:$0xf]
  %v2103 = vld [vmem:[%s15 + $0x8] sm:$0xf]
  %v2104 = vld [vmem:[%s15 + $0xc] sm:$0xf]
  %v2105 = vld [vmem:[%s15 + $0x10] sm:$0xf]
  %v2106 = vld [vmem:[%s15 + $0x14] sm:$0xf]
  %v2107 = vld [vmem:[%s15 + $0x18] sm:$0xf]
  %v2108 = vld [vmem:[%s15 + $0x1c] sm:$0xf]
  %v2109 = vld [vmem:[%s16] sm:$0x1]
  %v2111 = vlaneseq
  %v2112 = vshrl.u32 %v2111, 7
  %v2113 = vsub.s32 0, %v2112
  %v2114 = vrot.slane %v2109, %v2113
  %v2124 = vunpack.c.l.b16 %v2101
  %v2125 = vunpack.c.l.b16 %v2102
  %v2126 = vunpack.c.l.b16 %v2103
  %v2127 = vunpack.c.l.b16 %v2104
  %v2128 = vunpack.c.l.b16 %v2105
  %v2129 = vunpack.c.l.b16 %v2106
  %v2130 = vunpack.c.l.b16 %v2107
  %v2131 = vunpack.c.l.b16 %v2108
  %v2132 = vpack.c.b16 %v2125, %v2124
  %v2133 = vpack.c.b16 %v2127, %v2126
  %v2134 = vpack.c.b16 %v2129, %v2128
  %v2135 = vpack.c.b16 %v2131, %v2130
  %2140 = vmatprep.subr.bf16.mxu0 0
  %2141 = vmatpush1.bf16.msra.mxu0 %v2132
  %2142 = vmatprep.subr.bf16.mxu0 0
  %2143 = vmatpush1.bf16.msra.mxu0 %v2133
  %2144 = vmatprep.subr.bf16.mxu0 0
  %2145 = vmatpush1.bf16.msra.mxu0 %v2134
  %2146 = vmatprep.subr.bf16.mxu0 0
  %2147 = vmatpush1.bf16.msra.mxu0 %v2135
  %2148 = vmatprep.subr.bf16.mxu0 0
  %2149 = vmatpush1.bf16.msra.mxu0 0
  %2150 = vmatprep.subr.bf16.mxu0 0
  %2151 = vmatpush1.bf16.msra.mxu0 0
  %2152 = vmatprep.subr.bf16.mxu0 0
  %2153 = vmatpush1.bf16.msra.mxu0 0
  %2154 = vmatprep.subr.bf16.mxu0 0
  %2155 = vmatpush1.bf16.msra.mxu0 0
  %2156 = vmatprep.subr.bf16.mxu0 0
  %2157 = vmatpush1.bf16.msra.mxu0 0
  %2158 = vmatprep.subr.bf16.mxu0 0
  %2159 = vmatpush1.bf16.msra.mxu0 0
  %2160 = vmatprep.subr.bf16.mxu0 0
  %2161 = vmatpush1.bf16.msra.mxu0 0
  %2162 = vmatprep.subr.bf16.mxu0 0
  %2163 = vmatpush1.bf16.msra.mxu0 0
  %2164 = vmatprep.subr.bf16.mxu0 0
  %2165 = vmatpush1.bf16.msra.mxu0 0
  %2166 = vmatprep.subr.bf16.mxu0 0
  %2167 = vmatpush1.bf16.msra.mxu0 0
  %2168 = vmatprep.subr.bf16.mxu0 0
  %2169 = vmatpush1.bf16.msra.mxu0 0
  %2170 = vmatprep.subr.bf16.mxu0 0
  %2171 = vmatpush1.bf16.msra.mxu0 0
  %2172 = vmatprep.mubr.bf16.mxu0 0
  %2173 = vmatmul.mubr.bf16.gmra.mrb[0].mxu0 %v1224
  %v2174 = vpop.f32.mrb[0].mxu0
  %v2175 = vadd.f32 %v2114, %v2174
  %v2176 = vpop.f32.mrb[0].mxu0
  %v2177 = vpop.f32.mrb[0].mxu0
  %v2178 = vadd.f32 %v2114, %v2177
  %v2179 = vpop.f32.mrb[0].mxu0
  %2180 = vmatprep.mubr.bf16.mxu0 0
  %2181 = vmatmul.mubr.bf16.gmra.mrb[0].mxu0 %v1227
  %v2182 = vpop.f32.mrb[0].mxu0
  %v2183 = vadd.f32 %v2114, %v2182
  %v2184 = vpop.f32.mrb[0].mxu0
  %v2185 = vpop.f32.mrb[0].mxu0
  %v2186 = vadd.f32 %v2114, %v2185
  %v2187 = vpop.f32.mrb[0].mxu0
  %2188 = vdwg.mxu0
  %v2189 = vld [vmem:[%s17] sm:$0xf]
  %v2190 = vld [vmem:[%s17 + $0x4] sm:$0xf]
  %v2191 = vld [vmem:[%s17 + $0x8] sm:$0xf]
  %v2192 = vld [vmem:[%s17 + $0xc] sm:$0xf]
  %v2193 = vld [vmem:[%s17 + $0x10] sm:$0xf]
  %v2194 = vld [vmem:[%s17 + $0x14] sm:$0xf]
  %v2195 = vld [vmem:[%s17 + $0x18] sm:$0xf]
  %v2196 = vld [vmem:[%s17 + $0x1c] sm:$0xf]
  %v2197 = vld [vmem:[%s17 + $0x20] sm:$0xf]
  %v2198 = vld [vmem:[%s17 + $0x24] sm:$0xf]
  %v2199 = vld [vmem:[%s17 + $0x28] sm:$0xf]
  %v2200 = vld [vmem:[%s17 + $0x2c] sm:$0xf]
  %v2201 = vld [vmem:[%s17 + $0x30] sm:$0xf]
  %v2202 = vld [vmem:[%s17 + $0x34] sm:$0xf]
  %v2203 = vld [vmem:[%s17 + $0x38] sm:$0xf]
  %v2204 = vld [vmem:[%s17 + $0x3c] sm:$0xf]
  %v2205 = vpack.c.bf16 %v2098, %v2097
  %v2206 = vpack.c.bf16 %v2100, %v2099
  %v2207 = vld [vmem:[%s18] sm:$0x1]
  %v2209 = vlaneseq
  %v2210 = vshrl.u32 %v2209, 7
  %v2211 = vsub.s32 0, %v2210
  %v2212 = vrot.slane %v2207, %v2211
  %v2230 = vunpack.c.l.b16 %v2189
  %v2231 = vunpack.c.l.b16 %v2190
  %v2232 = vunpack.c.l.b16 %v2191
  %v2233 = vunpack.c.l.b16 %v2192
  %v2234 = vunpack.c.l.b16 %v2193
  %v2235 = vunpack.c.l.b16 %v2194
  %v2236 = vunpack.c.l.b16 %v2195
  %v2237 = vunpack.c.l.b16 %v2196
  %v2238 = vunpack.c.l.b16 %v2197
  %v2239 = vunpack.c.l.b16 %v2198
  %v2240 = vunpack.c.l.b16 %v2199
  %v2241 = vunpack.c.l.b16 %v2200
  %v2242 = vunpack.c.l.b16 %v2201
  %v2243 = vunpack.c.l.b16 %v2202
  %v2244 = vunpack.c.l.b16 %v2203
  %v2245 = vunpack.c.l.b16 %v2204
  %v2246 = vpack.c.b16 %v2231, %v2230
  %v2247 = vpack.c.b16 %v2233, %v2232
  %v2248 = vpack.c.b16 %v2235, %v2234
  %v2249 = vpack.c.b16 %v2237, %v2236
  %v2250 = vpack.c.b16 %v2239, %v2238
  %v2251 = vpack.c.b16 %v2241, %v2240
  %v2252 = vpack.c.b16 %v2243, %v2242
  %v2253 = vpack.c.b16 %v2245, %v2244
  %2262 = vmatprep.subr.bf16.mxu0 0
  %2263 = vmatpush1.bf16.msra.mxu0 %v2246
  %2264 = vmatprep.subr.bf16.mxu0 0
  %2265 = vmatpush1.bf16.msra.mxu0 %v2247
  %2266 = vmatprep.subr.bf16.mxu0 0
  %2267 = vmatpush1.bf16.msra.mxu0 %v2248
  %2268 = vmatprep.subr.bf16.mxu0 0
  %2269 = vmatpush1.bf16.msra.mxu0 %v2249
  %2270 = vmatprep.subr.bf16.mxu0 0
  %2271 = vmatpush1.bf16.msra.mxu0 %v2250
  %2272 = vmatprep.subr.bf16.mxu0 0
  %2273 = vmatpush1.bf16.msra.mxu0 %v2251
  %2274 = vmatprep.subr.bf16.mxu0 0
  %2275 = vmatpush1.bf16.msra.mxu0 %v2252
  %2276 = vmatprep.subr.bf16.mxu0 0
  %2277 = vmatpush1.bf16.msra.mxu0 %v2253
  %2278 = vmatprep.subr.bf16.mxu0 0
  %2279 = vmatpush1.bf16.msra.mxu0 0
  %2280 = vmatprep.subr.bf16.mxu0 0
  %2281 = vmatpush1.bf16.msra.mxu0 0
  %2282 = vmatprep.subr.bf16.mxu0 0
  %2283 = vmatpush1.bf16.msra.mxu0 0
  %2284 = vmatprep.subr.bf16.mxu0 0
  %2285 = vmatpush1.bf16.msra.mxu0 0
  %2286 = vmatprep.subr.bf16.mxu0 0
  %2287 = vmatpush1.bf16.msra.mxu0 0
  %2288 = vmatprep.subr.bf16.mxu0 0
  %2289 = vmatpush1.bf16.msra.mxu0 0
  %2290 = vmatprep.subr.bf16.mxu0 0
  %2291 = vmatpush1.bf16.msra.mxu0 0
  %2292 = vmatprep.subr.bf16.mxu0 0
  %2293 = vmatpush1.bf16.msra.mxu0 0
  %2294 = vmatprep.mubr.bf16.mxu0 0
  %2295 = vmatmul.mubr.bf16.gmra.mrb[0].mxu0 %v2205
  %v2296 = vpop.f32.mrb[0].mxu0
  %v2297 = vadd.f32 %v2212, %v2296
  %v2298 = vpop.f32.mrb[0].mxu0
  %v2299 = vpop.f32.mrb[0].mxu0
  %v2300 = vadd.f32 %v2212, %v2299
  %v2301 = vpop.f32.mrb[0].mxu0
  %2302 = vmatprep.mubr.bf16.mxu0 0
  %2303 = vmatmul.mubr.bf16.gmra.mrb[0].mxu0 %v2206
  %v2304 = vpop.f32.mrb[0].mxu0
  %v2305 = vadd.f32 %v2212, %v2304
  %v2306 = vpop.f32.mrb[0].mxu0
  %v2307 = vpop.f32.mrb[0].mxu0
  %v2308 = vadd.f32 %v2212, %v2307
  %v2309 = vpop.f32.mrb[0].mxu0
  %2310 = vdwg.mxu0
  %v2311 = vadd.f32 %v2297, %v2175
  %v2312 = vadd.f32 %v2300, %v2178
  %v2313 = vadd.f32 %v2305, %v2183
  %v2314 = vadd.f32 %v2308, %v2186
  %v2315 = vmax.f32 %v2311, 0.0
  %v2316 = vmax.f32 %v2312, 0.0
  %v2317 = vmax.f32 %v2313, 0.0
  %v2318 = vmax.f32 %v2314, 0.0
  %v2319 = vpack.c.bf16 %v2316, %v2315
  %v2320 = vpack.c.bf16 %v2318, %v2317
  %v2321 = vld [vmem:[%s19] sm:$0x1]
  %v2323 = vsel %vm300, %v2321, 0
  %v2326 = vsel %vm307, %v2320, 0
  %2328 = vmatprep.subr.bf16.mxu0 0
  %2329 = vmatpush1.bf16.msra.mxu0 %v2319
  %2330 = vmatprep.subr.bf16.mxu0 0
  %2331 = vmatpush1.bf16.msra.mxu0 %v2326
  %2332 = vmatprep.subr.bf16.mxu0 0
  %2333 = vmatpush1.bf16.msra.mxu0 0
  %2334 = vmatprep.subr.bf16.mxu0 0
  %2335 = vmatpush1.bf16.msra.mxu0 0
  %2336 = vmatprep.subr.bf16.mxu0 0
  %2337 = vmatpush1.bf16.msra.mxu0 0
  %2338 = vmatprep.subr.bf16.mxu0 0
  %2339 = vmatpush1.bf16.msra.mxu0 0
  %2340 = vmatprep.subr.bf16.mxu0 0
  %2341 = vmatpush1.bf16.msra.mxu0 0
  %2342 = vmatprep.subr.bf16.mxu0 0
  %2343 = vmatpush1.bf16.msra.mxu0 0
  %2344 = vmatprep.subr.bf16.mxu0 0
  %2345 = vmatpush1.bf16.msra.mxu0 0
  %2346 = vmatprep.subr.bf16.mxu0 0
  %2347 = vmatpush1.bf16.msra.mxu0 0
  %2348 = vmatprep.subr.bf16.mxu0 0
  %2349 = vmatpush1.bf16.msra.mxu0 0
  %2350 = vmatprep.subr.bf16.mxu0 0
  %2351 = vmatpush1.bf16.msra.mxu0 0
  %2352 = vmatprep.subr.bf16.mxu0 0
  %2353 = vmatpush1.bf16.msra.mxu0 0
  %2354 = vmatprep.subr.bf16.mxu0 0
  %2355 = vmatpush1.bf16.msra.mxu0 0
  %2356 = vmatprep.subr.bf16.mxu0 0
  %2357 = vmatpush1.bf16.msra.mxu0 0
  %2358 = vmatprep.subr.bf16.mxu0 0
  %2359 = vmatpush1.bf16.msra.mxu0 0
  %2360 = vmatprep.mubr.bf16.mxu0 0
  %2361 = vmatmul.mubr.bf16.gmra.mrb[0].mxu0 %v2323
  %v2362 = vpop.f32.mrb[0].mxu0
  %v2363 = vadd.f32 0.0, %v2362
  %v2364 = vpop.f32.mrb[0].mxu0
  %v2365 = vpop.f32.mrb[0].mxu0
  %v2366 = vpop.f32.mrb[0].mxu0
  %2367 = vdwg.mxu0
  %v2368 = vpack.c.bf16 %v2363, %v2363
  %v2369 = vld [vmem:[%s20] sm:$0xf]
  %v2370 = vld [vmem:[%s20 + $0x4] sm:$0xf]
  %v2371 = vld [vmem:[%s20 + $0x8] sm:$0xf]
  %v2372 = vld [vmem:[%s20 + $0xc] sm:$0xf]
  %v2373 = vld [vmem:[%s20 + $0x10] sm:$0xf]
  %v2374 = vld [vmem:[%s20 + $0x14] sm:$0xf]
  %v2375 = vld [vmem:[%s20 + $0x18] sm:$0xf]
  %v2376 = vld [vmem:[%s20 + $0x1c] sm:$0xf]
  %v2377 = vld [vmem:[%s20 + $0x20] sm:$0xf]
  %v2378 = vld [vmem:[%s20 + $0x24] sm:$0xf]
  %v2379 = vld [vmem:[%s20 + $0x28] sm:$0xf]
  %v2380 = vld [vmem:[%s20 + $0x2c] sm:$0xf]
  %v2381 = vld [vmem:[%s20 + $0x30] sm:$0xf]
  %v2382 = vld [vmem:[%s20 + $0x34] sm:$0xf]
  %v2383 = vld [vmem:[%s20 + $0x38] sm:$0xf]
  %v2384 = vld [vmem:[%s20 + $0x3c] sm:$0xf]
  %s2385 = scalar_lea.vmem %s19, 1
  %v2386 = vld [vmem:[%s2385] sm:$0x1]
  %v2388 = vsel %vm300, %v2386, 0
  %2390 = vmatprep.subr.bf16.mxu0 0
  %2391 = vmatpush1.bf16.msra.mxu0 %v2319
  %2392 = vmatprep.subr.bf16.mxu0 0
  %2393 = vmatpush1.bf16.msra.mxu0 %v2326
  %2394 = vmatprep.subr.bf16.mxu0 0
  %2395 = vmatpush1.bf16.msra.mxu0 0
  %2396 = vmatprep.subr.bf16.mxu0 0
  %2397 = vmatpush1.bf16.msra.mxu0 0
  %2398 = vmatprep.subr.bf16.mxu0 0
  %2399 = vmatpush1.bf16.msra.mxu0 0
  %2400 = vmatprep.subr.bf16.mxu0 0
  %2401 = vmatpush1.bf16.msra.mxu0 0
  %2402 = vmatprep.subr.bf16.mxu0 0
  %2403 = vmatpush1.bf16.msra.mxu0 0
  %2404 = vmatprep.subr.bf16.mxu0 0
  %2405 = vmatpush1.bf16.msra.mxu0 0
  %2406 = vmatprep.subr.bf16.mxu0 0
  %2407 = vmatpush1.bf16.msra.mxu0 0
  %2408 = vmatprep.subr.bf16.mxu0 0
  %2409 = vmatpush1.bf16.msra.mxu0 0
  %2410 = vmatprep.subr.bf16.mxu0 0
  %2411 = vmatpush1.bf16.msra.mxu0 0
  %2412 = vmatprep.subr.bf16.mxu0 0
  %2413 = vmatpush1.bf16.msra.mxu0 0
  %2414 = vmatprep.subr.bf16.mxu0 0
  %2415 = vmatpush1.bf16.msra.mxu0 0
  %2416 = vmatprep.subr.bf16.mxu0 0
  %2417 = vmatpush1.bf16.msra.mxu0 0
  %2418 = vmatprep.subr.bf16.mxu0 0
  %2419 = vmatpush1.bf16.msra.mxu0 0
  %2420 = vmatprep.subr.bf16.mxu0 0
  %2421 = vmatpush1.bf16.msra.mxu0 0
  %2422 = vmatprep.mubr.bf16.mxu0 0
  %2423 = vmatmul.mubr.bf16.gmra.mrb[0].mxu0 %v2388
  %v2424 = vpop.f32.mrb[0].mxu0
  %v2425 = vadd.f32 0.0, %v2424
  %v2426 = vpop.f32.mrb[0].mxu0
  %v2427 = vpop.f32.mrb[0].mxu0
  %v2428 = vpop.f32.mrb[0].mxu0
  %2429 = vdwg.mxu0
  %v2430 = vpack.c.bf16 %v2425, %v2425
  %s2431 = scalar_lea.vmem %s20, 64
  %v2432 = vld [vmem:[%s2431] sm:$0xf]
  %v2433 = vld [vmem:[%s2431 + $0x4] sm:$0xf]
  %v2434 = vld [vmem:[%s2431 + $0x8] sm:$0xf]
  %v2435 = vld [vmem:[%s2431 + $0xc] sm:$0xf]
  %v2436 = vld [vmem:[%s2431 + $0x10] sm:$0xf]
  %v2437 = vld [vmem:[%s2431 + $0x14] sm:$0xf]
  %v2438 = vld [vmem:[%s2431 + $0x18] sm:$0xf]
  %v2439 = vld [vmem:[%s2431 + $0x1c] sm:$0xf]
  %v2440 = vld [vmem:[%s2431 + $0x20] sm:$0xf]
  %v2441 = vld [vmem:[%s2431 + $0x24] sm:$0xf]
  %v2442 = vld [vmem:[%s2431 + $0x28] sm:$0xf]
  %v2443 = vld [vmem:[%s2431 + $0x2c] sm:$0xf]
  %v2444 = vld [vmem:[%s2431 + $0x30] sm:$0xf]
  %v2445 = vld [vmem:[%s2431 + $0x34] sm:$0xf]
  %v2446 = vld [vmem:[%s2431 + $0x38] sm:$0xf]
  %v2447 = vld [vmem:[%s2431 + $0x3c] sm:$0xf]
  %v2464 = vunpack.c.l.b16 %v2432
  %v2465 = vunpack.c.l.b16 %v2433
  %v2466 = vunpack.c.l.b16 %v2434
  %v2467 = vunpack.c.l.b16 %v2435
  %v2468 = vunpack.c.l.b16 %v2436
  %v2469 = vunpack.c.l.b16 %v2437
  %v2470 = vunpack.c.l.b16 %v2438
  %v2471 = vunpack.c.l.b16 %v2439
  %v2472 = vunpack.c.l.b16 %v2440
  %v2473 = vunpack.c.l.b16 %v2441
  %v2474 = vunpack.c.l.b16 %v2442
  %v2475 = vunpack.c.l.b16 %v2443
  %v2476 = vunpack.c.l.b16 %v2444
  %v2477 = vunpack.c.l.b16 %v2445
  %v2478 = vunpack.c.l.b16 %v2446
  %v2479 = vunpack.c.l.b16 %v2447
  %v2480 = vpack.c.b16 %v2465, %v2464
  %v2481 = vpack.c.b16 %v2467, %v2466
  %v2482 = vpack.c.b16 %v2469, %v2468
  %v2483 = vpack.c.b16 %v2471, %v2470
  %v2484 = vpack.c.b16 %v2473, %v2472
  %v2485 = vpack.c.b16 %v2475, %v2474
  %v2486 = vpack.c.b16 %v2477, %v2476
  %v2487 = vpack.c.b16 %v2479, %v2478
  %2496 = vmatprep.subr.bf16.mxu0 0
  %2497 = vmatpush1.bf16.msra.mxu0 %v2480
  %2498 = vmatprep.subr.bf16.mxu0 0
  %2499 = vmatpush1.bf16.msra.mxu0 %v2481
  %2500 = vmatprep.subr.bf16.mxu0 0
  %2501 = vmatpush1.bf16.msra.mxu0 %v2482
  %2502 = vmatprep.subr.bf16.mxu0 0
  %2503 = vmatpush1.bf16.msra.mxu0 %v2483
  %2504 = vmatprep.subr.bf16.mxu0 0
  %2505 = vmatpush1.bf16.msra.mxu0 %v2484
  %2506 = vmatprep.subr.bf16.mxu0 0
  %2507 = vmatpush1.bf16.msra.mxu0 %v2485
  %2508 = vmatprep.subr.bf16.mxu0 0
  %2509 = vmatpush1.bf16.msra.mxu0 %v2486
  %2510 = vmatprep.subr.bf16.mxu0 0
  %2511 = vmatpush1.bf16.msra.mxu0 %v2487
  %2512 = vmatprep.subr.bf16.mxu0 0
  %2513 = vmatpush1.bf16.msra.mxu0 0
  %2514 = vmatprep.subr.bf16.mxu0 0
  %2515 = vmatpush1.bf16.msra.mxu0 0
  %2516 = vmatprep.subr.bf16.mxu0 0
  %2517 = vmatpush1.bf16.msra.mxu0 0
  %2518 = vmatprep.subr.bf16.mxu0 0
  %2519 = vmatpush1.bf16.msra.mxu0 0
  %2520 = vmatprep.subr.bf16.mxu0 0
  %2521 = vmatpush1.bf16.msra.mxu0 0
  %2522 = vmatprep.subr.bf16.mxu0 0
  %2523 = vmatpush1.bf16.msra.mxu0 0
  %2524 = vmatprep.subr.bf16.mxu0 0
  %2525 = vmatpush1.bf16.msra.mxu0 0
  %2526 = vmatprep.subr.bf16.mxu0 0
  %2527 = vmatpush1.bf16.msra.mxu0 0
  %2528 = vmatprep.mubr.bf16.mxu0 0
  %2529 = vmatmul.mubr.bf16.gmra.mrb[0].mxu0 %v2430
  %v2530 = vpop.f32.mrb[0].mxu0
  %v2531 = vadd.f32 0.0, %v2530
  %v2532 = vpop.f32.mrb[0].mxu0
  %v2533 = vpop.f32.mrb[0].mxu0
  %v2534 = vpop.f32.mrb[0].mxu0
  %2535 = vdwg.mxu0
  %v2552 = vunpack.c.l.b16 %v2369
  %v2553 = vunpack.c.l.b16 %v2370
  %v2554 = vunpack.c.l.b16 %v2371
  %v2555 = vunpack.c.l.b16 %v2372
  %v2556 = vunpack.c.l.b16 %v2373
  %v2557 = vunpack.c.l.b16 %v2374
  %v2558 = vunpack.c.l.b16 %v2375
  %v2559 = vunpack.c.l.b16 %v2376
  %v2560 = vunpack.c.l.b16 %v2377
  %v2561 = vunpack.c.l.b16 %v2378
  %v2562 = vunpack.c.l.b16 %v2379
  %v2563 = vunpack.c.l.b16 %v2380
  %v2564 = vunpack.c.l.b16 %v2381
  %v2565 = vunpack.c.l.b16 %v2382
  %v2566 = vunpack.c.l.b16 %v2383
  %v2567 = vunpack.c.l.b16 %v2384
  %v2568 = vpack.c.b16 %v2553, %v2552
  %v2569 = vpack.c.b16 %v2555, %v2554
  %v2570 = vpack.c.b16 %v2557, %v2556
  %v2571 = vpack.c.b16 %v2559, %v2558
  %v2572 = vpack.c.b16 %v2561, %v2560
  %v2573 = vpack.c.b16 %v2563, %v2562
  %v2574 = vpack.c.b16 %v2565, %v2564
  %v2575 = vpack.c.b16 %v2567, %v2566
  %2584 = vmatprep.subr.bf16.mxu0 0
  %2585 = vmatpush1.bf16.msra.mxu0 %v2568
  %2586 = vmatprep.subr.bf16.mxu0 0
  %2587 = vmatpush1.bf16.msra.mxu0 %v2569
  %2588 = vmatprep.subr.bf16.mxu0 0
  %2589 = vmatpush1.bf16.msra.mxu0 %v2570
  %2590 = vmatprep.subr.bf16.mxu0 0
  %2591 = vmatpush1.bf16.msra.mxu0 %v2571
  %2592 = vmatprep.subr.bf16.mxu0 0
  %2593 = vmatpush1.bf16.msra.mxu0 %v2572
  %2594 = vmatprep.subr.bf16.mxu0 0
  %2595 = vmatpush1.bf16.msra.mxu0 %v2573
  %2596 = vmatprep.subr.bf16.mxu0 0
  %2597 = vmatpush1.bf16.msra.mxu0 %v2574
  %2598 = vmatprep.subr.bf16.mxu0 0
  %2599 = vmatpush1.bf16.msra.mxu0 %v2575
  %2600 = vmatprep.subr.bf16.mxu0 0
  %2601 = vmatpush1.bf16.msra.mxu0 0
  %2602 = vmatprep.subr.bf16.mxu0 0
  %2603 = vmatpush1.bf16.msra.mxu0 0
  %2604 = vmatprep.subr.bf16.mxu0 0
  %2605 = vmatpush1.bf16.msra.mxu0 0
  %2606 = vmatprep.subr.bf16.mxu0 0
  %2607 = vmatpush1.bf16.msra.mxu0 0
  %2608 = vmatprep.subr.bf16.mxu0 0
  %2609 = vmatpush1.bf16.msra.mxu0 0
  %2610 = vmatprep.subr.bf16.mxu0 0
  %2611 = vmatpush1.bf16.msra.mxu0 0
  %2612 = vmatprep.subr.bf16.mxu0 0
  %2613 = vmatpush1.bf16.msra.mxu0 0
  %2614 = vmatprep.subr.bf16.mxu0 0
  %2615 = vmatpush1.bf16.msra.mxu0 0
  %2616 = vmatprep.mubr.bf16.mxu0 0
  %2617 = vmatmul.mubr.bf16.gmra.mrb[0].mxu0 %v2368
  %v2618 = vpop.f32.mrb[0].mxu0
  %v2619 = vadd.f32 %v2531, %v2618
  %v2620 = vpop.f32.mrb[0].mxu0
  %v2621 = vpop.f32.mrb[0].mxu0
  %v2622 = vpop.f32.mrb[0].mxu0
  %2623 = vdwg.mxu0
  %s2624 = scalar_lea.vmem %s19, 2
  %v2625 = vld [vmem:[%s2624] sm:$0x1]
  %v2627 = vsel %vm300, %v2625, 0
  %2629 = vmatprep.subr.bf16.mxu0 0
  %2630 = vmatpush1.bf16.msra.mxu0 %v2319
  %2631 = vmatprep.subr.bf16.mxu0 0
  %2632 = vmatpush1.bf16.msra.mxu0 %v2326
  %2633 = vmatprep.subr.bf16.mxu0 0
  %2634 = vmatpush1.bf16.msra.mxu0 0
  %2635 = vmatprep.subr.bf16.mxu0 0
  %2636 = vmatpush1.bf16.msra.mxu0 0
  %2637 = vmatprep.subr.bf16.mxu0 0
  %2638 = vmatpush1.bf16.msra.mxu0 0
  %2639 = vmatprep.subr.bf16.mxu0 0
  %2640 = vmatpush1.bf16.msra.mxu0 0
  %2641 = vmatprep.subr.bf16.mxu0 0
  %2642 = vmatpush1.bf16.msra.mxu0 0
  %2643 = vmatprep.subr.bf16.mxu0 0
  %2644 = vmatpush1.bf16.msra.mxu0 0
  %2645 = vmatprep.subr.bf16.mxu0 0
  %2646 = vmatpush1.bf16.msra.mxu0 0
  %2647 = vmatprep.subr.bf16.mxu0 0
  %2648 = vmatpush1.bf16.msra.mxu0 0
  %2649 = vmatprep.subr.bf16.mxu0 0
  %2650 = vmatpush1.bf16.msra.mxu0 0
  %2651 = vmatprep.subr.bf16.mxu0 0
  %2652 = vmatpush1.bf16.msra.mxu0 0
  %2653 = vmatprep.subr.bf16.mxu0 0
  %2654 = vmatpush1.bf16.msra.mxu0 0
  %2655 = vmatprep.subr.bf16.mxu0 0
  %2656 = vmatpush1.bf16.msra.mxu0 0
  %2657 = vmatprep.subr.bf16.mxu0 0
  %2658 = vmatpush1.bf16.msra.mxu0 0
  %2659 = vmatprep.subr.bf16.mxu0 0
  %2660 = vmatpush1.bf16.msra.mxu0 0
  %2661 = vmatprep.mubr.bf16.mxu0 0
  %2662 = vmatmul.mubr.bf16.gmra.mrb[0].mxu0 %v2627
  %v2663 = vpop.f32.mrb[0].mxu0
  %v2664 = vadd.f32 0.0, %v2663
  %v2665 = vpop.f32.mrb[0].mxu0
  %v2666 = vpop.f32.mrb[0].mxu0
  %v2667 = vpop.f32.mrb[0].mxu0
  %2668 = vdwg.mxu0
  %v2669 = vpack.c.bf16 %v2664, %v2664
  %s2670 = scalar_lea.vmem %s20, 128
  %v2671 = vld [vmem:[%s2670] sm:$0xf]
  %v2672 = vld [vmem:[%s2670 + $0x4] sm:$0xf]
  %v2673 = vld [vmem:[%s2670 + $0x8] sm:$0xf]
  %v2674 = vld [vmem:[%s2670 + $0xc] sm:$0xf]
  %v2675 = vld [vmem:[%s2670 + $0x10] sm:$0xf]
  %v2676 = vld [vmem:[%s2670 + $0x14] sm:$0xf]
  %v2677 = vld [vmem:[%s2670 + $0x18] sm:$0xf]
  %v2678 = vld [vmem:[%s2670 + $0x1c] sm:$0xf]
  %v2679 = vld [vmem:[%s2670 + $0x20] sm:$0xf]
  %v2680 = vld [vmem:[%s2670 + $0x24] sm:$0xf]
  %v2681 = vld [vmem:[%s2670 + $0x28] sm:$0xf]
  %v2682 = vld [vmem:[%s2670 + $0x2c] sm:$0xf]
  %v2683 = vld [vmem:[%s2670 + $0x30] sm:$0xf]
  %v2684 = vld [vmem:[%s2670 + $0x34] sm:$0xf]
  %v2685 = vld [vmem:[%s2670 + $0x38] sm:$0xf]
  %v2686 = vld [vmem:[%s2670 + $0x3c] sm:$0xf]
  %v2703 = vunpack.c.l.b16 %v2671
  %v2704 = vunpack.c.l.b16 %v2672
  %v2705 = vunpack.c.l.b16 %v2673
  %v2706 = vunpack.c.l.b16 %v2674
  %v2707 = vunpack.c.l.b16 %v2675
  %v2708 = vunpack.c.l.b16 %v2676
  %v2709 = vunpack.c.l.b16 %v2677
  %v2710 = vunpack.c.l.b16 %v2678
  %v2711 = vunpack.c.l.b16 %v2679
  %v2712 = vunpack.c.l.b16 %v2680
  %v2713 = vunpack.c.l.b16 %v2681
  %v2714 = vunpack.c.l.b16 %v2682
  %v2715 = vunpack.c.l.b16 %v2683
  %v2716 = vunpack.c.l.b16 %v2684
  %v2717 = vunpack.c.l.b16 %v2685
  %v2718 = vunpack.c.l.b16 %v2686
  %v2719 = vpack.c.b16 %v2704, %v2703
  %v2720 = vpack.c.b16 %v2706, %v2705
  %v2721 = vpack.c.b16 %v2708, %v2707
  %v2722 = vpack.c.b16 %v2710, %v2709
  %v2723 = vpack.c.b16 %v2712, %v2711
  %v2724 = vpack.c.b16 %v2714, %v2713
  %v2725 = vpack.c.b16 %v2716, %v2715
  %v2726 = vpack.c.b16 %v2718, %v2717
  %2735 = vmatprep.subr.bf16.mxu0 0
  %2736 = vmatpush1.bf16.msra.mxu0 %v2719
  %2737 = vmatprep.subr.bf16.mxu0 0
  %2738 = vmatpush1.bf16.msra.mxu0 %v2720
  %2739 = vmatprep.subr.bf16.mxu0 0
  %2740 = vmatpush1.bf16.msra.mxu0 %v2721
  %2741 = vmatprep.subr.bf16.mxu0 0
  %2742 = vmatpush1.bf16.msra.mxu0 %v2722
  %2743 = vmatprep.subr.bf16.mxu0 0
  %2744 = vmatpush1.bf16.msra.mxu0 %v2723
  %2745 = vmatprep.subr.bf16.mxu0 0
  %2746 = vmatpush1.bf16.msra.mxu0 %v2724
  %2747 = vmatprep.subr.bf16.mxu0 0
  %2748 = vmatpush1.bf16.msra.mxu0 %v2725
  %2749 = vmatprep.subr.bf16.mxu0 0
  %2750 = vmatpush1.bf16.msra.mxu0 %v2726
  %2751 = vmatprep.subr.bf16.mxu0 0
  %2752 = vmatpush1.bf16.msra.mxu0 0
  %2753 = vmatprep.subr.bf16.mxu0 0
  %2754 = vmatpush1.bf16.msra.mxu0 0
  %2755 = vmatprep.subr.bf16.mxu0 0
  %2756 = vmatpush1.bf16.msra.mxu0 0
  %2757 = vmatprep.subr.bf16.mxu0 0
  %2758 = vmatpush1.bf16.msra.mxu0 0
  %2759 = vmatprep.subr.bf16.mxu0 0
  %2760 = vmatpush1.bf16.msra.mxu0 0
  %2761 = vmatprep.subr.bf16.mxu0 0
  %2762 = vmatpush1.bf16.msra.mxu0 0
  %2763 = vmatprep.subr.bf16.mxu0 0
  %2764 = vmatpush1.bf16.msra.mxu0 0
  %2765 = vmatprep.subr.bf16.mxu0 0
  %2766 = vmatpush1.bf16.msra.mxu0 0
  %2767 = vmatprep.mubr.bf16.mxu0 0
  %2768 = vmatmul.mubr.bf16.gmra.mrb[0].mxu0 %v2669
  %v2769 = vpop.f32.mrb[0].mxu0
  %v2770 = vadd.f32 0.0, %v2769
  %v2771 = vpop.f32.mrb[0].mxu0
  %v2772 = vpop.f32.mrb[0].mxu0
  %v2773 = vpop.f32.mrb[0].mxu0
  %2774 = vdwg.mxu0
  %v2775 = vadd.f32 %v2619, %v2770
  %s2776 = scalar_lea.vmem %s19, 3
  %v2777 = vld [vmem:[%s2776] sm:$0x1]
  %v2779 = vsel %vm300, %v2777, 0
  %2781 = vmatprep.subr.bf16.mxu0 0
  %2782 = vmatpush1.bf16.msra.mxu0 %v2319
  %2783 = vmatprep.subr.bf16.mxu0 0
  %2784 = vmatpush1.bf16.msra.mxu0 %v2326
  %2785 = vmatprep.subr.bf16.mxu0 0
  %2786 = vmatpush1.bf16.msra.mxu0 0
  %2787 = vmatprep.subr.bf16.mxu0 0
  %2788 = vmatpush1.bf16.msra.mxu0 0
  %2789 = vmatprep.subr.bf16.mxu0 0
  %2790 = vmatpush1.bf16.msra.mxu0 0
  %2791 = vmatprep.subr.bf16.mxu0 0
  %2792 = vmatpush1.bf16.msra.mxu0 0
  %2793 = vmatprep.subr.bf16.mxu0 0
  %2794 = vmatpush1.bf16.msra.mxu0 0
  %2795 = vmatprep.subr.bf16.mxu0 0
  %2796 = vmatpush1.bf16.msra.mxu0 0
  %2797 = vmatprep.subr.bf16.mxu0 0
  %2798 = vmatpush1.bf16.msra.mxu0 0
  %2799 = vmatprep.subr.bf16.mxu0 0
  %2800 = vmatpush1.bf16.msra.mxu0 0
  %2801 = vmatprep.subr.bf16.mxu0 0
  %2802 = vmatpush1.bf16.msra.mxu0 0
  %2803 = vmatprep.subr.bf16.mxu0 0
  %2804 = vmatpush1.bf16.msra.mxu0 0
  %2805 = vmatprep.subr.bf16.mxu0 0
  %2806 = vmatpush1.bf16.msra.mxu0 0
  %2807 = vmatprep.subr.bf16.mxu0 0
  %2808 = vmatpush1.bf16.msra.mxu0 0
  %2809 = vmatprep.subr.bf16.mxu0 0
  %2810 = vmatpush1.bf16.msra.mxu0 0
  %2811 = vmatprep.subr.bf16.mxu0 0
  %2812 = vmatpush1.bf16.msra.mxu0 0
  %2813 = vmatprep.mubr.bf16.mxu0 0
  %2814 = vmatmul.mubr.bf16.gmra.mrb[0].mxu0 %v2779
  %v2815 = vpop.f32.mrb[0].mxu0
  %v2816 = vadd.f32 0.0, %v2815
  %v2817 = vpop.f32.mrb[0].mxu0
  %v2818 = vpop.f32.mrb[0].mxu0
  %v2819 = vpop.f32.mrb[0].mxu0
  %2820 = vdwg.mxu0
  %v2821 = vpack.c.bf16 %v2816, %v2816
  %s2822 = scalar_lea.vmem %s20, 192
  %v2823 = vld [vmem:[%s2822] sm:$0xf]
  %v2824 = vld [vmem:[%s2822 + $0x4] sm:$0xf]
  %v2825 = vld [vmem:[%s2822 + $0x8] sm:$0xf]
  %v2826 = vld [vmem:[%s2822 + $0xc] sm:$0xf]
  %v2827 = vld [vmem:[%s2822 + $0x10] sm:$0xf]
  %v2828 = vld [vmem:[%s2822 + $0x14] sm:$0xf]
  %v2829 = vld [vmem:[%s2822 + $0x18] sm:$0xf]
  %v2830 = vld [vmem:[%s2822 + $0x1c] sm:$0xf]
  %v2831 = vld [vmem:[%s2822 + $0x20] sm:$0xf]
  %v2832 = vld [vmem:[%s2822 + $0x24] sm:$0xf]
  %v2833 = vld [vmem:[%s2822 + $0x28] sm:$0xf]
  %v2834 = vld [vmem:[%s2822 + $0x2c] sm:$0xf]
  %v2835 = vld [vmem:[%s2822 + $0x30] sm:$0xf]
  %v2836 = vld [vmem:[%s2822 + $0x34] sm:$0xf]
  %v2837 = vld [vmem:[%s2822 + $0x38] sm:$0xf]
  %v2838 = vld [vmem:[%s2822 + $0x3c] sm:$0xf]
  %v2855 = vunpack.c.l.b16 %v2823
  %v2856 = vunpack.c.l.b16 %v2824
  %v2857 = vunpack.c.l.b16 %v2825
  %v2858 = vunpack.c.l.b16 %v2826
  %v2859 = vunpack.c.l.b16 %v2827
  %v2860 = vunpack.c.l.b16 %v2828
  %v2861 = vunpack.c.l.b16 %v2829
  %v2862 = vunpack.c.l.b16 %v2830
  %v2863 = vunpack.c.l.b16 %v2831
  %v2864 = vunpack.c.l.b16 %v2832
  %v2865 = vunpack.c.l.b16 %v2833
  %v2866 = vunpack.c.l.b16 %v2834
  %v2867 = vunpack.c.l.b16 %v2835
  %v2868 = vunpack.c.l.b16 %v2836
  %v2869 = vunpack.c.l.b16 %v2837
  %v2870 = vunpack.c.l.b16 %v2838
  %v2871 = vpack.c.b16 %v2856, %v2855
  %v2872 = vpack.c.b16 %v2858, %v2857
  %v2873 = vpack.c.b16 %v2860, %v2859
  %v2874 = vpack.c.b16 %v2862, %v2861
  %v2875 = vpack.c.b16 %v2864, %v2863
  %v2876 = vpack.c.b16 %v2866, %v2865
  %v2877 = vpack.c.b16 %v2868, %v2867
  %v2878 = vpack.c.b16 %v2870, %v2869
  %2887 = vmatprep.subr.bf16.mxu0 0
  %2888 = vmatpush1.bf16.msra.mxu0 %v2871
  %2889 = vmatprep.subr.bf16.mxu0 0
  %2890 = vmatpush1.bf16.msra.mxu0 %v2872
  %2891 = vmatprep.subr.bf16.mxu0 0
  %2892 = vmatpush1.bf16.msra.mxu0 %v2873
  %2893 = vmatprep.subr.bf16.mxu0 0
  %2894 = vmatpush1.bf16.msra.mxu0 %v2874
  %2895 = vmatprep.subr.bf16.mxu0 0
  %2896 = vmatpush1.bf16.msra.mxu0 %v2875
  %2897 = vmatprep.subr.bf16.mxu0 0
  %2898 = vmatpush1.bf16.msra.mxu0 %v2876
  %2899 = vmatprep.subr.bf16.mxu0 0
  %2900 = vmatpush1.bf16.msra.mxu0 %v2877
  %2901 = vmatprep.subr.bf16.mxu0 0
  %2902 = vmatpush1.bf16.msra.mxu0 %v2878
  %2903 = vmatprep.subr.bf16.mxu0 0
  %2904 = vmatpush1.bf16.msra.mxu0 0
  %2905 = vmatprep.subr.bf16.mxu0 0
  %2906 = vmatpush1.bf16.msra.mxu0 0
  %2907 = vmatprep.subr.bf16.mxu0 0
  %2908 = vmatpush1.bf16.msra.mxu0 0
  %2909 = vmatprep.subr.bf16.mxu0 0
  %2910 = vmatpush1.bf16.msra.mxu0 0
  %2911 = vmatprep.subr.bf16.mxu0 0
  %2912 = vmatpush1.bf16.msra.mxu0 0
  %2913 = vmatprep.subr.bf16.mxu0 0
  %2914 = vmatpush1.bf16.msra.mxu0 0
  %2915 = vmatprep.subr.bf16.mxu0 0
  %2916 = vmatpush1.bf16.msra.mxu0 0
  %2917 = vmatprep.subr.bf16.mxu0 0
  %2918 = vmatpush1.bf16.msra.mxu0 0
  %2919 = vmatprep.mubr.bf16.mxu0 0
  %2920 = vmatmul.mubr.bf16.gmra.mrb[0].mxu0 %v2821
  %v2921 = vpop.f32.mrb[0].mxu0
  %v2922 = vadd.f32 0.0, %v2921
  %v2923 = vpop.f32.mrb[0].mxu0
  %v2924 = vpop.f32.mrb[0].mxu0
  %v2925 = vpop.f32.mrb[0].mxu0
  %2926 = vdwg.mxu0
  %v2927 = vadd.f32 %v2775, %v2922
  %s2928 = scalar_lea.vmem %s19, 4
  %v2929 = vld [vmem:[%s2928] sm:$0x1]
  %v2931 = vsel %vm300, %v2929, 0
  %2933 = vmatprep.subr.bf16.mxu0 0
  %2934 = vmatpush1.bf16.msra.mxu0 %v2319
  %2935 = vmatprep.subr.bf16.mxu0 0
  %2936 = vmatpush1.bf16.msra.mxu0 %v2326
  %2937 = vmatprep.subr.bf16.mxu0 0
  %2938 = vmatpush1.bf16.msra.mxu0 0
  %2939 = vmatprep.subr.bf16.mxu0 0
  %2940 = vmatpush1.bf16.msra.mxu0 0
  %2941 = vmatprep.subr.bf16.mxu0 0
  %2942 = vmatpush1.bf16.msra.mxu0 0
  %2943 = vmatprep.subr.bf16.mxu0 0
  %2944 = vmatpush1.bf16.msra.mxu0 0
  %2945 = vmatprep.subr.bf16.mxu0 0
  %2946 = vmatpush1.bf16.msra.mxu0 0
  %2947 = vmatprep.subr.bf16.mxu0 0
  %2948 = vmatpush1.bf16.msra.mxu0 0
  %2949 = vmatprep.subr.bf16.mxu0 0
  %2950 = vmatpush1.bf16.msra.mxu0 0
  %2951 = vmatprep.subr.bf16.mxu0 0
  %2952 = vmatpush1.bf16.msra.mxu0 0
  %2953 = vmatprep.subr.bf16.mxu0 0
  %2954 = vmatpush1.bf16.msra.mxu0 0
  %2955 = vmatprep.subr.bf16.mxu0 0
  %2956 = vmatpush1.bf16.msra.mxu0 0
  %2957 = vmatprep.subr.bf16.mxu0 0
  %2958 = vmatpush1.bf16.msra.mxu0 0
  %2959 = vmatprep.subr.bf16.mxu0 0
  %2960 = vmatpush1.bf16.msra.mxu0 0
  %2961 = vmatprep.subr.bf16.mxu0 0
  %2962 = vmatpush1.bf16.msra.mxu0 0
  %2963 = vmatprep.subr.bf16.mxu0 0
  %2964 = vmatpush1.bf16.msra.mxu0 0
  %2965 = vmatprep.mubr.bf16.mxu0 0
  %2966 = vmatmul.mubr.bf16.gmra.mrb[0].mxu0 %v2931
  %v2967 = vpop.f32.mrb[0].mxu0
  %v2968 = vadd.f32 0.0, %v2967
  %v2969 = vpop.f32.mrb[0].mxu0
  %v2970 = vpop.f32.mrb[0].mxu0
  %v2971 = vpop.f32.mrb[0].mxu0
  %2972 = vdwg.mxu0
  %v2973 = vpack.c.bf16 %v2968, %v2968
  %s2974 = scalar_lea.vmem %s20, 256
  %v2975 = vld [vmem:[%s2974] sm:$0xf]
  %v2976 = vld [vmem:[%s2974 + $0x4] sm:$0xf]
  %v2977 = vld [vmem:[%s2974 + $0x8] sm:$0xf]
  %v2978 = vld [vmem:[%s2974 + $0xc] sm:$0xf]
  %v2979 = vld [vmem:[%s2974 + $0x10] sm:$0xf]
  %v2980 = vld [vmem:[%s2974 + $0x14] sm:$0xf]
  %v2981 = vld [vmem:[%s2974 + $0x18] sm:$0xf]
  %v2982 = vld [vmem:[%s2974 + $0x1c] sm:$0xf]
  %v2983 = vld [vmem:[%s2974 + $0x20] sm:$0xf]
  %v2984 = vld [vmem:[%s2974 + $0x24] sm:$0xf]
  %v2985 = vld [vmem:[%s2974 + $0x28] sm:$0xf]
  %v2986 = vld [vmem:[%s2974 + $0x2c] sm:$0xf]
  %v2987 = vld [vmem:[%s2974 + $0x30] sm:$0xf]
  %v2988 = vld [vmem:[%s2974 + $0x34] sm:$0xf]
  %v2989 = vld [vmem:[%s2974 + $0x38] sm:$0xf]
  %v2990 = vld [vmem:[%s2974 + $0x3c] sm:$0xf]
  %v3007 = vunpack.c.l.b16 %v2975
  %v3008 = vunpack.c.l.b16 %v2976
  %v3009 = vunpack.c.l.b16 %v2977
  %v3010 = vunpack.c.l.b16 %v2978
  %v3011 = vunpack.c.l.b16 %v2979
  %v3012 = vunpack.c.l.b16 %v2980
  %v3013 = vunpack.c.l.b16 %v2981
  %v3014 = vunpack.c.l.b16 %v2982
  %v3015 = vunpack.c.l.b16 %v2983
  %v3016 = vunpack.c.l.b16 %v2984
  %v3017 = vunpack.c.l.b16 %v2985
  %v3018 = vunpack.c.l.b16 %v2986
  %v3019 = vunpack.c.l.b16 %v2987
  %v3020 = vunpack.c.l.b16 %v2988
  %v3021 = vunpack.c.l.b16 %v2989
  %v3022 = vunpack.c.l.b16 %v2990
  %v3023 = vpack.c.b16 %v3008, %v3007
  %v3024 = vpack.c.b16 %v3010, %v3009
  %v3025 = vpack.c.b16 %v3012, %v3011
  %v3026 = vpack.c.b16 %v3014, %v3013
  %v3027 = vpack.c.b16 %v3016, %v3015
  %v3028 = vpack.c.b16 %v3018, %v3017
  %v3029 = vpack.c.b16 %v3020, %v3019
  %v3030 = vpack.c.b16 %v3022, %v3021
  %3039 = vmatprep.subr.bf16.mxu0 0
  %3040 = vmatpush1.bf16.msra.mxu0 %v3023
  %3041 = vmatprep.subr.bf16.mxu0 0
  %3042 = vmatpush1.bf16.msra.mxu0 %v3024
  %3043 = vmatprep.subr.bf16.mxu0 0
  %3044 = vmatpush1.bf16.msra.mxu0 %v3025
  %3045 = vmatprep.subr.bf16.mxu0 0
  %3046 = vmatpush1.bf16.msra.mxu0 %v3026
  %3047 = vmatprep.subr.bf16.mxu0 0
  %3048 = vmatpush1.bf16.msra.mxu0 %v3027
  %3049 = vmatprep.subr.bf16.mxu0 0
  %3050 = vmatpush1.bf16.msra.mxu0 %v3028
  %3051 = vmatprep.subr.bf16.mxu0 0
  %3052 = vmatpush1.bf16.msra.mxu0 %v3029
  %3053 = vmatprep.subr.bf16.mxu0 0
  %3054 = vmatpush1.bf16.msra.mxu0 %v3030
  %3055 = vmatprep.subr.bf16.mxu0 0
  %3056 = vmatpush1.bf16.msra.mxu0 0
  %3057 = vmatprep.subr.bf16.mxu0 0
  %3058 = vmatpush1.bf16.msra.mxu0 0
  %3059 = vmatprep.subr.bf16.mxu0 0
  %3060 = vmatpush1.bf16.msra.mxu0 0
  %3061 = vmatprep.subr.bf16.mxu0 0
  %3062 = vmatpush1.bf16.msra.mxu0 0
  %3063 = vmatprep.subr.bf16.mxu0 0
  %3064 = vmatpush1.bf16.msra.mxu0 0
  %3065 = vmatprep.subr.bf16.mxu0 0
  %3066 = vmatpush1.bf16.msra.mxu0 0
  %3067 = vmatprep.subr.bf16.mxu0 0
  %3068 = vmatpush1.bf16.msra.mxu0 0
  %3069 = vmatprep.subr.bf16.mxu0 0
  %3070 = vmatpush1.bf16.msra.mxu0 0
  %3071 = vmatprep.mubr.bf16.mxu0 0
  %3072 = vmatmul.mubr.bf16.gmra.mrb[0].mxu0 %v2973
  %v3073 = vpop.f32.mrb[0].mxu0
  %v3074 = vadd.f32 0.0, %v3073
  %v3075 = vpop.f32.mrb[0].mxu0
  %v3076 = vpop.f32.mrb[0].mxu0
  %v3077 = vpop.f32.mrb[0].mxu0
  %3078 = vdwg.mxu0
  %v3079 = vadd.f32 %v2927, %v3074
  %s3080 = scalar_lea.vmem %s19, 5
  %v3081 = vld [vmem:[%s3080] sm:$0x1]
  %v3083 = vsel %vm300, %v3081, 0
  %3085 = vmatprep.subr.bf16.mxu0 0
  %3086 = vmatpush1.bf16.msra.mxu0 %v2319
  %3087 = vmatprep.subr.bf16.mxu0 0
  %3088 = vmatpush1.bf16.msra.mxu0 %v2326
  %3089 = vmatprep.subr.bf16.mxu0 0
  %3090 = vmatpush1.bf16.msra.mxu0 0
  %3091 = vmatprep.subr.bf16.mxu0 0
  %3092 = vmatpush1.bf16.msra.mxu0 0
  %3093 = vmatprep.subr.bf16.mxu0 0
  %3094 = vmatpush1.bf16.msra.mxu0 0
  %3095 = vmatprep.subr.bf16.mxu0 0
  %3096 = vmatpush1.bf16.msra.mxu0 0
  %3097 = vmatprep.subr.bf16.mxu0 0
  %3098 = vmatpush1.bf16.msra.mxu0 0
  %3099 = vmatprep.subr.bf16.mxu0 0
  %3100 = vmatpush1.bf16.msra.mxu0 0
  %3101 = vmatprep.subr.bf16.mxu0 0
  %3102 = vmatpush1.bf16.msra.mxu0 0
  %3103 = vmatprep.subr.bf16.mxu0 0
  %3104 = vmatpush1.bf16.msra.mxu0 0
  %3105 = vmatprep.subr.bf16.mxu0 0
  %3106 = vmatpush1.bf16.msra.mxu0 0
  %3107 = vmatprep.subr.bf16.mxu0 0
  %3108 = vmatpush1.bf16.msra.mxu0 0
  %3109 = vmatprep.subr.bf16.mxu0 0
  %3110 = vmatpush1.bf16.msra.mxu0 0
  %3111 = vmatprep.subr.bf16.mxu0 0
  %3112 = vmatpush1.bf16.msra.mxu0 0
  %3113 = vmatprep.subr.bf16.mxu0 0
  %3114 = vmatpush1.bf16.msra.mxu0 0
  %3115 = vmatprep.subr.bf16.mxu0 0
  %3116 = vmatpush1.bf16.msra.mxu0 0
  %3117 = vmatprep.mubr.bf16.mxu0 0
  %3118 = vmatmul.mubr.bf16.gmra.mrb[0].mxu0 %v3083
  %v3119 = vpop.f32.mrb[0].mxu0
  %v3120 = vadd.f32 0.0, %v3119
  %v3121 = vpop.f32.mrb[0].mxu0
  %v3122 = vpop.f32.mrb[0].mxu0
  %v3123 = vpop.f32.mrb[0].mxu0
  %3124 = vdwg.mxu0
  %v3125 = vpack.c.bf16 %v3120, %v3120
  %s3126 = scalar_lea.vmem %s20, 320
  %v3127 = vld [vmem:[%s3126] sm:$0xf]
  %v3128 = vld [vmem:[%s3126 + $0x4] sm:$0xf]
  %v3129 = vld [vmem:[%s3126 + $0x8] sm:$0xf]
  %v3130 = vld [vmem:[%s3126 + $0xc] sm:$0xf]
  %v3131 = vld [vmem:[%s3126 + $0x10] sm:$0xf]
  %v3132 = vld [vmem:[%s3126 + $0x14] sm:$0xf]
  %v3133 = vld [vmem:[%s3126 + $0x18] sm:$0xf]
  %v3134 = vld [vmem:[%s3126 + $0x1c] sm:$0xf]
  %v3135 = vld [vmem:[%s3126 + $0x20] sm:$0xf]
  %v3136 = vld [vmem:[%s3126 + $0x24] sm:$0xf]
  %v3137 = vld [vmem:[%s3126 + $0x28] sm:$0xf]
  %v3138 = vld [vmem:[%s3126 + $0x2c] sm:$0xf]
  %v3139 = vld [vmem:[%s3126 + $0x30] sm:$0xf]
  %v3140 = vld [vmem:[%s3126 + $0x34] sm:$0xf]
  %v3141 = vld [vmem:[%s3126 + $0x38] sm:$0xf]
  %v3142 = vld [vmem:[%s3126 + $0x3c] sm:$0xf]
  %v3159 = vunpack.c.l.b16 %v3127
  %v3160 = vunpack.c.l.b16 %v3128
  %v3161 = vunpack.c.l.b16 %v3129
  %v3162 = vunpack.c.l.b16 %v3130
  %v3163 = vunpack.c.l.b16 %v3131
  %v3164 = vunpack.c.l.b16 %v3132
  %v3165 = vunpack.c.l.b16 %v3133
  %v3166 = vunpack.c.l.b16 %v3134
  %v3167 = vunpack.c.l.b16 %v3135
  %v3168 = vunpack.c.l.b16 %v3136
  %v3169 = vunpack.c.l.b16 %v3137
  %v3170 = vunpack.c.l.b16 %v3138
  %v3171 = vunpack.c.l.b16 %v3139
  %v3172 = vunpack.c.l.b16 %v3140
  %v3173 = vunpack.c.l.b16 %v3141
  %v3174 = vunpack.c.l.b16 %v3142
  %v3175 = vpack.c.b16 %v3160, %v3159
  %v3176 = vpack.c.b16 %v3162, %v3161
  %v3177 = vpack.c.b16 %v3164, %v3163
  %v3178 = vpack.c.b16 %v3166, %v3165
  %v3179 = vpack.c.b16 %v3168, %v3167
  %v3180 = vpack.c.b16 %v3170, %v3169
  %v3181 = vpack.c.b16 %v3172, %v3171
  %v3182 = vpack.c.b16 %v3174, %v3173
  %3191 = vmatprep.subr.bf16.mxu0 0
  %3192 = vmatpush1.bf16.msra.mxu0 %v3175
  %3193 = vmatprep.subr.bf16.mxu0 0
  %3194 = vmatpush1.bf16.msra.mxu0 %v3176
  %3195 = vmatprep.subr.bf16.mxu0 0
  %3196 = vmatpush1.bf16.msra.mxu0 %v3177
  %3197 = vmatprep.subr.bf16.mxu0 0
  %3198 = vmatpush1.bf16.msra.mxu0 %v3178
  %3199 = vmatprep.subr.bf16.mxu0 0
  %3200 = vmatpush1.bf16.msra.mxu0 %v3179
  %3201 = vmatprep.subr.bf16.mxu0 0
  %3202 = vmatpush1.bf16.msra.mxu0 %v3180
  %3203 = vmatprep.subr.bf16.mxu0 0
  %3204 = vmatpush1.bf16.msra.mxu0 %v3181
  %3205 = vmatprep.subr.bf16.mxu0 0
  %3206 = vmatpush1.bf16.msra.mxu0 %v3182
  %3207 = vmatprep.subr.bf16.mxu0 0
  %3208 = vmatpush1.bf16.msra.mxu0 0
  %3209 = vmatprep.subr.bf16.mxu0 0
  %3210 = vmatpush1.bf16.msra.mxu0 0
  %3211 = vmatprep.subr.bf16.mxu0 0
  %3212 = vmatpush1.bf16.msra.mxu0 0
  %3213 = vmatprep.subr.bf16.mxu0 0
  %3214 = vmatpush1.bf16.msra.mxu0 0
  %3215 = vmatprep.subr.bf16.mxu0 0
  %3216 = vmatpush1.bf16.msra.mxu0 0
  %3217 = vmatprep.subr.bf16.mxu0 0
  %3218 = vmatpush1.bf16.msra.mxu0 0
  %3219 = vmatprep.subr.bf16.mxu0 0
  %3220 = vmatpush1.bf16.msra.mxu0 0
  %3221 = vmatprep.subr.bf16.mxu0 0
  %3222 = vmatpush1.bf16.msra.mxu0 0
  %3223 = vmatprep.mubr.bf16.mxu0 0
  %3224 = vmatmul.mubr.bf16.gmra.mrb[0].mxu0 %v3125
  %v3225 = vpop.f32.mrb[0].mxu0
  %v3226 = vadd.f32 0.0, %v3225
  %v3227 = vpop.f32.mrb[0].mxu0
  %v3228 = vpop.f32.mrb[0].mxu0
  %v3229 = vpop.f32.mrb[0].mxu0
  %3230 = vdwg.mxu0
  %v3231 = vadd.f32 %v3079, %v3226
  %s3232 = scalar_lea.vmem %s19, 6
  %v3233 = vld [vmem:[%s3232] sm:$0x1]
  %v3235 = vsel %vm300, %v3233, 0
  %3237 = vmatprep.subr.bf16.mxu0 0
  %3238 = vmatpush1.bf16.msra.mxu0 %v2319
  %3239 = vmatprep.subr.bf16.mxu0 0
  %3240 = vmatpush1.bf16.msra.mxu0 %v2326
  %3241 = vmatprep.subr.bf16.mxu0 0
  %3242 = vmatpush1.bf16.msra.mxu0 0
  %3243 = vmatprep.subr.bf16.mxu0 0
  %3244 = vmatpush1.bf16.msra.mxu0 0
  %3245 = vmatprep.subr.bf16.mxu0 0
  %3246 = vmatpush1.bf16.msra.mxu0 0
  %3247 = vmatprep.subr.bf16.mxu0 0
  %3248 = vmatpush1.bf16.msra.mxu0 0
  %3249 = vmatprep.subr.bf16.mxu0 0
  %3250 = vmatpush1.bf16.msra.mxu0 0
  %3251 = vmatprep.subr.bf16.mxu0 0
  %3252 = vmatpush1.bf16.msra.mxu0 0
  %3253 = vmatprep.subr.bf16.mxu0 0
  %3254 = vmatpush1.bf16.msra.mxu0 0
  %3255 = vmatprep.subr.bf16.mxu0 0
  %3256 = vmatpush1.bf16.msra.mxu0 0
  %3257 = vmatprep.subr.bf16.mxu0 0
  %3258 = vmatpush1.bf16.msra.mxu0 0
  %3259 = vmatprep.subr.bf16.mxu0 0
  %3260 = vmatpush1.bf16.msra.mxu0 0
  %3261 = vmatprep.subr.bf16.mxu0 0
  %3262 = vmatpush1.bf16.msra.mxu0 0
  %3263 = vmatprep.subr.bf16.mxu0 0
  %3264 = vmatpush1.bf16.msra.mxu0 0
  %3265 = vmatprep.subr.bf16.mxu0 0
  %3266 = vmatpush1.bf16.msra.mxu0 0
  %3267 = vmatprep.subr.bf16.mxu0 0
  %3268 = vmatpush1.bf16.msra.mxu0 0
  %3269 = vmatprep.mubr.bf16.mxu0 0
  %3270 = vmatmul.mubr.bf16.gmra.mrb[0].mxu0 %v3235
  %v3271 = vpop.f32.mrb[0].mxu0
  %v3272 = vadd.f32 0.0, %v3271
  %v3273 = vpop.f32.mrb[0].mxu0
  %v3274 = vpop.f32.mrb[0].mxu0
  %v3275 = vpop.f32.mrb[0].mxu0
  %3276 = vdwg.mxu0
  %v3277 = vpack.c.bf16 %v3272, %v3272
  %s3278 = scalar_lea.vmem %s20, 384
  %v3279 = vld [vmem:[%s3278] sm:$0xf]
  %v3280 = vld [vmem:[%s3278 + $0x4] sm:$0xf]
  %v3281 = vld [vmem:[%s3278 + $0x8] sm:$0xf]
  %v3282 = vld [vmem:[%s3278 + $0xc] sm:$0xf]
  %v3283 = vld [vmem:[%s3278 + $0x10] sm:$0xf]
  %v3284 = vld [vmem:[%s3278 + $0x14] sm:$0xf]
  %v3285 = vld [vmem:[%s3278 + $0x18] sm:$0xf]
  %v3286 = vld [vmem:[%s3278 + $0x1c] sm:$0xf]
  %v3287 = vld [vmem:[%s3278 + $0x20] sm:$0xf]
  %v3288 = vld [vmem:[%s3278 + $0x24] sm:$0xf]
  %v3289 = vld [vmem:[%s3278 + $0x28] sm:$0xf]
  %v3290 = vld [vmem:[%s3278 + $0x2c] sm:$0xf]
  %v3291 = vld [vmem:[%s3278 + $0x30] sm:$0xf]
  %v3292 = vld [vmem:[%s3278 + $0x34] sm:$0xf]
  %v3293 = vld [vmem:[%s3278 + $0x38] sm:$0xf]
  %v3294 = vld [vmem:[%s3278 + $0x3c] sm:$0xf]
  %v3311 = vunpack.c.l.b16 %v3279
  %v3312 = vunpack.c.l.b16 %v3280
  %v3313 = vunpack.c.l.b16 %v3281
  %v3314 = vunpack.c.l.b16 %v3282
  %v3315 = vunpack.c.l.b16 %v3283
  %v3316 = vunpack.c.l.b16 %v3284
  %v3317 = vunpack.c.l.b16 %v3285
  %v3318 = vunpack.c.l.b16 %v3286
  %v3319 = vunpack.c.l.b16 %v3287
  %v3320 = vunpack.c.l.b16 %v3288
  %v3321 = vunpack.c.l.b16 %v3289
  %v3322 = vunpack.c.l.b16 %v3290
  %v3323 = vunpack.c.l.b16 %v3291
  %v3324 = vunpack.c.l.b16 %v3292
  %v3325 = vunpack.c.l.b16 %v3293
  %v3326 = vunpack.c.l.b16 %v3294
  %v3327 = vpack.c.b16 %v3312, %v3311
  %v3328 = vpack.c.b16 %v3314, %v3313
  %v3329 = vpack.c.b16 %v3316, %v3315
  %v3330 = vpack.c.b16 %v3318, %v3317
  %v3331 = vpack.c.b16 %v3320, %v3319
  %v3332 = vpack.c.b16 %v3322, %v3321
  %v3333 = vpack.c.b16 %v3324, %v3323
  %v3334 = vpack.c.b16 %v3326, %v3325
  %3343 = vmatprep.subr.bf16.mxu0 0
  %3344 = vmatpush1.bf16.msra.mxu0 %v3327
  %3345 = vmatprep.subr.bf16.mxu0 0
  %3346 = vmatpush1.bf16.msra.mxu0 %v3328
  %3347 = vmatprep.subr.bf16.mxu0 0
  %3348 = vmatpush1.bf16.msra.mxu0 %v3329
  %3349 = vmatprep.subr.bf16.mxu0 0
  %3350 = vmatpush1.bf16.msra.mxu0 %v3330
  %3351 = vmatprep.subr.bf16.mxu0 0
  %3352 = vmatpush1.bf16.msra.mxu0 %v3331
  %3353 = vmatprep.subr.bf16.mxu0 0
  %3354 = vmatpush1.bf16.msra.mxu0 %v3332
  %3355 = vmatprep.subr.bf16.mxu0 0
  %3356 = vmatpush1.bf16.msra.mxu0 %v3333
  %3357 = vmatprep.subr.bf16.mxu0 0
  %3358 = vmatpush1.bf16.msra.mxu0 %v3334
  %3359 = vmatprep.subr.bf16.mxu0 0
  %3360 = vmatpush1.bf16.msra.mxu0 0
  %3361 = vmatprep.subr.bf16.mxu0 0
  %3362 = vmatpush1.bf16.msra.mxu0 0
  %3363 = vmatprep.subr.bf16.mxu0 0
  %3364 = vmatpush1.bf16.msra.mxu0 0
  %3365 = vmatprep.subr.bf16.mxu0 0
  %3366 = vmatpush1.bf16.msra.mxu0 0
  %3367 = vmatprep.subr.bf16.mxu0 0
  %3368 = vmatpush1.bf16.msra.mxu0 0
  %3369 = vmatprep.subr.bf16.mxu0 0
  %3370 = vmatpush1.bf16.msra.mxu0 0
  %3371 = vmatprep.subr.bf16.mxu0 0
  %3372 = vmatpush1.bf16.msra.mxu0 0
  %3373 = vmatprep.subr.bf16.mxu0 0
  %3374 = vmatpush1.bf16.msra.mxu0 0
  %3375 = vmatprep.mubr.bf16.mxu0 0
  %3376 = vmatmul.mubr.bf16.gmra.mrb[0].mxu0 %v3277
  %v3377 = vpop.f32.mrb[0].mxu0
  %v3378 = vadd.f32 0.0, %v3377
  %v3379 = vpop.f32.mrb[0].mxu0
  %v3380 = vpop.f32.mrb[0].mxu0
  %v3381 = vpop.f32.mrb[0].mxu0
  %3382 = vdwg.mxu0
  %v3383 = vadd.f32 %v3231, %v3378
  %s3384 = scalar_lea.vmem %s19, 7
  %v3385 = vld [vmem:[%s3384] sm:$0x1]
  %v3387 = vsel %vm300, %v3385, 0
  %3389 = vmatprep.subr.bf16.mxu0 0
  %3390 = vmatpush1.bf16.msra.mxu0 %v2319
  %3391 = vmatprep.subr.bf16.mxu0 0
  %3392 = vmatpush1.bf16.msra.mxu0 %v2326
  %3393 = vmatprep.subr.bf16.mxu0 0
  %3394 = vmatpush1.bf16.msra.mxu0 0
  %3395 = vmatprep.subr.bf16.mxu0 0
  %3396 = vmatpush1.bf16.msra.mxu0 0
  %3397 = vmatprep.subr.bf16.mxu0 0
  %3398 = vmatpush1.bf16.msra.mxu0 0
  %3399 = vmatprep.subr.bf16.mxu0 0
  %3400 = vmatpush1.bf16.msra.mxu0 0
  %3401 = vmatprep.subr.bf16.mxu0 0
  %3402 = vmatpush1.bf16.msra.mxu0 0
  %3403 = vmatprep.subr.bf16.mxu0 0
  %3404 = vmatpush1.bf16.msra.mxu0 0
  %3405 = vmatprep.subr.bf16.mxu0 0
  %3406 = vmatpush1.bf16.msra.mxu0 0
  %3407 = vmatprep.subr.bf16.mxu0 0
  %3408 = vmatpush1.bf16.msra.mxu0 0
  %3409 = vmatprep.subr.bf16.mxu0 0
  %3410 = vmatpush1.bf16.msra.mxu0 0
  %3411 = vmatprep.subr.bf16.mxu0 0
  %3412 = vmatpush1.bf16.msra.mxu0 0
  %3413 = vmatprep.subr.bf16.mxu0 0
  %3414 = vmatpush1.bf16.msra.mxu0 0
  %3415 = vmatprep.subr.bf16.mxu0 0
  %3416 = vmatpush1.bf16.msra.mxu0 0
  %3417 = vmatprep.subr.bf16.mxu0 0
  %3418 = vmatpush1.bf16.msra.mxu0 0
  %3419 = vmatprep.subr.bf16.mxu0 0
  %3420 = vmatpush1.bf16.msra.mxu0 0
  %3421 = vmatprep.mubr.bf16.mxu0 0
  %3422 = vmatmul.mubr.bf16.gmra.mrb[0].mxu0 %v3387
  %v3423 = vpop.f32.mrb[0].mxu0
  %v3424 = vadd.f32 0.0, %v3423
  %v3425 = vpop.f32.mrb[0].mxu0
  %v3426 = vpop.f32.mrb[0].mxu0
  %v3427 = vpop.f32.mrb[0].mxu0
  %3428 = vdwg.mxu0
  %v3429 = vpack.c.bf16 %v3424, %v3424
  %s3430 = scalar_lea.vmem %s20, 448
  %v3431 = vld [vmem:[%s3430] sm:$0xf]
  %v3432 = vld [vmem:[%s3430 + $0x4] sm:$0xf]
  %v3433 = vld [vmem:[%s3430 + $0x8] sm:$0xf]
  %v3434 = vld [vmem:[%s3430 + $0xc] sm:$0xf]
  %v3435 = vld [vmem:[%s3430 + $0x10] sm:$0xf]
  %v3436 = vld [vmem:[%s3430 + $0x14] sm:$0xf]
  %v3437 = vld [vmem:[%s3430 + $0x18] sm:$0xf]
  %v3438 = vld [vmem:[%s3430 + $0x1c] sm:$0xf]
  %v3439 = vld [vmem:[%s3430 + $0x20] sm:$0xf]
  %v3440 = vld [vmem:[%s3430 + $0x24] sm:$0xf]
  %v3441 = vld [vmem:[%s3430 + $0x28] sm:$0xf]
  %v3442 = vld [vmem:[%s3430 + $0x2c] sm:$0xf]
  %v3443 = vld [vmem:[%s3430 + $0x30] sm:$0xf]
  %v3444 = vld [vmem:[%s3430 + $0x34] sm:$0xf]
  %v3445 = vld [vmem:[%s3430 + $0x38] sm:$0xf]
  %v3446 = vld [vmem:[%s3430 + $0x3c] sm:$0xf]
  %v3463 = vunpack.c.l.b16 %v3431
  %v3464 = vunpack.c.l.b16 %v3432
  %v3465 = vunpack.c.l.b16 %v3433
  %v3466 = vunpack.c.l.b16 %v3434
  %v3467 = vunpack.c.l.b16 %v3435
  %v3468 = vunpack.c.l.b16 %v3436
  %v3469 = vunpack.c.l.b16 %v3437
  %v3470 = vunpack.c.l.b16 %v3438
  %v3471 = vunpack.c.l.b16 %v3439
  %v3472 = vunpack.c.l.b16 %v3440
  %v3473 = vunpack.c.l.b16 %v3441
  %v3474 = vunpack.c.l.b16 %v3442
  %v3475 = vunpack.c.l.b16 %v3443
  %v3476 = vunpack.c.l.b16 %v3444
  %v3477 = vunpack.c.l.b16 %v3445
  %v3478 = vunpack.c.l.b16 %v3446
  %v3479 = vpack.c.b16 %v3464, %v3463
  %v3480 = vpack.c.b16 %v3466, %v3465
  %v3481 = vpack.c.b16 %v3468, %v3467
  %v3482 = vpack.c.b16 %v3470, %v3469
  %v3483 = vpack.c.b16 %v3472, %v3471
  %v3484 = vpack.c.b16 %v3474, %v3473
  %v3485 = vpack.c.b16 %v3476, %v3475
  %v3486 = vpack.c.b16 %v3478, %v3477
  %3495 = vmatprep.subr.bf16.mxu0 0
  %3496 = vmatpush1.bf16.msra.mxu0 %v3479
  %3497 = vmatprep.subr.bf16.mxu0 0
  %3498 = vmatpush1.bf16.msra.mxu0 %v3480
  %3499 = vmatprep.subr.bf16.mxu0 0
  %3500 = vmatpush1.bf16.msra.mxu0 %v3481
  %3501 = vmatprep.subr.bf16.mxu0 0
  %3502 = vmatpush1.bf16.msra.mxu0 %v3482
  %3503 = vmatprep.subr.bf16.mxu0 0
  %3504 = vmatpush1.bf16.msra.mxu0 %v3483
  %3505 = vmatprep.subr.bf16.mxu0 0
  %3506 = vmatpush1.bf16.msra.mxu0 %v3484
  %3507 = vmatprep.subr.bf16.mxu0 0
  %3508 = vmatpush1.bf16.msra.mxu0 %v3485
  %3509 = vmatprep.subr.bf16.mxu0 0
  %3510 = vmatpush1.bf16.msra.mxu0 %v3486
  %3511 = vmatprep.subr.bf16.mxu0 0
  %3512 = vmatpush1.bf16.msra.mxu0 0
  %3513 = vmatprep.subr.bf16.mxu0 0
  %3514 = vmatpush1.bf16.msra.mxu0 0
  %3515 = vmatprep.subr.bf16.mxu0 0
  %3516 = vmatpush1.bf16.msra.mxu0 0
  %3517 = vmatprep.subr.bf16.mxu0 0
  %3518 = vmatpush1.bf16.msra.mxu0 0
  %3519 = vmatprep.subr.bf16.mxu0 0
  %3520 = vmatpush1.bf16.msra.mxu0 0
  %3521 = vmatprep.subr.bf16.mxu0 0
  %3522 = vmatpush1.bf16.msra.mxu0 0
  %3523 = vmatprep.subr.bf16.mxu0 0
  %3524 = vmatpush1.bf16.msra.mxu0 0
  %3525 = vmatprep.subr.bf16.mxu0 0
  %3526 = vmatpush1.bf16.msra.mxu0 0
  %3527 = vmatprep.mubr.bf16.mxu0 0
  %3528 = vmatmul.mubr.bf16.gmra.mrb[0].mxu0 %v3429
  %v3529 = vpop.f32.mrb[0].mxu0
  %v3530 = vadd.f32 0.0, %v3529
  %v3531 = vpop.f32.mrb[0].mxu0
  %v3532 = vpop.f32.mrb[0].mxu0
  %v3533 = vpop.f32.mrb[0].mxu0
  %3534 = vdwg.mxu0
  %v3535 = vadd.f32 %v3383, %v3530
  %s3536 = scalar_lea.vmem %s19, 8
  %v3537 = vld [vmem:[%s3536] sm:$0x1]
  %v3539 = vsel %vm300, %v3537, 0
  %3541 = vmatprep.subr.bf16.mxu0 0
  %3542 = vmatpush1.bf16.msra.mxu0 %v2319
  %3543 = vmatprep.subr.bf16.mxu0 0
  %3544 = vmatpush1.bf16.msra.mxu0 %v2326
  %3545 = vmatprep.subr.bf16.mxu0 0
  %3546 = vmatpush1.bf16.msra.mxu0 0
  %3547 = vmatprep.subr.bf16.mxu0 0
  %3548 = vmatpush1.bf16.msra.mxu0 0
  %3549 = vmatprep.subr.bf16.mxu0 0
  %3550 = vmatpush1.bf16.msra.mxu0 0
  %3551 = vmatprep.subr.bf16.mxu0 0
  %3552 = vmatpush1.bf16.msra.mxu0 0
  %3553 = vmatprep.subr.bf16.mxu0 0
  %3554 = vmatpush1.bf16.msra.mxu0 0
  %3555 = vmatprep.subr.bf16.mxu0 0
  %3556 = vmatpush1.bf16.msra.mxu0 0
  %3557 = vmatprep.subr.bf16.mxu0 0
  %3558 = vmatpush1.bf16.msra.mxu0 0
  %3559 = vmatprep.subr.bf16.mxu0 0
  %3560 = vmatpush1.bf16.msra.mxu0 0
  %3561 = vmatprep.subr.bf16.mxu0 0
  %3562 = vmatpush1.bf16.msra.mxu0 0
  %3563 = vmatprep.subr.bf16.mxu0 0
  %3564 = vmatpush1.bf16.msra.mxu0 0
  %3565 = vmatprep.subr.bf16.mxu0 0
  %3566 = vmatpush1.bf16.msra.mxu0 0
  %3567 = vmatprep.subr.bf16.mxu0 0
  %3568 = vmatpush1.bf16.msra.mxu0 0
  %3569 = vmatprep.subr.bf16.mxu0 0
  %3570 = vmatpush1.bf16.msra.mxu0 0
  %3571 = vmatprep.subr.bf16.mxu0 0
  %3572 = vmatpush1.bf16.msra.mxu0 0
  %3573 = vmatprep.mubr.bf16.mxu0 0
  %3574 = vmatmul.mubr.bf16.gmra.mrb[0].mxu0 %v3539
  %v3575 = vpop.f32.mrb[0].mxu0
  %v3576 = vadd.f32 0.0, %v3575
  %v3577 = vpop.f32.mrb[0].mxu0
  %v3578 = vpop.f32.mrb[0].mxu0
  %v3579 = vpop.f32.mrb[0].mxu0
  %3580 = vdwg.mxu0
  %v3581 = vpack.c.bf16 %v3576, %v3576
  %s3582 = scalar_lea.vmem %s20, 512
  %v3583 = vld [vmem:[%s3582] sm:$0xf]
  %v3584 = vld [vmem:[%s3582 + $0x4] sm:$0xf]
  %v3585 = vld [vmem:[%s3582 + $0x8] sm:$0xf]
  %v3586 = vld [vmem:[%s3582 + $0xc] sm:$0xf]
  %v3587 = vld [vmem:[%s3582 + $0x10] sm:$0xf]
  %v3588 = vld [vmem:[%s3582 + $0x14] sm:$0xf]
  %v3589 = vld [vmem:[%s3582 + $0x18] sm:$0xf]
  %v3590 = vld [vmem:[%s3582 + $0x1c] sm:$0xf]
  %v3591 = vld [vmem:[%s3582 + $0x20] sm:$0xf]
  %v3592 = vld [vmem:[%s3582 + $0x24] sm:$0xf]
  %v3593 = vld [vmem:[%s3582 + $0x28] sm:$0xf]
  %v3594 = vld [vmem:[%s3582 + $0x2c] sm:$0xf]
  %v3595 = vld [vmem:[%s3582 + $0x30] sm:$0xf]
  %v3596 = vld [vmem:[%s3582 + $0x34] sm:$0xf]
  %v3597 = vld [vmem:[%s3582 + $0x38] sm:$0xf]
  %v3598 = vld [vmem:[%s3582 + $0x3c] sm:$0xf]
  %v3615 = vunpack.c.l.b16 %v3583
  %v3616 = vunpack.c.l.b16 %v3584
  %v3617 = vunpack.c.l.b16 %v3585
  %v3618 = vunpack.c.l.b16 %v3586
  %v3619 = vunpack.c.l.b16 %v3587
  %v3620 = vunpack.c.l.b16 %v3588
  %v3621 = vunpack.c.l.b16 %v3589
  %v3622 = vunpack.c.l.b16 %v3590
  %v3623 = vunpack.c.l.b16 %v3591
  %v3624 = vunpack.c.l.b16 %v3592
  %v3625 = vunpack.c.l.b16 %v3593
  %v3626 = vunpack.c.l.b16 %v3594
  %v3627 = vunpack.c.l.b16 %v3595
  %v3628 = vunpack.c.l.b16 %v3596
  %v3629 = vunpack.c.l.b16 %v3597
  %v3630 = vunpack.c.l.b16 %v3598
  %v3631 = vpack.c.b16 %v3616, %v3615
  %v3632 = vpack.c.b16 %v3618, %v3617
  %v3633 = vpack.c.b16 %v3620, %v3619
  %v3634 = vpack.c.b16 %v3622, %v3621
  %v3635 = vpack.c.b16 %v3624, %v3623
  %v3636 = vpack.c.b16 %v3626, %v3625
  %v3637 = vpack.c.b16 %v3628, %v3627
  %v3638 = vpack.c.b16 %v3630, %v3629
  %3647 = vmatprep.subr.bf16.mxu0 0
  %3648 = vmatpush1.bf16.msra.mxu0 %v3631
  %3649 = vmatprep.subr.bf16.mxu0 0
  %3650 = vmatpush1.bf16.msra.mxu0 %v3632
  %3651 = vmatprep.subr.bf16.mxu0 0
  %3652 = vmatpush1.bf16.msra.mxu0 %v3633
  %3653 = vmatprep.subr.bf16.mxu0 0
  %3654 = vmatpush1.bf16.msra.mxu0 %v3634
  %3655 = vmatprep.subr.bf16.mxu0 0
  %3656 = vmatpush1.bf16.msra.mxu0 %v3635
  %3657 = vmatprep.subr.bf16.mxu0 0
  %3658 = vmatpush1.bf16.msra.mxu0 %v3636
  %3659 = vmatprep.subr.bf16.mxu0 0
  %3660 = vmatpush1.bf16.msra.mxu0 %v3637
  %3661 = vmatprep.subr.bf16.mxu0 0
  %3662 = vmatpush1.bf16.msra.mxu0 %v3638
  %3663 = vmatprep.subr.bf16.mxu0 0
  %3664 = vmatpush1.bf16.msra.mxu0 0
  %3665 = vmatprep.subr.bf16.mxu0 0
  %3666 = vmatpush1.bf16.msra.mxu0 0
  %3667 = vmatprep.subr.bf16.mxu0 0
  %3668 = vmatpush1.bf16.msra.mxu0 0
  %3669 = vmatprep.subr.bf16.mxu0 0
  %3670 = vmatpush1.bf16.msra.mxu0 0
  %3671 = vmatprep.subr.bf16.mxu0 0
  %3672 = vmatpush1.bf16.msra.mxu0 0
  %3673 = vmatprep.subr.bf16.mxu0 0
  %3674 = vmatpush1.bf16.msra.mxu0 0
  %3675 = vmatprep.subr.bf16.mxu0 0
  %3676 = vmatpush1.bf16.msra.mxu0 0
  %3677 = vmatprep.subr.bf16.mxu0 0
  %3678 = vmatpush1.bf16.msra.mxu0 0
  %3679 = vmatprep.mubr.bf16.mxu0 0
  %3680 = vmatmul.mubr.bf16.gmra.mrb[0].mxu0 %v3581
  %v3681 = vpop.f32.mrb[0].mxu0
  %v3682 = vadd.f32 0.0, %v3681
  %v3683 = vpop.f32.mrb[0].mxu0
  %v3684 = vpop.f32.mrb[0].mxu0
  %v3685 = vpop.f32.mrb[0].mxu0
  %3686 = vdwg.mxu0
  %v3687 = vadd.f32 %v3535, %v3682
  %s3688 = scalar_lea.vmem %s19, 9
  %v3689 = vld [vmem:[%s3688] sm:$0x1]
  %v3691 = vsel %vm300, %v3689, 0
  %3693 = vmatprep.subr.bf16.mxu0 0
  %3694 = vmatpush1.bf16.msra.mxu0 %v2319
  %3695 = vmatprep.subr.bf16.mxu0 0
  %3696 = vmatpush1.bf16.msra.mxu0 %v2326
  %3697 = vmatprep.subr.bf16.mxu0 0
  %3698 = vmatpush1.bf16.msra.mxu0 0
  %3699 = vmatprep.subr.bf16.mxu0 0
  %3700 = vmatpush1.bf16.msra.mxu0 0
  %3701 = vmatprep.subr.bf16.mxu0 0
  %3702 = vmatpush1.bf16.msra.mxu0 0
  %3703 = vmatprep.subr.bf16.mxu0 0
  %3704 = vmatpush1.bf16.msra.mxu0 0
  %3705 = vmatprep.subr.bf16.mxu0 0
  %3706 = vmatpush1.bf16.msra.mxu0 0
  %3707 = vmatprep.subr.bf16.mxu0 0
  %3708 = vmatpush1.bf16.msra.mxu0 0
  %3709 = vmatprep.subr.bf16.mxu0 0
  %3710 = vmatpush1.bf16.msra.mxu0 0
  %3711 = vmatprep.subr.bf16.mxu0 0
  %3712 = vmatpush1.bf16.msra.mxu0 0
  %3713 = vmatprep.subr.bf16.mxu0 0
  %3714 = vmatpush1.bf16.msra.mxu0 0
  %3715 = vmatprep.subr.bf16.mxu0 0
  %3716 = vmatpush1.bf16.msra.mxu0 0
  %3717 = vmatprep.subr.bf16.mxu0 0
  %3718 = vmatpush1.bf16.msra.mxu0 0
  %3719 = vmatprep.subr.bf16.mxu0 0
  %3720 = vmatpush1.bf16.msra.mxu0 0
  %3721 = vmatprep.subr.bf16.mxu0 0
  %3722 = vmatpush1.bf16.msra.mxu0 0
  %3723 = vmatprep.subr.bf16.mxu0 0
  %3724 = vmatpush1.bf16.msra.mxu0 0
  %3725 = vmatprep.mubr.bf16.mxu0 0
  %3726 = vmatmul.mubr.bf16.gmra.mrb[0].mxu0 %v3691
  %v3727 = vpop.f32.mrb[0].mxu0
  %v3728 = vadd.f32 0.0, %v3727
  %v3729 = vpop.f32.mrb[0].mxu0
  %v3730 = vpop.f32.mrb[0].mxu0
  %v3731 = vpop.f32.mrb[0].mxu0
  %3732 = vdwg.mxu0
  %v3733 = vpack.c.bf16 %v3728, %v3728
  %s3734 = scalar_lea.vmem %s20, 576
  %v3735 = vld [vmem:[%s3734] sm:$0xf]
  %v3736 = vld [vmem:[%s3734 + $0x4] sm:$0xf]
  %v3737 = vld [vmem:[%s3734 + $0x8] sm:$0xf]
  %v3738 = vld [vmem:[%s3734 + $0xc] sm:$0xf]
  %v3739 = vld [vmem:[%s3734 + $0x10] sm:$0xf]
  %v3740 = vld [vmem:[%s3734 + $0x14] sm:$0xf]
  %v3741 = vld [vmem:[%s3734 + $0x18] sm:$0xf]
  %v3742 = vld [vmem:[%s3734 + $0x1c] sm:$0xf]
  %v3743 = vld [vmem:[%s3734 + $0x20] sm:$0xf]
  %v3744 = vld [vmem:[%s3734 + $0x24] sm:$0xf]
  %v3745 = vld [vmem:[%s3734 + $0x28] sm:$0xf]
  %v3746 = vld [vmem:[%s3734 + $0x2c] sm:$0xf]
  %v3747 = vld [vmem:[%s3734 + $0x30] sm:$0xf]
  %v3748 = vld [vmem:[%s3734 + $0x34] sm:$0xf]
  %v3749 = vld [vmem:[%s3734 + $0x38] sm:$0xf]
  %v3750 = vld [vmem:[%s3734 + $0x3c] sm:$0xf]
  %v3767 = vunpack.c.l.b16 %v3735
  %v3768 = vunpack.c.l.b16 %v3736
  %v3769 = vunpack.c.l.b16 %v3737
  %v3770 = vunpack.c.l.b16 %v3738
  %v3771 = vunpack.c.l.b16 %v3739
  %v3772 = vunpack.c.l.b16 %v3740
  %v3773 = vunpack.c.l.b16 %v3741
  %v3774 = vunpack.c.l.b16 %v3742
  %v3775 = vunpack.c.l.b16 %v3743
  %v3776 = vunpack.c.l.b16 %v3744
  %v3777 = vunpack.c.l.b16 %v3745
  %v3778 = vunpack.c.l.b16 %v3746
  %v3779 = vunpack.c.l.b16 %v3747
  %v3780 = vunpack.c.l.b16 %v3748
  %v3781 = vunpack.c.l.b16 %v3749
  %v3782 = vunpack.c.l.b16 %v3750
  %v3783 = vpack.c.b16 %v3768, %v3767
  %v3784 = vpack.c.b16 %v3770, %v3769
  %v3785 = vpack.c.b16 %v3772, %v3771
  %v3786 = vpack.c.b16 %v3774, %v3773
  %v3787 = vpack.c.b16 %v3776, %v3775
  %v3788 = vpack.c.b16 %v3778, %v3777
  %v3789 = vpack.c.b16 %v3780, %v3779
  %v3790 = vpack.c.b16 %v3782, %v3781
  %3799 = vmatprep.subr.bf16.mxu0 0
  %3800 = vmatpush1.bf16.msra.mxu0 %v3783
  %3801 = vmatprep.subr.bf16.mxu0 0
  %3802 = vmatpush1.bf16.msra.mxu0 %v3784
  %3803 = vmatprep.subr.bf16.mxu0 0
  %3804 = vmatpush1.bf16.msra.mxu0 %v3785
  %3805 = vmatprep.subr.bf16.mxu0 0
  %3806 = vmatpush1.bf16.msra.mxu0 %v3786
  %3807 = vmatprep.subr.bf16.mxu0 0
  %3808 = vmatpush1.bf16.msra.mxu0 %v3787
  %3809 = vmatprep.subr.bf16.mxu0 0
  %3810 = vmatpush1.bf16.msra.mxu0 %v3788
  %3811 = vmatprep.subr.bf16.mxu0 0
  %3812 = vmatpush1.bf16.msra.mxu0 %v3789
  %3813 = vmatprep.subr.bf16.mxu0 0
  %3814 = vmatpush1.bf16.msra.mxu0 %v3790
  %3815 = vmatprep.subr.bf16.mxu0 0
  %3816 = vmatpush1.bf16.msra.mxu0 0
  %3817 = vmatprep.subr.bf16.mxu0 0
  %3818 = vmatpush1.bf16.msra.mxu0 0
  %3819 = vmatprep.subr.bf16.mxu0 0
  %3820 = vmatpush1.bf16.msra.mxu0 0
  %3821 = vmatprep.subr.bf16.mxu0 0
  %3822 = vmatpush1.bf16.msra.mxu0 0
  %3823 = vmatprep.subr.bf16.mxu0 0
  %3824 = vmatpush1.bf16.msra.mxu0 0
  %3825 = vmatprep.subr.bf16.mxu0 0
  %3826 = vmatpush1.bf16.msra.mxu0 0
  %3827 = vmatprep.subr.bf16.mxu0 0
  %3828 = vmatpush1.bf16.msra.mxu0 0
  %3829 = vmatprep.subr.bf16.mxu0 0
  %3830 = vmatpush1.bf16.msra.mxu0 0
  %3831 = vmatprep.mubr.bf16.mxu0 0
  %3832 = vmatmul.mubr.bf16.gmra.mrb[0].mxu0 %v3733
  %v3833 = vpop.f32.mrb[0].mxu0
  %v3834 = vadd.f32 0.0, %v3833
  %v3835 = vpop.f32.mrb[0].mxu0
  %v3836 = vpop.f32.mrb[0].mxu0
  %v3837 = vpop.f32.mrb[0].mxu0
  %3838 = vdwg.mxu0
  %v3839 = vadd.f32 %v3687, %v3834
  %s3840 = scalar_lea.vmem %s19, 10
  %v3841 = vld [vmem:[%s3840] sm:$0x1]
  %v3843 = vsel %vm300, %v3841, 0
  %3845 = vmatprep.subr.bf16.mxu0 0
  %3846 = vmatpush1.bf16.msra.mxu0 %v2319
  %3847 = vmatprep.subr.bf16.mxu0 0
  %3848 = vmatpush1.bf16.msra.mxu0 %v2326
  %3849 = vmatprep.subr.bf16.mxu0 0
  %3850 = vmatpush1.bf16.msra.mxu0 0
  %3851 = vmatprep.subr.bf16.mxu0 0
  %3852 = vmatpush1.bf16.msra.mxu0 0
  %3853 = vmatprep.subr.bf16.mxu0 0
  %3854 = vmatpush1.bf16.msra.mxu0 0
  %3855 = vmatprep.subr.bf16.mxu0 0
  %3856 = vmatpush1.bf16.msra.mxu0 0
  %3857 = vmatprep.subr.bf16.mxu0 0
  %3858 = vmatpush1.bf16.msra.mxu0 0
  %3859 = vmatprep.subr.bf16.mxu0 0
  %3860 = vmatpush1.bf16.msra.mxu0 0
  %3861 = vmatprep.subr.bf16.mxu0 0
  %3862 = vmatpush1.bf16.msra.mxu0 0
  %3863 = vmatprep.subr.bf16.mxu0 0
  %3864 = vmatpush1.bf16.msra.mxu0 0
  %3865 = vmatprep.subr.bf16.mxu0 0
  %3866 = vmatpush1.bf16.msra.mxu0 0
  %3867 = vmatprep.subr.bf16.mxu0 0
  %3868 = vmatpush1.bf16.msra.mxu0 0
  %3869 = vmatprep.subr.bf16.mxu0 0
  %3870 = vmatpush1.bf16.msra.mxu0 0
  %3871 = vmatprep.subr.bf16.mxu0 0
  %3872 = vmatpush1.bf16.msra.mxu0 0
  %3873 = vmatprep.subr.bf16.mxu0 0
  %3874 = vmatpush1.bf16.msra.mxu0 0
  %3875 = vmatprep.subr.bf16.mxu0 0
  %3876 = vmatpush1.bf16.msra.mxu0 0
  %3877 = vmatprep.mubr.bf16.mxu0 0
  %3878 = vmatmul.mubr.bf16.gmra.mrb[0].mxu0 %v3843
  %v3879 = vpop.f32.mrb[0].mxu0
  %v3880 = vadd.f32 0.0, %v3879
  %v3881 = vpop.f32.mrb[0].mxu0
  %v3882 = vpop.f32.mrb[0].mxu0
  %v3883 = vpop.f32.mrb[0].mxu0
  %3884 = vdwg.mxu0
  %v3885 = vpack.c.bf16 %v3880, %v3880
  %s3886 = scalar_lea.vmem %s20, 640
  %v3887 = vld [vmem:[%s3886] sm:$0xf]
  %v3888 = vld [vmem:[%s3886 + $0x4] sm:$0xf]
  %v3889 = vld [vmem:[%s3886 + $0x8] sm:$0xf]
  %v3890 = vld [vmem:[%s3886 + $0xc] sm:$0xf]
  %v3891 = vld [vmem:[%s3886 + $0x10] sm:$0xf]
  %v3892 = vld [vmem:[%s3886 + $0x14] sm:$0xf]
  %v3893 = vld [vmem:[%s3886 + $0x18] sm:$0xf]
  %v3894 = vld [vmem:[%s3886 + $0x1c] sm:$0xf]
  %v3895 = vld [vmem:[%s3886 + $0x20] sm:$0xf]
  %v3896 = vld [vmem:[%s3886 + $0x24] sm:$0xf]
  %v3897 = vld [vmem:[%s3886 + $0x28] sm:$0xf]
  %v3898 = vld [vmem:[%s3886 + $0x2c] sm:$0xf]
  %v3899 = vld [vmem:[%s3886 + $0x30] sm:$0xf]
  %v3900 = vld [vmem:[%s3886 + $0x34] sm:$0xf]
  %v3901 = vld [vmem:[%s3886 + $0x38] sm:$0xf]
  %v3902 = vld [vmem:[%s3886 + $0x3c] sm:$0xf]
  %v3919 = vunpack.c.l.b16 %v3887
  %v3920 = vunpack.c.l.b16 %v3888
  %v3921 = vunpack.c.l.b16 %v3889
  %v3922 = vunpack.c.l.b16 %v3890
  %v3923 = vunpack.c.l.b16 %v3891
  %v3924 = vunpack.c.l.b16 %v3892
  %v3925 = vunpack.c.l.b16 %v3893
  %v3926 = vunpack.c.l.b16 %v3894
  %v3927 = vunpack.c.l.b16 %v3895
  %v3928 = vunpack.c.l.b16 %v3896
  %v3929 = vunpack.c.l.b16 %v3897
  %v3930 = vunpack.c.l.b16 %v3898
  %v3931 = vunpack.c.l.b16 %v3899
  %v3932 = vunpack.c.l.b16 %v3900
  %v3933 = vunpack.c.l.b16 %v3901
  %v3934 = vunpack.c.l.b16 %v3902
  %v3935 = vpack.c.b16 %v3920, %v3919
  %v3936 = vpack.c.b16 %v3922, %v3921
  %v3937 = vpack.c.b16 %v3924, %v3923
  %v3938 = vpack.c.b16 %v3926, %v3925
  %v3939 = vpack.c.b16 %v3928, %v3927
  %v3940 = vpack.c.b16 %v3930, %v3929
  %v3941 = vpack.c.b16 %v3932, %v3931
  %v3942 = vpack.c.b16 %v3934, %v3933
  %3951 = vmatprep.subr.bf16.mxu0 0
  %3952 = vmatpush1.bf16.msra.mxu0 %v3935
  %3953 = vmatprep.subr.bf16.mxu0 0
  %3954 = vmatpush1.bf16.msra.mxu0 %v3936
  %3955 = vmatprep.subr.bf16.mxu0 0
  %3956 = vmatpush1.bf16.msra.mxu0 %v3937
  %3957 = vmatprep.subr.bf16.mxu0 0
  %3958 = vmatpush1.bf16.msra.mxu0 %v3938
  %3959 = vmatprep.subr.bf16.mxu0 0
  %3960 = vmatpush1.bf16.msra.mxu0 %v3939
  %3961 = vmatprep.subr.bf16.mxu0 0
  %3962 = vmatpush1.bf16.msra.mxu0 %v3940
  %3963 = vmatprep.subr.bf16.mxu0 0
  %3964 = vmatpush1.bf16.msra.mxu0 %v3941
  %3965 = vmatprep.subr.bf16.mxu0 0
  %3966 = vmatpush1.bf16.msra.mxu0 %v3942
  %3967 = vmatprep.subr.bf16.mxu0 0
  %3968 = vmatpush1.bf16.msra.mxu0 0
  %3969 = vmatprep.subr.bf16.mxu0 0
  %3970 = vmatpush1.bf16.msra.mxu0 0
  %3971 = vmatprep.subr.bf16.mxu0 0
  %3972 = vmatpush1.bf16.msra.mxu0 0
  %3973 = vmatprep.subr.bf16.mxu0 0
  %3974 = vmatpush1.bf16.msra.mxu0 0
  %3975 = vmatprep.subr.bf16.mxu0 0
  %3976 = vmatpush1.bf16.msra.mxu0 0
  %3977 = vmatprep.subr.bf16.mxu0 0
  %3978 = vmatpush1.bf16.msra.mxu0 0
  %3979 = vmatprep.subr.bf16.mxu0 0
  %3980 = vmatpush1.bf16.msra.mxu0 0
  %3981 = vmatprep.subr.bf16.mxu0 0
  %3982 = vmatpush1.bf16.msra.mxu0 0
  %3983 = vmatprep.mubr.bf16.mxu0 0
  %3984 = vmatmul.mubr.bf16.gmra.mrb[0].mxu0 %v3885
  %v3985 = vpop.f32.mrb[0].mxu0
  %v3986 = vadd.f32 0.0, %v3985
  %v3987 = vpop.f32.mrb[0].mxu0
  %v3988 = vpop.f32.mrb[0].mxu0
  %v3989 = vpop.f32.mrb[0].mxu0
  %3990 = vdwg.mxu0
  %v3991 = vadd.f32 %v3839, %v3986
  %s3992 = scalar_lea.vmem %s19, 11
  %v3993 = vld [vmem:[%s3992] sm:$0x1]
  %v3995 = vsel %vm300, %v3993, 0
  %3997 = vmatprep.subr.bf16.mxu0 0
  %3998 = vmatpush1.bf16.msra.mxu0 %v2319
  %3999 = vmatprep.subr.bf16.mxu0 0
  %4000 = vmatpush1.bf16.msra.mxu0 %v2326
  %4001 = vmatprep.subr.bf16.mxu0 0
  %4002 = vmatpush1.bf16.msra.mxu0 0
  %4003 = vmatprep.subr.bf16.mxu0 0
  %4004 = vmatpush1.bf16.msra.mxu0 0
  %4005 = vmatprep.subr.bf16.mxu0 0
  %4006 = vmatpush1.bf16.msra.mxu0 0
  %4007 = vmatprep.subr.bf16.mxu0 0
  %4008 = vmatpush1.bf16.msra.mxu0 0
  %4009 = vmatprep.subr.bf16.mxu0 0
  %4010 = vmatpush1.bf16.msra.mxu0 0
  %4011 = vmatprep.subr.bf16.mxu0 0
  %4012 = vmatpush1.bf16.msra.mxu0 0
  %4013 = vmatprep.subr.bf16.mxu0 0
  %4014 = vmatpush1.bf16.msra.mxu0 0
  %4015 = vmatprep.subr.bf16.mxu0 0
  %4016 = vmatpush1.bf16.msra.mxu0 0
  %4017 = vmatprep.subr.bf16.mxu0 0
  %4018 = vmatpush1.bf16.msra.mxu0 0
  %4019 = vmatprep.subr.bf16.mxu0 0
  %4020 = vmatpush1.bf16.msra.mxu0 0
  %4021 = vmatprep.subr.bf16.mxu0 0
  %4022 = vmatpush1.bf16.msra.mxu0 0
  %4023 = vmatprep.subr.bf16.mxu0 0
  %4024 = vmatpush1.bf16.msra.mxu0 0
  %4025 = vmatprep.subr.bf16.mxu0 0
  %4026 = vmatpush1.bf16.msra.mxu0 0
  %4027 = vmatprep.subr.bf16.mxu0 0
  %4028 = vmatpush1.bf16.msra.mxu0 0
  %4029 = vmatprep.mubr.bf16.mxu0 0
  %4030 = vmatmul.mubr.bf16.gmra.mrb[0].mxu0 %v3995
  %v4031 = vpop.f32.mrb[0].mxu0
  %v4032 = vadd.f32 0.0, %v4031
  %v4033 = vpop.f32.mrb[0].mxu0
  %v4034 = vpop.f32.mrb[0].mxu0
  %v4035 = vpop.f32.mrb[0].mxu0
  %4036 = vdwg.mxu0
  %v4037 = vpack.c.bf16 %v4032, %v4032
  %s4038 = scalar_lea.vmem %s20, 704
  %v4039 = vld [vmem:[%s4038] sm:$0xf]
  %v4040 = vld [vmem:[%s4038 + $0x4] sm:$0xf]
  %v4041 = vld [vmem:[%s4038 + $0x8] sm:$0xf]
  %v4042 = vld [vmem:[%s4038 + $0xc] sm:$0xf]
  %v4043 = vld [vmem:[%s4038 + $0x10] sm:$0xf]
  %v4044 = vld [vmem:[%s4038 + $0x14] sm:$0xf]
  %v4045 = vld [vmem:[%s4038 + $0x18] sm:$0xf]
  %v4046 = vld [vmem:[%s4038 + $0x1c] sm:$0xf]
  %v4047 = vld [vmem:[%s4038 + $0x20] sm:$0xf]
  %v4048 = vld [vmem:[%s4038 + $0x24] sm:$0xf]
  %v4049 = vld [vmem:[%s4038 + $0x28] sm:$0xf]
  %v4050 = vld [vmem:[%s4038 + $0x2c] sm:$0xf]
  %v4051 = vld [vmem:[%s4038 + $0x30] sm:$0xf]
  %v4052 = vld [vmem:[%s4038 + $0x34] sm:$0xf]
  %v4053 = vld [vmem:[%s4038 + $0x38] sm:$0xf]
  %v4054 = vld [vmem:[%s4038 + $0x3c] sm:$0xf]
  %v4071 = vunpack.c.l.b16 %v4039
  %v4072 = vunpack.c.l.b16 %v4040
  %v4073 = vunpack.c.l.b16 %v4041
  %v4074 = vunpack.c.l.b16 %v4042
  %v4075 = vunpack.c.l.b16 %v4043
  %v4076 = vunpack.c.l.b16 %v4044
  %v4077 = vunpack.c.l.b16 %v4045
  %v4078 = vunpack.c.l.b16 %v4046
  %v4079 = vunpack.c.l.b16 %v4047
  %v4080 = vunpack.c.l.b16 %v4048
  %v4081 = vunpack.c.l.b16 %v4049
  %v4082 = vunpack.c.l.b16 %v4050
  %v4083 = vunpack.c.l.b16 %v4051
  %v4084 = vunpack.c.l.b16 %v4052
  %v4085 = vunpack.c.l.b16 %v4053
  %v4086 = vunpack.c.l.b16 %v4054
  %v4087 = vpack.c.b16 %v4072, %v4071
  %v4088 = vpack.c.b16 %v4074, %v4073
  %v4089 = vpack.c.b16 %v4076, %v4075
  %v4090 = vpack.c.b16 %v4078, %v4077
  %v4091 = vpack.c.b16 %v4080, %v4079
  %v4092 = vpack.c.b16 %v4082, %v4081
  %v4093 = vpack.c.b16 %v4084, %v4083
  %v4094 = vpack.c.b16 %v4086, %v4085
  %4103 = vmatprep.subr.bf16.mxu0 0
  %4104 = vmatpush1.bf16.msra.mxu0 %v4087
  %4105 = vmatprep.subr.bf16.mxu0 0
  %4106 = vmatpush1.bf16.msra.mxu0 %v4088
  %4107 = vmatprep.subr.bf16.mxu0 0
  %4108 = vmatpush1.bf16.msra.mxu0 %v4089
  %4109 = vmatprep.subr.bf16.mxu0 0
  %4110 = vmatpush1.bf16.msra.mxu0 %v4090
  %4111 = vmatprep.subr.bf16.mxu0 0
  %4112 = vmatpush1.bf16.msra.mxu0 %v4091
  %4113 = vmatprep.subr.bf16.mxu0 0
  %4114 = vmatpush1.bf16.msra.mxu0 %v4092
  %4115 = vmatprep.subr.bf16.mxu0 0
  %4116 = vmatpush1.bf16.msra.mxu0 %v4093
  %4117 = vmatprep.subr.bf16.mxu0 0
  %4118 = vmatpush1.bf16.msra.mxu0 %v4094
  %4119 = vmatprep.subr.bf16.mxu0 0
  %4120 = vmatpush1.bf16.msra.mxu0 0
  %4121 = vmatprep.subr.bf16.mxu0 0
  %4122 = vmatpush1.bf16.msra.mxu0 0
  %4123 = vmatprep.subr.bf16.mxu0 0
  %4124 = vmatpush1.bf16.msra.mxu0 0
  %4125 = vmatprep.subr.bf16.mxu0 0
  %4126 = vmatpush1.bf16.msra.mxu0 0
  %4127 = vmatprep.subr.bf16.mxu0 0
  %4128 = vmatpush1.bf16.msra.mxu0 0
  %4129 = vmatprep.subr.bf16.mxu0 0
  %4130 = vmatpush1.bf16.msra.mxu0 0
  %4131 = vmatprep.subr.bf16.mxu0 0
  %4132 = vmatpush1.bf16.msra.mxu0 0
  %4133 = vmatprep.subr.bf16.mxu0 0
  %4134 = vmatpush1.bf16.msra.mxu0 0
  %4135 = vmatprep.mubr.bf16.mxu0 0
  %4136 = vmatmul.mubr.bf16.gmra.mrb[0].mxu0 %v4037
  %v4137 = vpop.f32.mrb[0].mxu0
  %v4138 = vadd.f32 0.0, %v4137
  %v4139 = vpop.f32.mrb[0].mxu0
  %v4140 = vpop.f32.mrb[0].mxu0
  %v4141 = vpop.f32.mrb[0].mxu0
  %4142 = vdwg.mxu0
  %v4143 = vadd.f32 %v3991, %v4138
  %s4144 = scalar_lea.vmem %s19, 12
  %v4145 = vld [vmem:[%s4144] sm:$0x1]
  %v4147 = vsel %vm300, %v4145, 0
  %4149 = vmatprep.subr.bf16.mxu0 0
  %4150 = vmatpush1.bf16.msra.mxu0 %v2319
  %4151 = vmatprep.subr.bf16.mxu0 0
  %4152 = vmatpush1.bf16.msra.mxu0 %v2326
  %4153 = vmatprep.subr.bf16.mxu0 0
  %4154 = vmatpush1.bf16.msra.mxu0 0
  %4155 = vmatprep.subr.bf16.mxu0 0
  %4156 = vmatpush1.bf16.msra.mxu0 0
  %4157 = vmatprep.subr.bf16.mxu0 0
  %4158 = vmatpush1.bf16.msra.mxu0 0
  %4159 = vmatprep.subr.bf16.mxu0 0
  %4160 = vmatpush1.bf16.msra.mxu0 0
  %4161 = vmatprep.subr.bf16.mxu0 0
  %4162 = vmatpush1.bf16.msra.mxu0 0
  %4163 = vmatprep.subr.bf16.mxu0 0
  %4164 = vmatpush1.bf16.msra.mxu0 0
  %4165 = vmatprep.subr.bf16.mxu0 0
  %4166 = vmatpush1.bf16.msra.mxu0 0
  %4167 = vmatprep.subr.bf16.mxu0 0
  %4168 = vmatpush1.bf16.msra.mxu0 0
  %4169 = vmatprep.subr.bf16.mxu0 0
  %4170 = vmatpush1.bf16.msra.mxu0 0
  %4171 = vmatprep.subr.bf16.mxu0 0
  %4172 = vmatpush1.bf16.msra.mxu0 0
  %4173 = vmatprep.subr.bf16.mxu0 0
  %4174 = vmatpush1.bf16.msra.mxu0 0
  %4175 = vmatprep.subr.bf16.mxu0 0
  %4176 = vmatpush1.bf16.msra.mxu0 0
  %4177 = vmatprep.subr.bf16.mxu0 0
  %4178 = vmatpush1.bf16.msra.mxu0 0
  %4179 = vmatprep.subr.bf16.mxu0 0
  %4180 = vmatpush1.bf16.msra.mxu0 0
  %4181 = vmatprep.mubr.bf16.mxu0 0
  %4182 = vmatmul.mubr.bf16.gmra.mrb[0].mxu0 %v4147
  %v4183 = vpop.f32.mrb[0].mxu0
  %v4184 = vadd.f32 0.0, %v4183
  %v4185 = vpop.f32.mrb[0].mxu0
  %v4186 = vpop.f32.mrb[0].mxu0
  %v4187 = vpop.f32.mrb[0].mxu0
  %4188 = vdwg.mxu0
  %v4189 = vpack.c.bf16 %v4184, %v4184
  %s4190 = scalar_lea.vmem %s20, 768
  %v4191 = vld [vmem:[%s4190] sm:$0xf]
  %v4192 = vld [vmem:[%s4190 + $0x4] sm:$0xf]
  %v4193 = vld [vmem:[%s4190 + $0x8] sm:$0xf]
  %v4194 = vld [vmem:[%s4190 + $0xc] sm:$0xf]
  %v4195 = vld [vmem:[%s4190 + $0x10] sm:$0xf]
  %v4196 = vld [vmem:[%s4190 + $0x14] sm:$0xf]
  %v4197 = vld [vmem:[%s4190 + $0x18] sm:$0xf]
  %v4198 = vld [vmem:[%s4190 + $0x1c] sm:$0xf]
  %v4199 = vld [vmem:[%s4190 + $0x20] sm:$0xf]
  %v4200 = vld [vmem:[%s4190 + $0x24] sm:$0xf]
  %v4201 = vld [vmem:[%s4190 + $0x28] sm:$0xf]
  %v4202 = vld [vmem:[%s4190 + $0x2c] sm:$0xf]
  %v4203 = vld [vmem:[%s4190 + $0x30] sm:$0xf]
  %v4204 = vld [vmem:[%s4190 + $0x34] sm:$0xf]
  %v4205 = vld [vmem:[%s4190 + $0x38] sm:$0xf]
  %v4206 = vld [vmem:[%s4190 + $0x3c] sm:$0xf]
  %v4223 = vunpack.c.l.b16 %v4191
  %v4224 = vunpack.c.l.b16 %v4192
  %v4225 = vunpack.c.l.b16 %v4193
  %v4226 = vunpack.c.l.b16 %v4194
  %v4227 = vunpack.c.l.b16 %v4195
  %v4228 = vunpack.c.l.b16 %v4196
  %v4229 = vunpack.c.l.b16 %v4197
  %v4230 = vunpack.c.l.b16 %v4198
  %v4231 = vunpack.c.l.b16 %v4199
  %v4232 = vunpack.c.l.b16 %v4200
  %v4233 = vunpack.c.l.b16 %v4201
  %v4234 = vunpack.c.l.b16 %v4202
  %v4235 = vunpack.c.l.b16 %v4203
  %v4236 = vunpack.c.l.b16 %v4204
  %v4237 = vunpack.c.l.b16 %v4205
  %v4238 = vunpack.c.l.b16 %v4206
  %v4239 = vpack.c.b16 %v4224, %v4223
  %v4240 = vpack.c.b16 %v4226, %v4225
  %v4241 = vpack.c.b16 %v4228, %v4227
  %v4242 = vpack.c.b16 %v4230, %v4229
  %v4243 = vpack.c.b16 %v4232, %v4231
  %v4244 = vpack.c.b16 %v4234, %v4233
  %v4245 = vpack.c.b16 %v4236, %v4235
  %v4246 = vpack.c.b16 %v4238, %v4237
  %4255 = vmatprep.subr.bf16.mxu0 0
  %4256 = vmatpush1.bf16.msra.mxu0 %v4239
  %4257 = vmatprep.subr.bf16.mxu0 0
  %4258 = vmatpush1.bf16.msra.mxu0 %v4240
  %4259 = vmatprep.subr.bf16.mxu0 0
  %4260 = vmatpush1.bf16.msra.mxu0 %v4241
  %4261 = vmatprep.subr.bf16.mxu0 0
  %4262 = vmatpush1.bf16.msra.mxu0 %v4242
  %4263 = vmatprep.subr.bf16.mxu0 0
  %4264 = vmatpush1.bf16.msra.mxu0 %v4243
  %4265 = vmatprep.subr.bf16.mxu0 0
  %4266 = vmatpush1.bf16.msra.mxu0 %v4244
  %4267 = vmatprep.subr.bf16.mxu0 0
  %4268 = vmatpush1.bf16.msra.mxu0 %v4245
  %4269 = vmatprep.subr.bf16.mxu0 0
  %4270 = vmatpush1.bf16.msra.mxu0 %v4246
  %4271 = vmatprep.subr.bf16.mxu0 0
  %4272 = vmatpush1.bf16.msra.mxu0 0
  %4273 = vmatprep.subr.bf16.mxu0 0
  %4274 = vmatpush1.bf16.msra.mxu0 0
  %4275 = vmatprep.subr.bf16.mxu0 0
  %4276 = vmatpush1.bf16.msra.mxu0 0
  %4277 = vmatprep.subr.bf16.mxu0 0
  %4278 = vmatpush1.bf16.msra.mxu0 0
  %4279 = vmatprep.subr.bf16.mxu0 0
  %4280 = vmatpush1.bf16.msra.mxu0 0
  %4281 = vmatprep.subr.bf16.mxu0 0
  %4282 = vmatpush1.bf16.msra.mxu0 0
  %4283 = vmatprep.subr.bf16.mxu0 0
  %4284 = vmatpush1.bf16.msra.mxu0 0
  %4285 = vmatprep.subr.bf16.mxu0 0
  %4286 = vmatpush1.bf16.msra.mxu0 0
  %4287 = vmatprep.mubr.bf16.mxu0 0
  %4288 = vmatmul.mubr.bf16.gmra.mrb[0].mxu0 %v4189
  %v4289 = vpop.f32.mrb[0].mxu0
  %v4290 = vadd.f32 0.0, %v4289
  %v4291 = vpop.f32.mrb[0].mxu0
  %v4292 = vpop.f32.mrb[0].mxu0
  %v4293 = vpop.f32.mrb[0].mxu0
  %4294 = vdwg.mxu0
  %v4295 = vadd.f32 %v4143, %v4290
  %s4296 = scalar_lea.vmem %s19, 13
  %v4297 = vld [vmem:[%s4296] sm:$0x1]
  %v4299 = vsel %vm300, %v4297, 0
  %4301 = vmatprep.subr.bf16.mxu0 0
  %4302 = vmatpush1.bf16.msra.mxu0 %v2319
  %4303 = vmatprep.subr.bf16.mxu0 0
  %4304 = vmatpush1.bf16.msra.mxu0 %v2326
  %4305 = vmatprep.subr.bf16.mxu0 0
  %4306 = vmatpush1.bf16.msra.mxu0 0
  %4307 = vmatprep.subr.bf16.mxu0 0
  %4308 = vmatpush1.bf16.msra.mxu0 0
  %4309 = vmatprep.subr.bf16.mxu0 0
  %4310 = vmatpush1.bf16.msra.mxu0 0
  %4311 = vmatprep.subr.bf16.mxu0 0
  %4312 = vmatpush1.bf16.msra.mxu0 0
  %4313 = vmatprep.subr.bf16.mxu0 0
  %4314 = vmatpush1.bf16.msra.mxu0 0
  %4315 = vmatprep.subr.bf16.mxu0 0
  %4316 = vmatpush1.bf16.msra.mxu0 0
  %4317 = vmatprep.subr.bf16.mxu0 0
  %4318 = vmatpush1.bf16.msra.mxu0 0
  %4319 = vmatprep.subr.bf16.mxu0 0
  %4320 = vmatpush1.bf16.msra.mxu0 0
  %4321 = vmatprep.subr.bf16.mxu0 0
  %4322 = vmatpush1.bf16.msra.mxu0 0
  %4323 = vmatprep.subr.bf16.mxu0 0
  %4324 = vmatpush1.bf16.msra.mxu0 0
  %4325 = vmatprep.subr.bf16.mxu0 0
  %4326 = vmatpush1.bf16.msra.mxu0 0
  %4327 = vmatprep.subr.bf16.mxu0 0
  %4328 = vmatpush1.bf16.msra.mxu0 0
  %4329 = vmatprep.subr.bf16.mxu0 0
  %4330 = vmatpush1.bf16.msra.mxu0 0
  %4331 = vmatprep.subr.bf16.mxu0 0
  %4332 = vmatpush1.bf16.msra.mxu0 0
  %4333 = vmatprep.mubr.bf16.mxu0 0
  %4334 = vmatmul.mubr.bf16.gmra.mrb[0].mxu0 %v4299
  %v4335 = vpop.f32.mrb[0].mxu0
  %v4336 = vadd.f32 0.0, %v4335
  %v4337 = vpop.f32.mrb[0].mxu0
  %v4338 = vpop.f32.mrb[0].mxu0
  %v4339 = vpop.f32.mrb[0].mxu0
  %4340 = vdwg.mxu0
  %v4341 = vpack.c.bf16 %v4336, %v4336
  %s4342 = scalar_lea.vmem %s20, 832
  %v4343 = vld [vmem:[%s4342] sm:$0xf]
  %v4344 = vld [vmem:[%s4342 + $0x4] sm:$0xf]
  %v4345 = vld [vmem:[%s4342 + $0x8] sm:$0xf]
  %v4346 = vld [vmem:[%s4342 + $0xc] sm:$0xf]
  %v4347 = vld [vmem:[%s4342 + $0x10] sm:$0xf]
  %v4348 = vld [vmem:[%s4342 + $0x14] sm:$0xf]
  %v4349 = vld [vmem:[%s4342 + $0x18] sm:$0xf]
  %v4350 = vld [vmem:[%s4342 + $0x1c] sm:$0xf]
  %v4351 = vld [vmem:[%s4342 + $0x20] sm:$0xf]
  %v4352 = vld [vmem:[%s4342 + $0x24] sm:$0xf]
  %v4353 = vld [vmem:[%s4342 + $0x28] sm:$0xf]
  %v4354 = vld [vmem:[%s4342 + $0x2c] sm:$0xf]
  %v4355 = vld [vmem:[%s4342 + $0x30] sm:$0xf]
  %v4356 = vld [vmem:[%s4342 + $0x34] sm:$0xf]
  %v4357 = vld [vmem:[%s4342 + $0x38] sm:$0xf]
  %v4358 = vld [vmem:[%s4342 + $0x3c] sm:$0xf]
  %v4375 = vunpack.c.l.b16 %v4343
  %v4376 = vunpack.c.l.b16 %v4344
  %v4377 = vunpack.c.l.b16 %v4345
  %v4378 = vunpack.c.l.b16 %v4346
  %v4379 = vunpack.c.l.b16 %v4347
  %v4380 = vunpack.c.l.b16 %v4348
  %v4381 = vunpack.c.l.b16 %v4349
  %v4382 = vunpack.c.l.b16 %v4350
  %v4383 = vunpack.c.l.b16 %v4351
  %v4384 = vunpack.c.l.b16 %v4352
  %v4385 = vunpack.c.l.b16 %v4353
  %v4386 = vunpack.c.l.b16 %v4354
  %v4387 = vunpack.c.l.b16 %v4355
  %v4388 = vunpack.c.l.b16 %v4356
  %v4389 = vunpack.c.l.b16 %v4357
  %v4390 = vunpack.c.l.b16 %v4358
  %v4391 = vpack.c.b16 %v4376, %v4375
  %v4392 = vpack.c.b16 %v4378, %v4377
  %v4393 = vpack.c.b16 %v4380, %v4379
  %v4394 = vpack.c.b16 %v4382, %v4381
  %v4395 = vpack.c.b16 %v4384, %v4383
  %v4396 = vpack.c.b16 %v4386, %v4385
  %v4397 = vpack.c.b16 %v4388, %v4387
  %v4398 = vpack.c.b16 %v4390, %v4389
  %4407 = vmatprep.subr.bf16.mxu0 0
  %4408 = vmatpush1.bf16.msra.mxu0 %v4391
  %4409 = vmatprep.subr.bf16.mxu0 0
  %4410 = vmatpush1.bf16.msra.mxu0 %v4392
  %4411 = vmatprep.subr.bf16.mxu0 0
  %4412 = vmatpush1.bf16.msra.mxu0 %v4393
  %4413 = vmatprep.subr.bf16.mxu0 0
  %4414 = vmatpush1.bf16.msra.mxu0 %v4394
  %4415 = vmatprep.subr.bf16.mxu0 0
  %4416 = vmatpush1.bf16.msra.mxu0 %v4395
  %4417 = vmatprep.subr.bf16.mxu0 0
  %4418 = vmatpush1.bf16.msra.mxu0 %v4396
  %4419 = vmatprep.subr.bf16.mxu0 0
  %4420 = vmatpush1.bf16.msra.mxu0 %v4397
  %4421 = vmatprep.subr.bf16.mxu0 0
  %4422 = vmatpush1.bf16.msra.mxu0 %v4398
  %4423 = vmatprep.subr.bf16.mxu0 0
  %4424 = vmatpush1.bf16.msra.mxu0 0
  %4425 = vmatprep.subr.bf16.mxu0 0
  %4426 = vmatpush1.bf16.msra.mxu0 0
  %4427 = vmatprep.subr.bf16.mxu0 0
  %4428 = vmatpush1.bf16.msra.mxu0 0
  %4429 = vmatprep.subr.bf16.mxu0 0
  %4430 = vmatpush1.bf16.msra.mxu0 0
  %4431 = vmatprep.subr.bf16.mxu0 0
  %4432 = vmatpush1.bf16.msra.mxu0 0
  %4433 = vmatprep.subr.bf16.mxu0 0
  %4434 = vmatpush1.bf16.msra.mxu0 0
  %4435 = vmatprep.subr.bf16.mxu0 0
  %4436 = vmatpush1.bf16.msra.mxu0 0
  %4437 = vmatprep.subr.bf16.mxu0 0
  %4438 = vmatpush1.bf16.msra.mxu0 0
  %4439 = vmatprep.mubr.bf16.mxu0 0
  %4440 = vmatmul.mubr.bf16.gmra.mrb[0].mxu0 %v4341
  %v4441 = vpop.f32.mrb[0].mxu0
  %v4442 = vadd.f32 0.0, %v4441
  %v4443 = vpop.f32.mrb[0].mxu0
  %v4444 = vpop.f32.mrb[0].mxu0
  %v4445 = vpop.f32.mrb[0].mxu0
  %4446 = vdwg.mxu0
  %v4447 = vadd.f32 %v4295, %v4442
  %v4448 = vld [vmem:[%s21] sm:$0x1]
  %v4450 = vlaneseq
  %v4451 = vshrl.u32 %v4450, 7
  %v4452 = vsub.s32 0, %v4451
  %v4453 = vrot.slane %v4448, %v4452
  %v4455 = vadd.f32 %v4447, %v4453
  %v4456 = vmax.f32 %v4455, 0.0
  %v4457 = vpack.c.bf16 %v4456, %v4456
  %v4458 = vld [vmem:[%s22] sm:$0xf]
  %v4459 = vld [vmem:[%s22 + $0x4] sm:$0xf]
  %v4460 = vld [vmem:[%s22 + $0x8] sm:$0xf]
  %v4461 = vld [vmem:[%s22 + $0xc] sm:$0xf]
  %v4462 = vld [vmem:[%s23] sm:$0x1]
  %v4464 = vlaneseq
  %v4465 = vshrl.u32 %v4464, 7
  %v4466 = vsub.s32 0, %v4465
  %v4467 = vrot.slane %v4462, %v4466
  %v4473 = vunpack.c.l.b16 %v4458
  %v4474 = vunpack.c.l.b16 %v4459
  %v4475 = vunpack.c.l.b16 %v4460
  %v4476 = vunpack.c.l.b16 %v4461
  %v4477 = vpack.c.b16 %v4474, %v4473
  %v4478 = vpack.c.b16 %v4476, %v4475
  %vm4481 = vcmask 261120
  %v4483 = vsel %vm4481, %v4457, 0
  %4485 = vmatprep.subr.bf16.mxu0 0
  %4486 = vmatpush1.bf16.msra.mxu0 %v4477
  %4487 = vmatprep.subr.bf16.mxu0 0
  %4488 = vmatpush1.bf16.msra.mxu0 %v4478
  %4489 = vmatprep.subr.bf16.mxu0 0
  %4490 = vmatpush1.bf16.msra.mxu0 0
  %4491 = vmatprep.subr.bf16.mxu0 0
  %4492 = vmatpush1.bf16.msra.mxu0 0
  %4493 = vmatprep.subr.bf16.mxu0 0
  %4494 = vmatpush1.bf16.msra.mxu0 0
  %4495 = vmatprep.subr.bf16.mxu0 0
  %4496 = vmatpush1.bf16.msra.mxu0 0
  %4497 = vmatprep.subr.bf16.mxu0 0
  %4498 = vmatpush1.bf16.msra.mxu0 0
  %4499 = vmatprep.subr.bf16.mxu0 0
  %4500 = vmatpush1.bf16.msra.mxu0 0
  %4501 = vmatprep.subr.bf16.mxu0 0
  %4502 = vmatpush1.bf16.msra.mxu0 0
  %4503 = vmatprep.subr.bf16.mxu0 0
  %4504 = vmatpush1.bf16.msra.mxu0 0
  %4505 = vmatprep.subr.bf16.mxu0 0
  %4506 = vmatpush1.bf16.msra.mxu0 0
  %4507 = vmatprep.subr.bf16.mxu0 0
  %4508 = vmatpush1.bf16.msra.mxu0 0
  %4509 = vmatprep.subr.bf16.mxu0 0
  %4510 = vmatpush1.bf16.msra.mxu0 0
  %4511 = vmatprep.subr.bf16.mxu0 0
  %4512 = vmatpush1.bf16.msra.mxu0 0
  %4513 = vmatprep.subr.bf16.mxu0 0
  %4514 = vmatpush1.bf16.msra.mxu0 0
  %4515 = vmatprep.subr.bf16.mxu0 0
  %4516 = vmatpush1.bf16.msra.mxu0 0
  %4517 = vmatprep.mubr.bf16.mxu0 0
  %4518 = vmatmul.mubr.bf16.gmra.mrb[0].mxu0 %v4483
  %v4519 = vpop.f32.mrb[0].mxu0
  %v4520 = vadd.f32 %v4467, %v4519
  %v4521 = vpop.f32.mrb[0].mxu0
  %v4522 = vpop.f32.mrb[0].mxu0
  %v4523 = vpop.f32.mrb[0].mxu0
  %4524 = vdwg.mxu0
  %4525 = vst [vmem:[%s24] sm:$0x3] %v4520
  // Predicated region
  $region98: #{hpe_forward.1} parent=0 // pred_check
    _
  $region99: #{hpe_forward.1} parent=0 // pred_check_branch
    %4527 = sbr.rel (0) target = $region101
  $region100: #{hpe_forward.1} parent=0 // pred_region
    _
  $region101: #{hpe_forward.1} parent=0 // pred_fallthru
    _
  // Predicated region
  $region102: #{hpe_forward.1} parent=0 // pred_check
    _
  $region103: #{hpe_forward.1} parent=0 // pred_check_branch
    %4529 = sbr.rel (0) target = $region105
  $region104: #{hpe_forward.1} parent=0 // pred_region
    _
  $region105: #{hpe_forward.1} parent=0 // pred_fallthru
    _

</llo_original>
